<compile_context>
chip_gen: v7x
topology: tpu7x:2x2x1
jax: 0.10.0
libtpu: 0.0.40
codegen_flags: <defaults>
</compile_context>

<pallas_src>
import functools

import numpy as np

import jax
import jax.numpy as jnp
from jax.experimental import pallas as pl
from jax.experimental.pallas import tpu as pltpu

_VMEM = pl.BlockSpec(memory_space=pltpu.MemorySpace.VMEM)
_EPS = 1e-5


def _ceil_to(x, m):
    return ((x + m - 1) // m) * m


# -----------------------------------------------------------------------------
# Kernel 0: all 8 Affine MLPs (fuse1 + fuse2) in one launch.
# -----------------------------------------------------------------------------
def _affine_coeff_kernel(c_ref, w1a_ref, b1a_ref, w2a_ref, b2a_ref,
                         w1b_ref, b1b_ref, w2b_ref, b2b_ref, o1_ref, o2_ref):
    cvec = c_ref[...]

    def _group(w1_ref, b1_ref, w2_ref, b2_ref, width):
        hid = jnp.dot(cvec, w1_ref[...], preferred_element_type=jnp.float32)
        hid = jnp.maximum(hid + b1_ref[...], 0.0)
        # 4 independent (width, width) second layers — no block-diag zeros.
        outs = [jnp.dot(hid[:, i * width:(i + 1) * width], w2_ref[i],
                        preferred_element_type=jnp.float32) for i in range(4)]
        return jnp.concatenate(outs, axis=1) + b2_ref[...]

    o1_ref[...] = _group(w1a_ref, b1a_ref, w2a_ref, b2a_ref,
                         o1_ref.shape[1] // 4)
    o2_ref[...] = _group(w1b_ref, b1b_ref, w2b_ref, b2b_ref,
                         o2_ref.shape[1] // 4)


# -----------------------------------------------------------------------------
# Shared helper: flat padded grid -> single fused MXU conv operand.
# -----------------------------------------------------------------------------
def _tap_stack(x_ref, offs, r):
    """(1, C, LS) bf16 slab -> (k*k*C, R) bf16 operand (one matmul, K=k*k*C)."""
    xs = x_ref[0].astype(jnp.float32)          # slices/concat on 8-row-aligned f32
    parts = [xs[:, o:o + r] for o in offs]
    return jnp.concatenate(parts, axis=0).astype(jnp.bfloat16)


# -----------------------------------------------------------------------------
# Kernel A: conv1 + (folded bias) + DFBLK(fuse1), lane-aligned padded-grid store.
# -----------------------------------------------------------------------------
def _conv1_dfblk_kernel(x_ref, w_ref, prm_ref, msk_ref, o_ref, *,
                        offs, r, store_off):
    xcat = _tap_stack(x_ref, offs, r)                               # (kk*Cin, R)
    y = jnp.dot(w_ref[...], xcat,
                preferred_element_type=jnp.float32)                 # (mid, R)

    prm = prm_ref[0]                                                # (mid, 4)
    g0, b0 = prm[:, 0:1], prm[:, 1:2]        # conv1 bias already folded into b0
    g1, b1 = prm[:, 2:3], prm[:, 3:4]
    y = g0 * y + b0
    y = jnp.maximum(y, 0.2 * y)
    y = g1 * y + b1
    y = jnp.maximum(y, 0.2 * y)
    y = (y * msk_ref[0]).astype(o_ref.dtype)                        # zero pad lanes

    rows, ls = o_ref.shape[1], o_ref.shape[2]
    # 128-aligned, non-overlapping stores (zero margins + interior), single write.
    if store_off > 0:
        o_ref[0, :, :store_off] = jnp.zeros((rows, store_off), o_ref.dtype)
    o_ref[0, :, store_off:store_off + r] = y
    tail = ls - store_off - r
    if tail > 0:
        o_ref[0, :, store_off + r:] = jnp.zeros((rows, tail), o_ref.dtype)


# -----------------------------------------------------------------------------
# Kernel B1: conv2 + per-sample masked partial BatchNorm statistics.
# -----------------------------------------------------------------------------
def _conv2_stats_kernel(x_ref, w_ref, msk_ref, y_ref, st_ref, *, offs, r):
    xcat = _tap_stack(x_ref, offs, r)                               # (kk*mid, R)
    y = jnp.dot(w_ref[...], xcat,
                preferred_element_type=jnp.float32)                 # (out, R)
    y_ref[0] = y
    ym = y * msk_ref[0]
    s1 = jnp.sum(ym, axis=-1, keepdims=True)                        # (out, 1)
    s2 = jnp.sum(ym * y, axis=-1, keepdims=True)
    st_ref[0] = jnp.concatenate([s1, s2], axis=1)                   # (out, 2)


# -----------------------------------------------------------------------------
# Kernel B2: BN affine + LeakyReLU + ShuffleAttention + DFBLK(fuse2)
#            + 1x1 shortcut conv + residual add.
# -----------------------------------------------------------------------------
def _bn_sa_fuse_kernel(y_ref, h_ref, wsc_ref, cprm_ref, fprm_ref, msk_ref,
                       o_ref, *, inv_hw):
    y = y_ref[0]                                                    # (out, R) f32
    msk = msk_ref[0]                                                # (1, R)

    cp = cprm_ref[...]                                              # (out, 6)
    bn_s, bn_b = cp[:, 0:1], cp[:, 1:2]
    alpha, beta = cp[:, 2:3], cp[:, 3:4]
    delta, sc_b = cp[:, 4:5], cp[:, 5:6]
    fp = fprm_ref[0]                                                # (out, 4)
    g0, b0, g1, b1 = fp[:, 0:1], fp[:, 1:2], fp[:, 2:3], fp[:, 3:4]

    # BatchNorm affine (scale/shift precomputed per channel) + LeakyReLU(0.2).
    y = bn_s * y + bn_b
    y = jnp.maximum(y, 0.2 * y)

    # ShuffleAttention: per-(sample, channel) spatial stats over valid pixels;
    # channel & spatial gates unified: sigmoid(alpha*GN(y) + beta*mean + delta).
    ym = y * msk
    m = jnp.sum(ym, axis=-1, keepdims=True) * inv_hw                # (out, 1)
    ex2 = jnp.sum(ym * y, axis=-1, keepdims=True) * inv_hw
    var = jnp.maximum(ex2 - m * m, 0.0)
    norm = (y - m) * jax.lax.rsqrt(var + _EPS)
    gate = jax.nn.sigmoid(alpha * norm + (beta * m + delta))
    z = y * gate
    # channel_shuffle(groups=2) is folded into the permuted fuse2/shortcut params.

    # DFBLK(fuse2)
    z = g0 * z + b0
    z = jnp.maximum(z, 0.2 * z)
    z = g1 * z + b1
    z = jnp.maximum(z, 0.2 * z)

    # 1x1 shortcut conv + residual add (+ shortcut bias)
    sc = jnp.dot(wsc_ref[...], h_ref[0], preferred_element_type=jnp.float32)
    o_ref[0] = z + sc + sc_b


# -----------------------------------------------------------------------------
# M_Block forward
# -----------------------------------------------------------------------------
def m_block_forward(h, c, params, *, k, s, p, G=8):
    N, Cin, H, W = h.shape
    mid = params["conv1_w"].shape[0]
    out = params["conv2_w"].shape[0]
    assert s == 1 and 2 * p == k - 1, "only stride-1 'same' convolutions supported"
    # TODO(synk): general stride / non-'same' padding residual path not implemented.

    f32, bf16 = jnp.float32, jnp.bfloat16
    cin_p = _ceil_to(Cin, 8)                 # pad channels to the f32 sublane tile
    mid_p = _ceil_to(mid, 8)

    # ---- flat-padded-grid geometry (conv1 store is 128-lane aligned) ----
    Wp, Hp = W + 2 * p, H + 2 * p
    Lp = Hp * Wp
    shift = p * Wp + p                       # raw conv output -> padded interior
    store_off = _ceil_to(shift, 128)         # 128-aligned store offset
    origin = store_off - shift               # padded-grid origin inside the slab
    R = _ceil_to(H * Wp, 128)                # conv output block width (lanes)
    max_off = (k - 1) * Wp + (k - 1)
    LS = _ceil_to(max(origin + Lp, origin + max_off + R), 128)
    offs = tuple(origin + di * Wp + dj for di in range(k) for dj in range(k))

    # ---- layout glue: NCHW -> channel-major flat zero-padded slab (bf16) ----
    hpad = jnp.pad(h, ((0, 0), (0, cin_p - Cin), (p, p), (p, p)))
    hpad = hpad.reshape(N, cin_p, Lp)
    h_f = jnp.pad(hpad, ((0, 0), (0, 0), (origin, LS - origin - Lp))).astype(bf16)
    h_sc = h_f[:, :, store_off:store_off + R]          # interior window for the 1x1 sc

    # valid raw conv-output lanes (q = y*Wp + x with y < H, x < W)
    m_np = np.zeros((H, Wp), np.float32)
    m_np[:, :W] = 1.0
    vmask = np.zeros((1, 1, R), np.float32)
    vmask[0, 0, :H * Wp] = m_np.reshape(-1)
    vmask = jnp.asarray(vmask)

    # ---- kernel 0: all 8 Affine MLPs ----
    names = ("a0_gamma", "a0_beta", "a1_gamma", "a1_beta")

    def _mlp_group(branches):
        w1 = jnp.concatenate([b[0] for b in branches], axis=1)      # (cond, 4C)
        b1 = jnp.concatenate([b[1] for b in branches])[None, :]     # (1, 4C)
        w2 = jnp.stack([b[2] for b in branches], axis=0)            # (4, C, C)
        b2 = jnp.concatenate([b[3] for b in branches])[None, :]     # (1, 4C)
        return w1, b1, w2, b2

    w1a, b1a, w2a, b2a = _mlp_group([params["fuse1"][n_] for n_ in names])
    w1b, b1b, w2b, b2b = _mlp_group([params["fuse2"][n_] for n_ in names])
    coef1, coef2 = pl.pallas_call(
        _affine_coeff_kernel,
        out_shape=(jax.ShapeDtypeStruct((N, 4 * mid), f32),
                   jax.ShapeDtypeStruct((N, 4 * out), f32)),
        in_specs=[_VMEM] * 9, out_specs=(_VMEM, _VMEM),
    )(c.astype(f32), w1a, b1a, w2a, b2a, w1b, b1b, w2b, b2b)
    f1 = [coef1[:, i * mid:(i + 1) * mid] for i in range(4)]        # (N, mid)
    f2 = [coef2[:, i * out:(i + 1) * out] for i in range(4)]        # (N, out)

    # ---- conv weights as (Cout, k*k*Cin_pad) bf16 for the fused-tap matmul ----
    def _conv_w2d(wconv, cout_pad, cin_pad):
        cout, cin = wconv.shape[0], wconv.shape[1]
        wpad = jnp.pad(wconv, ((0, cout_pad - cout), (0, cin_pad - cin),
                               (0, 0), (0, 0)))
        return wpad.transpose(0, 2, 3, 1).reshape(cout_pad, k * k * cin_pad
                                                  ).astype(bf16)

    w1c = _conv_w2d(params["conv1_w"], mid_p, cin_p)                # (mid_p, kk*cin_p)
    w2c = _conv_w2d(params["conv2_w"], out, mid_p)                  # (out, kk*mid_p)

    conv_params = pltpu.CompilerParams(
        dimension_semantics=("parallel",), vmem_limit_bytes=32 * 1024 * 1024)

    # ---- kernel A: conv1 + bias + DFBLK(fuse1), re-padded for conv2 ----
    bias1 = params["conv1_b"][None, :]                              # (1, mid)
    prm_a = jnp.stack([f1[0], f1[0] * bias1 + f1[1], f1[2], f1[3]], axis=-1)
    prm_a = jnp.pad(prm_a, ((0, 0), (0, mid_p - mid), (0, 0)))      # (N, mid_p, 4)

    x1 = pl.pallas_call(
        functools.partial(_conv1_dfblk_kernel, offs=offs, r=R,
                          store_off=store_off),
        grid=(N,),
        in_specs=[pl.BlockSpec((1, cin_p, LS), lambda n: (n, 0, 0)),
                  pl.BlockSpec((mid_p, k * k * cin_p), lambda n: (0, 0)),
                  pl.BlockSpec((1, mid_p, 4), lambda n: (n, 0, 0)),
                  pl.BlockSpec((1, 1, R), lambda n: (0, 0, 0))],
        out_specs=pl.BlockSpec((1, mid_p, LS), lambda n: (n, 0, 0)),
        out_shape=jax.ShapeDtypeStruct((N, mid_p, LS), bf16),
        compiler_params=conv_params,
    )(h_f, w1c, prm_a, vmask)

    # ---- kernel B1: conv2 + per-sample partial BN statistics ----
    y_conv, bn_part = pl.pallas_call(
        functools.partial(_conv2_stats_kernel, offs=offs, r=R),
        grid=(N,),
        in_specs=[pl.BlockSpec((1, mid_p, LS), lambda n: (n, 0, 0)),
                  pl.BlockSpec((out, k * k * mid_p), lambda n: (0, 0)),
                  pl.BlockSpec((1, 1, R), lambda n: (0, 0, 0))],
        out_specs=(pl.BlockSpec((1, out, R), lambda n: (n, 0, 0)),
                   pl.BlockSpec((1, out, 2), lambda n: (n, 0, 0))),
        out_shape=(jax.ShapeDtypeStruct((N, out, R), f32),
                   jax.ShapeDtypeStruct((N, out, 2), f32)),
        compiler_params=conv_params,
    )(x1, w2c, vmask)

    # ---- BN (training-mode) finalize: per-channel scale/shift (tiny, wrapper) ----
    cnt = float(N * H * W)
    ssum = jnp.sum(bn_part, axis=0)                                 # (out, 2)
    mean = ssum[:, 0] / cnt
    var = jnp.maximum(ssum[:, 1] / cnt - mean * mean, 0.0)
    bn_scale = params["bn_w"] * jax.lax.rsqrt(var + _EPS)
    bn_shift = params["bn_b"] - mean * bn_scale

    # ---- channel_shuffle(groups=2) fold: physical row c holds logical g_idx[c];
    #      logical channel c lives at physical row f_idx[c]. ----
    half = out // 2
    g_idx = np.array([2 * (cc % half) + cc // half for cc in range(out)])
    f_idx = np.array([(cc % 2) * half + cc // 2 for cc in range(out)])

    # ---- ShuffleAttention per-channel gate params: sigmoid(a*GN + b*mean + d) ----
    cpg = out // G
    c2 = cpg // 2
    j = np.arange(out) % cpg
    is_chan = jnp.asarray((j < c2).astype(np.float32))
    jh = np.where(j < c2, j, j - c2)
    sa = params["sa"]
    cw, cb = sa["cw"][jh], sa["cb"][jh]
    sw, sb = sa["sw"][jh], sa["sb"][jh]
    gnw, gnb = sa["gnw"][jh], sa["gnb"][jh]
    alpha = jnp.where(is_chan > 0.5, 0.0, sw * gnw)
    beta = jnp.where(is_chan > 0.5, cw, 0.0)
    delta = jnp.where(is_chan > 0.5, cb, sw * gnb + sb)

    # ---- shortcut (1x1 conv) weights, permuted for the folded shuffle ----
    if Cin != out:
        wsc = params["c_sc_w"].reshape(out, Cin)
        bsc = params["c_sc_b"]
    else:
        # TODO(synk): identity shortcut still routed through an explicit eye matmul.
        wsc = jnp.eye(out, dtype=f32)
        bsc = jnp.zeros((out,), f32)
    wsc_p = jnp.pad(wsc[g_idx], ((0, 0), (0, cin_p - Cin))).astype(bf16)
    bsc_p = bsc[g_idx]

    cprm = jnp.stack([bn_scale, bn_shift, alpha, beta, delta, bsc_p],
                     axis=-1).astype(f32)                            # (out, 6)
    fprm = jnp.stack([f2[0][:, g_idx], f2[1][:, g_idx],
                      f2[2][:, g_idx], f2[3][:, g_idx]], axis=-1)    # (N, out, 4)

    # ---- kernel B2: BN + LeakyReLU + SA + fuse2 + shortcut + residual add ----
    res = pl.pallas_call(
        functools.partial(_bn_sa_fuse_kernel, inv_hw=1.0 / (H * W)),
        grid=(N,),
        in_specs=[pl.BlockSpec((1, out, R), lambda n: (n, 0, 0)),
                  pl.BlockSpec((1, cin_p, R), lambda n: (n, 0, 0)),
                  pl.BlockSpec((out, cin_p), lambda n: (0, 0)),
                  pl.BlockSpec((out, 6), lambda n: (0, 0)),
                  pl.BlockSpec((1, out, 4), lambda n: (n, 0, 0)),
                  pl.BlockSpec((1, 1, R), lambda n: (0, 0, 0))],
        out_specs=pl.BlockSpec((1, out, R), lambda n: (n, 0, 0)),
        out_shape=jax.ShapeDtypeStruct((N, out, R), f32),
        compiler_params=conv_params,
    )(y_conv, h_sc, wsc_p, cprm, fprm, vmask)

    # ---- layout glue: flat grid -> NCHW, undo the folded channel shuffle ----
    res = res[:, :, :H * Wp].reshape(N, out, H, Wp)[:, :, :, :W]
    return jnp.take(res, jnp.asarray(f_idx), axis=1)


# -----------------------------------------------------------------------------
# Deterministic synthetic parameters
# -----------------------------------------------------------------------------
def _init_params(key, in_ch, mid_ch, out_ch, cond_dim, k, G=8):
    keys = iter(jax.random.split(key, 64))
    nrm = lambda shape, s=0.1: (s * jax.random.normal(next(keys), shape)
                                ).astype(jnp.float32)

    def affine_branch(C):
        # linear weights stored as (in_features, out_features)
        return (nrm((cond_dim, C)), nrm((C,)), nrm((C, C)), nrm((C,)))

    def dfblk_params(C):
        return {"a0_gamma": affine_branch(C), "a0_beta": affine_branch(C),
                "a1_gamma": affine_branch(C), "a1_beta": affine_branch(C)}

    C2 = out_ch // (2 * G)
    return {
        "conv1_w": nrm((mid_ch, in_ch, k, k)),
        "conv1_b": nrm((mid_ch,)),
        "fuse1": dfblk_params(mid_ch),
        "conv2_w": nrm((out_ch, mid_ch, k, k)),
        "bn_w": 1.0 + nrm((out_ch,)),
        "bn_b": nrm((out_ch,)),
        "sa": {"cw": nrm((C2,)), "cb": 1.0 + nrm((C2,)),
               "sw": nrm((C2,)), "sb": 1.0 + nrm((C2,)),
               "gnw": 1.0 + nrm((C2,)), "gnb": nrm((C2,))},
        "fuse2": dfblk_params(out_ch),
        "c_sc_w": nrm((out_ch, in_ch, 1, 1)),
        "c_sc_b": nrm((out_ch,)),
    }


if __name__ == "__main__":
    # small, module-consistent shapes
    N, in_ch, mid_ch, out_ch = 2, 4, 8, 32       # out_ch divisible by 2*G = 16
    cond_dim, H, W = 16, 16, 16
    k, s, p = 3, 1, 1                            # spatial-preserving conv

    key = jax.random.PRNGKey(0)
    kh, kc, kp = jax.random.split(key, 3)
    h = jax.random.normal(kh, (N, in_ch, H, W), dtype=jnp.float32)
    c = jax.random.normal(kc, (N, cond_dim), dtype=jnp.float32)
    params = _init_params(kp, in_ch, mid_ch, out_ch, cond_dim, k)

    fwd = jax.jit(functools.partial(m_block_forward, k=k, s=s, p=p))
    out = jax.block_until_ready(fwd(h, c, params))

    assert out.shape == (N, out_ch, H, W), out.shape
    assert bool(jnp.all(jnp.isfinite(out)))
    print("KERNEL_OK")
</pallas_src>

<mosaic_0001>
module attributes {stable_mosaic.version = 11 : i64} {
  func.func @_affine_coeff_kernel(%arg0: memref<2x16xf32, #tpu.memory_space<vmem>>, %arg1: memref<16x32xf32, #tpu.memory_space<vmem>>, %arg2: memref<1x32xf32, #tpu.memory_space<vmem>>, %arg3: memref<4x8x8xf32, #tpu.memory_space<vmem>>, %arg4: memref<1x32xf32, #tpu.memory_space<vmem>>, %arg5: memref<16x128xf32, #tpu.memory_space<vmem>>, %arg6: memref<1x128xf32, #tpu.memory_space<vmem>>, %arg7: memref<4x32x32xf32, #tpu.memory_space<vmem>>, %arg8: memref<1x128xf32, #tpu.memory_space<vmem>>, %arg9: memref<2x32xf32, #tpu.memory_space<vmem>>, %arg10: memref<2x128xf32, #tpu.memory_space<vmem>>) attributes {dimension_semantics = [], scalar_prefetch = 0 : i64, scratch_operands = 0 : i64, tpu.core_type = #tpu.core_type<tc>} {
    %c0 = arith.constant 0 : index
    %c0_0 = arith.constant 0 : index
    %0 = vector.load %arg0[%c0, %c0_0] : memref<2x16xf32, #tpu.memory_space<vmem>>, vector<2x16xf32>
    %c0_1 = arith.constant 0 : index
    %c0_2 = arith.constant 0 : index
    %1 = vector.load %arg1[%c0_1, %c0_2] : memref<16x32xf32, #tpu.memory_space<vmem>>, vector<16x32xf32>
    %cst = arith.constant dense<0.000000e+00> : vector<2x32xf32>
    %2 = tpu.matmul %0, %1, %cst {dimension_numbers = #tpu.dot_dimension_numbers<[1], [0], [0], [1], [0, 0, 1, 1], [], []>} : vector<2x16xf32>, vector<16x32xf32>, vector<2x32xf32> -> vector<2x32xf32>
    %c0_3 = arith.constant 0 : index
    %c0_4 = arith.constant 0 : index
    %3 = vector.load %arg2[%c0_3, %c0_4] : memref<1x32xf32, #tpu.memory_space<vmem>>, vector<1x32xf32>
    %4 = vector.broadcast %3 : vector<1x32xf32> to vector<2x32xf32>
    %5 = arith.addf %2, %4 : vector<2x32xf32>
    %cst_5 = arith.constant 0.000000e+00 : f32
    %6 = vector.broadcast %cst_5 : f32 to vector<2x32xf32>
    %7 = arith.maximumf %5, %6 : vector<2x32xf32>
    %8 = vector.extract_strided_slice %7 {offsets = [0, 0], sizes = [2, 8], strides = [1, 1]} : vector<2x32xf32> to vector<2x8xf32>
    %c0_6 = arith.constant 0 : index
    %c0_7 = arith.constant 0 : index
    %c0_8 = arith.constant 0 : index
    %9 = vector.load %arg3[%c0_6, %c0_7, %c0_8] : memref<4x8x8xf32, #tpu.memory_space<vmem>>, vector<1x8x8xf32>
    %10 = vector.shape_cast %9 : vector<1x8x8xf32> to vector<8x8xf32>
    %cst_9 = arith.constant dense<0.000000e+00> : vector<2x8xf32>
    %11 = tpu.matmul %8, %10, %cst_9 {dimension_numbers = #tpu.dot_dimension_numbers<[1], [0], [0], [1], [0, 0, 1, 1], [], []>} : vector<2x8xf32>, vector<8x8xf32>, vector<2x8xf32> -> vector<2x8xf32>
    %12 = vector.extract_strided_slice %7 {offsets = [0, 8], sizes = [2, 8], strides = [1, 1]} : vector<2x32xf32> to vector<2x8xf32>
    %c1 = arith.constant 1 : index
    %c0_10 = arith.constant 0 : index
    %c0_11 = arith.constant 0 : index
    %13 = vector.load %arg3[%c1, %c0_10, %c0_11] : memref<4x8x8xf32, #tpu.memory_space<vmem>>, vector<1x8x8xf32>
    %14 = vector.shape_cast %13 : vector<1x8x8xf32> to vector<8x8xf32>
    %cst_12 = arith.constant dense<0.000000e+00> : vector<2x8xf32>
    %15 = tpu.matmul %12, %14, %cst_12 {dimension_numbers = #tpu.dot_dimension_numbers<[1], [0], [0], [1], [0, 0, 1, 1], [], []>} : vector<2x8xf32>, vector<8x8xf32>, vector<2x8xf32> -> vector<2x8xf32>
    %16 = vector.extract_strided_slice %7 {offsets = [0, 16], sizes = [2, 8], strides = [1, 1]} : vector<2x32xf32> to vector<2x8xf32>
    %c2 = arith.constant 2 : index
    %c0_13 = arith.constant 0 : index
    %c0_14 = arith.constant 0 : index
    %17 = vector.load %arg3[%c2, %c0_13, %c0_14] : memref<4x8x8xf32, #tpu.memory_space<vmem>>, vector<1x8x8xf32>
    %18 = vector.shape_cast %17 : vector<1x8x8xf32> to vector<8x8xf32>
    %cst_15 = arith.constant dense<0.000000e+00> : vector<2x8xf32>
    %19 = tpu.matmul %16, %18, %cst_15 {dimension_numbers = #tpu.dot_dimension_numbers<[1], [0], [0], [1], [0, 0, 1, 1], [], []>} : vector<2x8xf32>, vector<8x8xf32>, vector<2x8xf32> -> vector<2x8xf32>
    %20 = vector.extract_strided_slice %7 {offsets = [0, 24], sizes = [2, 8], strides = [1, 1]} : vector<2x32xf32> to vector<2x8xf32>
    %c3 = arith.constant 3 : index
    %c0_16 = arith.constant 0 : index
    %c0_17 = arith.constant 0 : index
    %21 = vector.load %arg3[%c3, %c0_16, %c0_17] : memref<4x8x8xf32, #tpu.memory_space<vmem>>, vector<1x8x8xf32>
    %22 = vector.shape_cast %21 : vector<1x8x8xf32> to vector<8x8xf32>
    %cst_18 = arith.constant dense<0.000000e+00> : vector<2x8xf32>
    %23 = tpu.matmul %20, %22, %cst_18 {dimension_numbers = #tpu.dot_dimension_numbers<[1], [0], [0], [1], [0, 0, 1, 1], [], []>} : vector<2x8xf32>, vector<8x8xf32>, vector<2x8xf32> -> vector<2x8xf32>
    %24 = tpu.concatenate %11, %15, %19, %23 in 1 : vector<2x8xf32>, vector<2x8xf32>, vector<2x8xf32>, vector<2x8xf32> -> vector<2x32xf32>
    %c0_19 = arith.constant 0 : index
    %c0_20 = arith.constant 0 : index
    %25 = vector.load %arg4[%c0_19, %c0_20] : memref<1x32xf32, #tpu.memory_space<vmem>>, vector<1x32xf32>
    %26 = vector.broadcast %25 : vector<1x32xf32> to vector<2x32xf32>
    %27 = arith.addf %24, %26 : vector<2x32xf32>
    %c0_21 = arith.constant 0 : index
    %c0_22 = arith.constant 0 : index
    %28 = vector.load %arg9[%c0_21, %c0_22] : memref<2x32xf32, #tpu.memory_space<vmem>>, vector<2x32xf32>
    tpu.vector_store %arg9[%c0_21, %c0_22], %27 {strides = array<i32>} : memref<2x32xf32, #tpu.memory_space<vmem>>, vector<2x32xf32>,
    %c0_23 = arith.constant 0 : index
    %c0_24 = arith.constant 0 : index
    %29 = vector.load %arg5[%c0_23, %c0_24] : memref<16x128xf32, #tpu.memory_space<vmem>>, vector<16x128xf32>
    %cst_25 = arith.constant dense<0.000000e+00> : vector<2x128xf32>
    %30 = tpu.matmul %0, %29, %cst_25 {dimension_numbers = #tpu.dot_dimension_numbers<[1], [0], [0], [1], [0, 0, 1, 1], [], []>} : vector<2x16xf32>, vector<16x128xf32>, vector<2x128xf32> -> vector<2x128xf32>
    %c0_26 = arith.constant 0 : index
    %c0_27 = arith.constant 0 : index
    %31 = vector.load %arg6[%c0_26, %c0_27] : memref<1x128xf32, #tpu.memory_space<vmem>>, vector<1x128xf32>
    %32 = vector.broadcast %31 : vector<1x128xf32> to vector<2x128xf32>
    %33 = arith.addf %30, %32 : vector<2x128xf32>
    %cst_28 = arith.constant 0.000000e+00 : f32
    %34 = vector.broadcast %cst_28 : f32 to vector<2x128xf32>
    %35 = arith.maximumf %33, %34 : vector<2x128xf32>
    %36 = vector.extract_strided_slice %35 {offsets = [0, 0], sizes = [2, 32], strides = [1, 1]} : vector<2x128xf32> to vector<2x32xf32>
    %c0_29 = arith.constant 0 : index
    %c0_30 = arith.constant 0 : index
    %c0_31 = arith.constant 0 : index
    %37 = vector.load %arg7[%c0_29, %c0_30, %c0_31] : memref<4x32x32xf32, #tpu.memory_space<vmem>>, vector<1x32x32xf32>
    %38 = vector.shape_cast %37 : vector<1x32x32xf32> to vector<32x32xf32>
    %cst_32 = arith.constant dense<0.000000e+00> : vector<2x32xf32>
    %39 = tpu.matmul %36, %38, %cst_32 {dimension_numbers = #tpu.dot_dimension_numbers<[1], [0], [0], [1], [0, 0, 1, 1], [], []>} : vector<2x32xf32>, vector<32x32xf32>, vector<2x32xf32> -> vector<2x32xf32>
    %40 = vector.extract_strided_slice %35 {offsets = [0, 32], sizes = [2, 32], strides = [1, 1]} : vector<2x128xf32> to vector<2x32xf32>
    %c1_33 = arith.constant 1 : index
    %c0_34 = arith.constant 0 : index
    %c0_35 = arith.constant 0 : index
    %41 = vector.load %arg7[%c1_33, %c0_34, %c0_35] : memref<4x32x32xf32, #tpu.memory_space<vmem>>, vector<1x32x32xf32>
    %42 = vector.shape_cast %41 : vector<1x32x32xf32> to vector<32x32xf32>
    %cst_36 = arith.constant dense<0.000000e+00> : vector<2x32xf32>
    %43 = tpu.matmul %40, %42, %cst_36 {dimension_numbers = #tpu.dot_dimension_numbers<[1], [0], [0], [1], [0, 0, 1, 1], [], []>} : vector<2x32xf32>, vector<32x32xf32>, vector<2x32xf32> -> vector<2x32xf32>
    %44 = vector.extract_strided_slice %35 {offsets = [0, 64], sizes = [2, 32], strides = [1, 1]} : vector<2x128xf32> to vector<2x32xf32>
    %c2_37 = arith.constant 2 : index
    %c0_38 = arith.constant 0 : index
    %c0_39 = arith.constant 0 : index
    %45 = vector.load %arg7[%c2_37, %c0_38, %c0_39] : memref<4x32x32xf32, #tpu.memory_space<vmem>>, vector<1x32x32xf32>
    %46 = vector.shape_cast %45 : vector<1x32x32xf32> to vector<32x32xf32>
    %cst_40 = arith.constant dense<0.000000e+00> : vector<2x32xf32>
    %47 = tpu.matmul %44, %46, %cst_40 {dimension_numbers = #tpu.dot_dimension_numbers<[1], [0], [0], [1], [0, 0, 1, 1], [], []>} : vector<2x32xf32>, vector<32x32xf32>, vector<2x32xf32> -> vector<2x32xf32>
    %48 = vector.extract_strided_slice %35 {offsets = [0, 96], sizes = [2, 32], strides = [1, 1]} : vector<2x128xf32> to vector<2x32xf32>
    %c3_41 = arith.constant 3 : index
    %c0_42 = arith.constant 0 : index
    %c0_43 = arith.constant 0 : index
    %49 = vector.load %arg7[%c3_41, %c0_42, %c0_43] : memref<4x32x32xf32, #tpu.memory_space<vmem>>, vector<1x32x32xf32>
    %50 = vector.shape_cast %49 : vector<1x32x32xf32> to vector<32x32xf32>
    %cst_44 = arith.constant dense<0.000000e+00> : vector<2x32xf32>
    %51 = tpu.matmul %48, %50, %cst_44 {dimension_numbers = #tpu.dot_dimension_numbers<[1], [0], [0], [1], [0, 0, 1, 1], [], []>} : vector<2x32xf32>, vector<32x32xf32>, vector<2x32xf32> -> vector<2x32xf32>
    %52 = tpu.concatenate %39, %43, %47, %51 in 1 : vector<2x32xf32>, vector<2x32xf32>, vector<2x32xf32>, vector<2x32xf32> -> vector<2x128xf32>
    %c0_45 = arith.constant 0 : index
    %c0_46 = arith.constant 0 : index
    %53 = vector.load %arg8[%c0_45, %c0_46] : memref<1x128xf32, #tpu.memory_space<vmem>>, vector<1x128xf32>
    %54 = vector.broadcast %53 : vector<1x128xf32> to vector<2x128xf32>
    %55 = arith.addf %52, %54 : vector<2x128xf32>
    %c0_47 = arith.constant 0 : index
    %c0_48 = arith.constant 0 : index
    %56 = vector.load %arg10[%c0_47, %c0_48] : memref<2x128xf32, #tpu.memory_space<vmem>>, vector<2x128xf32>
    tpu.vector_store %arg10[%c0_47, %c0_48], %55 {strides = array<i32>} : memref<2x128xf32, #tpu.memory_space<vmem>>, vector<2x128xf32>,
    return
  }
}

module attributes {stable_mosaic.version = 11 : i64} {
  func.func @_conv1_dfblk_kernel(%arg0: i32, %arg1: memref<1x8x640xbf16, #tpu.memory_space<vmem>>, %arg2: memref<8x72xbf16, #tpu.memory_space<vmem>>, %arg3: memref<1x8x4xf32, #tpu.memory_space<vmem>>, %arg4: memref<1x1x384xf32, #tpu.memory_space<vmem>>, %arg5: memref<1x8x640xbf16, #tpu.memory_space<vmem>>) attributes {dimension_semantics = [#tpu.dimension_semantics<parallel>], iteration_bounds = array<i64: 2>, scalar_prefetch = 0 : i64, scratch_operands = 0 : i64, tpu.core_type = #tpu.core_type<tc>, window_params = [{transform_indices = @transform_0, window_bounds = array<i64: 1, 8, 640>}, {pipeline_mode = #tpu.pipeline_mode<synchronous>, transform_indices = @transform_1, window_bounds = array<i64: 8, 72>}, {transform_indices = @transform_2, window_bounds = array<i64: 1, 8, 4>}, {pipeline_mode = #tpu.pipeline_mode<synchronous>, transform_indices = @transform_3, window_bounds = array<i64: 1, 1, 384>}, {transform_indices = @transform_4, window_bounds = array<i64: 1, 8, 640>}]} {
    %c0 = arith.constant 0 : index
    %c0_0 = arith.constant 0 : index
    %c0_1 = arith.constant 0 : index
    %0 = vector.load %arg1[%c0, %c0_0, %c0_1] : memref<1x8x640xbf16, #tpu.memory_space<vmem>>, vector<1x8x640xbf16>
    %1 = vector.shape_cast %0 : vector<1x8x640xbf16> to vector<8x640xbf16>
    %2 = arith.extf %1 : vector<8x640xbf16> to vector<8x640xf32>
    %3 = vector.extract_strided_slice %2 {offsets = [0, 109], sizes = [8, 384], strides = [1, 1]} : vector<8x640xf32> to vector<8x384xf32>
    %4 = vector.extract_strided_slice %2 {offsets = [0, 110], sizes = [8, 384], strides = [1, 1]} : vector<8x640xf32> to vector<8x384xf32>
    %5 = vector.extract_strided_slice %2 {offsets = [0, 111], sizes = [8, 384], strides = [1, 1]} : vector<8x640xf32> to vector<8x384xf32>
    %6 = vector.extract_strided_slice %2 {offsets = [0, 127], sizes = [8, 384], strides = [1, 1]} : vector<8x640xf32> to vector<8x384xf32>
    %7 = vector.extract_strided_slice %2 {offsets = [0, 128], sizes = [8, 384], strides = [1, 1]} : vector<8x640xf32> to vector<8x384xf32>
    %8 = vector.extract_strided_slice %2 {offsets = [0, 129], sizes = [8, 384], strides = [1, 1]} : vector<8x640xf32> to vector<8x384xf32>
    %9 = vector.extract_strided_slice %2 {offsets = [0, 145], sizes = [8, 384], strides = [1, 1]} : vector<8x640xf32> to vector<8x384xf32>
    %10 = vector.extract_strided_slice %2 {offsets = [0, 146], sizes = [8, 384], strides = [1, 1]} : vector<8x640xf32> to vector<8x384xf32>
    %11 = vector.extract_strided_slice %2 {offsets = [0, 147], sizes = [8, 384], strides = [1, 1]} : vector<8x640xf32> to vector<8x384xf32>
    %12 = tpu.concatenate %3, %4, %5, %6, %7, %8, %9, %10, %11 in 0 : vector<8x384xf32>, vector<8x384xf32>, vector<8x384xf32>, vector<8x384xf32>, vector<8x384xf32>, vector<8x384xf32>, vector<8x384xf32>, vector<8x384xf32>, vector<8x384xf32> -> vector<72x384xf32>
    %13 = arith.truncf %12 : vector<72x384xf32> to vector<72x384xbf16>
    %c0_2 = arith.constant 0 : index
    %c0_3 = arith.constant 0 : index
    %14 = vector.load %arg2[%c0_2, %c0_3] : memref<8x72xbf16, #tpu.memory_space<vmem>>, vector<8x72xbf16>
    %cst = arith.constant dense<0.000000e+00> : vector<8x384xf32>
    %15 = tpu.matmul %14, %13, %cst {dimension_numbers = #tpu.dot_dimension_numbers<[1], [0], [0], [1], [0, 0, 1, 1], [], []>} : vector<8x72xbf16>, vector<72x384xbf16>, vector<8x384xf32> -> vector<8x384xf32>
    %c0_4 = arith.constant 0 : index
    %c0_5 = arith.constant 0 : index
    %c0_6 = arith.constant 0 : index
    %16 = vector.load %arg3[%c0_4, %c0_5, %c0_6] : memref<1x8x4xf32, #tpu.memory_space<vmem>>, vector<1x8x4xf32>
    %17 = vector.shape_cast %16 : vector<1x8x4xf32> to vector<8x4xf32>
    %18 = vector.extract_strided_slice %17 {offsets = [0, 0], sizes = [8, 1], strides = [1, 1]} : vector<8x4xf32> to vector<8x1xf32>
    %19 = vector.extract_strided_slice %17 {offsets = [0, 1], sizes = [8, 1], strides = [1, 1]} : vector<8x4xf32> to vector<8x1xf32>
    %20 = vector.extract_strided_slice %17 {offsets = [0, 2], sizes = [8, 1], strides = [1, 1]} : vector<8x4xf32> to vector<8x1xf32>
    %21 = vector.extract_strided_slice %17 {offsets = [0, 3], sizes = [8, 1], strides = [1, 1]} : vector<8x4xf32> to vector<8x1xf32>
    %22 = vector.broadcast %18 : vector<8x1xf32> to vector<8x384xf32>
    %23 = arith.mulf %22, %15 : vector<8x384xf32>
    %24 = vector.broadcast %19 : vector<8x1xf32> to vector<8x384xf32>
    %25 = arith.addf %23, %24 : vector<8x384xf32>
    %cst_7 = arith.constant 2.000000e-01 : f32
    %26 = vector.broadcast %cst_7 : f32 to vector<8x384xf32>
    %27 = arith.mulf %26, %25 : vector<8x384xf32>
    %28 = arith.maximumf %25, %27 : vector<8x384xf32>
    %29 = vector.broadcast %20 : vector<8x1xf32> to vector<8x384xf32>
    %30 = arith.mulf %29, %28 : vector<8x384xf32>
    %31 = vector.broadcast %21 : vector<8x1xf32> to vector<8x384xf32>
    %32 = arith.addf %30, %31 : vector<8x384xf32>
    %cst_8 = arith.constant 2.000000e-01 : f32
    %33 = vector.broadcast %cst_8 : f32 to vector<8x384xf32>
    %34 = arith.mulf %33, %32 : vector<8x384xf32>
    %35 = arith.maximumf %32, %34 : vector<8x384xf32>
    %c0_9 = arith.constant 0 : index
    %c0_10 = arith.constant 0 : index
    %c0_11 = arith.constant 0 : index
    %36 = vector.load %arg4[%c0_9, %c0_10, %c0_11] : memref<1x1x384xf32, #tpu.memory_space<vmem>>, vector<1x1x384xf32>
    %37 = vector.shape_cast %36 : vector<1x1x384xf32> to vector<1x384xf32>
    %38 = vector.broadcast %37 : vector<1x384xf32> to vector<8x384xf32>
    %39 = arith.mulf %35, %38 : vector<8x384xf32>
    %40 = arith.truncf %39 : vector<8x384xf32> to vector<8x384xbf16>
    %cst_12 = arith.constant 0.000000e+00 : bf16
    %41 = vector.broadcast %cst_12 : bf16 to vector<8x128xbf16>
    %c0_13 = arith.constant 0 : index
    %c0_14 = arith.constant 0 : index
    %c0_15 = arith.constant 0 : index
    %42 = vector.load %arg5[%c0_13, %c0_14, %c0_15] : memref<1x8x640xbf16, #tpu.memory_space<vmem>>, vector<1x8x128xbf16>
    %43 = vector.shape_cast %42 : vector<1x8x128xbf16> to vector<8x128xbf16>
    %44 = vector.shape_cast %41 : vector<8x128xbf16> to vector<1x8x128xbf16>
    tpu.vector_store %arg5[%c0_13, %c0_14, %c0_15], %44 {strides = array<i32>} : memref<1x8x640xbf16, #tpu.memory_space<vmem>>, vector<1x8x128xbf16>,
    %c0_16 = arith.constant 0 : index
    %c0_17 = arith.constant 0 : index
    %c128 = arith.constant 128 : index
    %45 = vector.load %arg5[%c0_16, %c0_17, %c128] : memref<1x8x640xbf16, #tpu.memory_space<vmem>>, vector<1x8x384xbf16>
    %46 = vector.shape_cast %45 : vector<1x8x384xbf16> to vector<8x384xbf16>
    %47 = vector.shape_cast %40 : vector<8x384xbf16> to vector<1x8x384xbf16>
    tpu.vector_store %arg5[%c0_16, %c0_17, %c128], %47 {strides = array<i32>} : memref<1x8x640xbf16, #tpu.memory_space<vmem>>, vector<1x8x384xbf16>,
    %cst_18 = arith.constant 0.000000e+00 : bf16
    %48 = vector.broadcast %cst_18 : bf16 to vector<8x128xbf16>
    %c0_19 = arith.constant 0 : index
    %c0_20 = arith.constant 0 : index
    %c512 = arith.constant 512 : index
    %49 = vector.load %arg5[%c0_19, %c0_20, %c512] : memref<1x8x640xbf16, #tpu.memory_space<vmem>>, vector<1x8x128xbf16>
    %50 = vector.shape_cast %49 : vector<1x8x128xbf16> to vector<8x128xbf16>
    %51 = vector.shape_cast %48 : vector<8x128xbf16> to vector<1x8x128xbf16>
    tpu.vector_store %arg5[%c0_19, %c0_20, %c512], %51 {strides = array<i32>} : memref<1x8x640xbf16, #tpu.memory_space<vmem>>, vector<1x8x128xbf16>,
    return
  }
  func.func @transform_0(%arg0: i32) -> (i32, i32, i32) {
    %c0_i32 = arith.constant 0 : i32
    %c0_i32_0 = arith.constant 0 : i32
    %c0_i32_1 = arith.constant 0 : i32
    return %arg0, %c0_i32, %c0_i32_0 : i32, i32, i32
  }
  func.func @transform_1(%arg0: i32) -> (i32, i32) {
    %c0_i32 = arith.constant 0 : i32
    %c0_i32_0 = arith.constant 0 : i32
    %c0_i32_1 = arith.constant 0 : i32
    return %c0_i32, %c0_i32_0 : i32, i32
  }
  func.func @transform_2(%arg0: i32) -> (i32, i32, i32) {
    %c0_i32 = arith.constant 0 : i32
    %c0_i32_0 = arith.constant 0 : i32
    %c0_i32_1 = arith.constant 0 : i32
    return %arg0, %c0_i32, %c0_i32_0 : i32, i32, i32
  }
  func.func @transform_3(%arg0: i32) -> (i32, i32, i32) {
    %c0_i32 = arith.constant 0 : i32
    %c0_i32_0 = arith.constant 0 : i32
    %c0_i32_1 = arith.constant 0 : i32
    %c0_i32_2 = arith.constant 0 : i32
    return %c0_i32, %c0_i32_0, %c0_i32_1 : i32, i32, i32
  }
  func.func @transform_4(%arg0: i32) -> (i32, i32, i32) {
    %c0_i32 = arith.constant 0 : i32
    %c0_i32_0 = arith.constant 0 : i32
    %c0_i32_1 = arith.constant 0 : i32
    return %arg0, %c0_i32, %c0_i32_0 : i32, i32, i32
  }
}

module attributes {stable_mosaic.version = 11 : i64} {
  func.func @_conv2_stats_kernel(%arg0: i32, %arg1: memref<1x8x640xbf16, #tpu.memory_space<vmem>>, %arg2: memref<32x72xbf16, #tpu.memory_space<vmem>>, %arg3: memref<1x1x384xf32, #tpu.memory_space<vmem>>, %arg4: memref<1x32x384xf32, #tpu.memory_space<vmem>>, %arg5: memref<1x32x2xf32, #tpu.memory_space<vmem>>) attributes {dimension_semantics = [#tpu.dimension_semantics<parallel>], iteration_bounds = array<i64: 2>, scalar_prefetch = 0 : i64, scratch_operands = 0 : i64, tpu.core_type = #tpu.core_type<tc>, window_params = [{transform_indices = @transform_0, window_bounds = array<i64: 1, 8, 640>}, {pipeline_mode = #tpu.pipeline_mode<synchronous>, transform_indices = @transform_1, window_bounds = array<i64: 32, 72>}, {pipeline_mode = #tpu.pipeline_mode<synchronous>, transform_indices = @transform_2, window_bounds = array<i64: 1, 1, 384>}, {transform_indices = @transform_3, window_bounds = array<i64: 1, 32, 384>}, {transform_indices = @transform_4, window_bounds = array<i64: 1, 32, 2>}]} {
    %c0 = arith.constant 0 : index
    %c0_0 = arith.constant 0 : index
    %c0_1 = arith.constant 0 : index
    %0 = vector.load %arg1[%c0, %c0_0, %c0_1] : memref<1x8x640xbf16, #tpu.memory_space<vmem>>, vector<1x8x640xbf16>
    %1 = vector.shape_cast %0 : vector<1x8x640xbf16> to vector<8x640xbf16>
    %2 = arith.extf %1 : vector<8x640xbf16> to vector<8x640xf32>
    %3 = vector.extract_strided_slice %2 {offsets = [0, 109], sizes = [8, 384], strides = [1, 1]} : vector<8x640xf32> to vector<8x384xf32>
    %4 = vector.extract_strided_slice %2 {offsets = [0, 110], sizes = [8, 384], strides = [1, 1]} : vector<8x640xf32> to vector<8x384xf32>
    %5 = vector.extract_strided_slice %2 {offsets = [0, 111], sizes = [8, 384], strides = [1, 1]} : vector<8x640xf32> to vector<8x384xf32>
    %6 = vector.extract_strided_slice %2 {offsets = [0, 127], sizes = [8, 384], strides = [1, 1]} : vector<8x640xf32> to vector<8x384xf32>
    %7 = vector.extract_strided_slice %2 {offsets = [0, 128], sizes = [8, 384], strides = [1, 1]} : vector<8x640xf32> to vector<8x384xf32>
    %8 = vector.extract_strided_slice %2 {offsets = [0, 129], sizes = [8, 384], strides = [1, 1]} : vector<8x640xf32> to vector<8x384xf32>
    %9 = vector.extract_strided_slice %2 {offsets = [0, 145], sizes = [8, 384], strides = [1, 1]} : vector<8x640xf32> to vector<8x384xf32>
    %10 = vector.extract_strided_slice %2 {offsets = [0, 146], sizes = [8, 384], strides = [1, 1]} : vector<8x640xf32> to vector<8x384xf32>
    %11 = vector.extract_strided_slice %2 {offsets = [0, 147], sizes = [8, 384], strides = [1, 1]} : vector<8x640xf32> to vector<8x384xf32>
    %12 = tpu.concatenate %3, %4, %5, %6, %7, %8, %9, %10, %11 in 0 : vector<8x384xf32>, vector<8x384xf32>, vector<8x384xf32>, vector<8x384xf32>, vector<8x384xf32>, vector<8x384xf32>, vector<8x384xf32>, vector<8x384xf32>, vector<8x384xf32> -> vector<72x384xf32>
    %13 = arith.truncf %12 : vector<72x384xf32> to vector<72x384xbf16>
    %c0_2 = arith.constant 0 : index
    %c0_3 = arith.constant 0 : index
    %14 = vector.load %arg2[%c0_2, %c0_3] : memref<32x72xbf16, #tpu.memory_space<vmem>>, vector<32x72xbf16>
    %cst = arith.constant dense<0.000000e+00> : vector<32x384xf32>
    %15 = tpu.matmul %14, %13, %cst {dimension_numbers = #tpu.dot_dimension_numbers<[1], [0], [0], [1], [0, 0, 1, 1], [], []>} : vector<32x72xbf16>, vector<72x384xbf16>, vector<32x384xf32> -> vector<32x384xf32>
    %c0_4 = arith.constant 0 : index
    %c0_5 = arith.constant 0 : index
    %c0_6 = arith.constant 0 : index
    %16 = vector.load %arg4[%c0_4, %c0_5, %c0_6] : memref<1x32x384xf32, #tpu.memory_space<vmem>>, vector<1x32x384xf32>
    %17 = vector.shape_cast %16 : vector<1x32x384xf32> to vector<32x384xf32>
    %18 = vector.shape_cast %15 : vector<32x384xf32> to vector<1x32x384xf32>
    tpu.vector_store %arg4[%c0_4, %c0_5, %c0_6], %18 {strides = array<i32>} : memref<1x32x384xf32, #tpu.memory_space<vmem>>, vector<1x32x384xf32>,
    %c0_7 = arith.constant 0 : index
    %c0_8 = arith.constant 0 : index
    %c0_9 = arith.constant 0 : index
    %19 = vector.load %arg3[%c0_7, %c0_8, %c0_9] : memref<1x1x384xf32, #tpu.memory_space<vmem>>, vector<1x1x384xf32>
    %20 = vector.shape_cast %19 : vector<1x1x384xf32> to vector<1x384xf32>
    %21 = vector.broadcast %20 : vector<1x384xf32> to vector<32x384xf32>
    %22 = arith.mulf %15, %21 : vector<32x384xf32>
    %cst_10 = arith.constant dense<0.000000e+00> : vector<32xf32>
    %23 = vector.multi_reduction <add>, %22, %cst_10 [1] : vector<32x384xf32> to vector<32xf32>
    %24 = vector.shape_cast %23 : vector<32xf32> to vector<32x1xf32>
    %25 = arith.mulf %22, %15 : vector<32x384xf32>
    %cst_11 = arith.constant dense<0.000000e+00> : vector<32xf32>
    %26 = vector.multi_reduction <add>, %25, %cst_11 [1] : vector<32x384xf32> to vector<32xf32>
    %27 = vector.shape_cast %26 : vector<32xf32> to vector<32x1xf32>
    %28 = tpu.concatenate %24, %27 in 1 : vector<32x1xf32>, vector<32x1xf32> -> vector<32x2xf32>
    %c0_12 = arith.constant 0 : index
    %c0_13 = arith.constant 0 : index
    %c0_14 = arith.constant 0 : index
    %29 = vector.load %arg5[%c0_12, %c0_13, %c0_14] : memref<1x32x2xf32, #tpu.memory_space<vmem>>, vector<1x32x2xf32>
    %30 = vector.shape_cast %29 : vector<1x32x2xf32> to vector<32x2xf32>
    %31 = vector.shape_cast %28 : vector<32x2xf32> to vector<1x32x2xf32>
    tpu.vector_store %arg5[%c0_12, %c0_13, %c0_14], %31 {strides = array<i32>} : memref<1x32x2xf32, #tpu.memory_space<vmem>>, vector<1x32x2xf32>,
    return
  }
  func.func @transform_0(%arg0: i32) -> (i32, i32, i32) {
    %c0_i32 = arith.constant 0 : i32
    %c0_i32_0 = arith.constant 0 : i32
    %c0_i32_1 = arith.constant 0 : i32
    return %arg0, %c0_i32, %c0_i32_0 : i32, i32, i32
  }
  func.func @transform_1(%arg0: i32) -> (i32, i32) {
    %c0_i32 = arith.constant 0 : i32
    %c0_i32_0 = arith.constant 0 : i32
    %c0_i32_1 = arith.constant 0 : i32
    return %c0_i32, %c0_i32_0 : i32, i32
  }
  func.func @transform_2(%arg0: i32) -> (i32, i32, i32) {
    %c0_i32 = arith.constant 0 : i32
    %c0_i32_0 = arith.constant 0 : i32
    %c0_i32_1 = arith.constant 0 : i32
    %c0_i32_2 = arith.constant 0 : i32
    return %c0_i32, %c0_i32_0, %c0_i32_1 : i32, i32, i32
  }
  func.func @transform_3(%arg0: i32) -> (i32, i32, i32) {
    %c0_i32 = arith.constant 0 : i32
    %c0_i32_0 = arith.constant 0 : i32
    %c0_i32_1 = arith.constant 0 : i32
    return %arg0, %c0_i32, %c0_i32_0 : i32, i32, i32
  }
  func.func @transform_4(%arg0: i32) -> (i32, i32, i32) {
    %c0_i32 = arith.constant 0 : i32
    %c0_i32_0 = arith.constant 0 : i32
    %c0_i32_1 = arith.constant 0 : i32
    return %arg0, %c0_i32, %c0_i32_0 : i32, i32, i32
  }
}

module attributes {stable_mosaic.version = 11 : i64} {
  func.func @_bn_sa_fuse_kernel(%arg0: i32, %arg1: memref<1x32x384xf32, #tpu.memory_space<vmem>>, %arg2: memref<1x8x384xbf16, #tpu.memory_space<vmem>>, %arg3: memref<32x8xbf16, #tpu.memory_space<vmem>>, %arg4: memref<32x6xf32, #tpu.memory_space<vmem>>, %arg5: memref<1x32x4xf32, #tpu.memory_space<vmem>>, %arg6: memref<1x1x384xf32, #tpu.memory_space<vmem>>, %arg7: memref<1x32x384xf32, #tpu.memory_space<vmem>>) attributes {dimension_semantics = [#tpu.dimension_semantics<parallel>], iteration_bounds = array<i64: 2>, scalar_prefetch = 0 : i64, scratch_operands = 0 : i64, tpu.core_type = #tpu.core_type<tc>, window_params = [{transform_indices = @transform_0, window_bounds = array<i64: 1, 32, 384>}, {transform_indices = @transform_1, window_bounds = array<i64: 1, 8, 384>}, {pipeline_mode = #tpu.pipeline_mode<synchronous>, transform_indices = @transform_2, window_bounds = array<i64: 32, 8>}, {pipeline_mode = #tpu.pipeline_mode<synchronous>, transform_indices = @transform_3, window_bounds = array<i64: 32, 6>}, {transform_indices = @transform_4, window_bounds = array<i64: 1, 32, 4>}, {pipeline_mode = #tpu.pipeline_mode<synchronous>, transform_indices = @transform_5, window_bounds = array<i64: 1, 1, 384>}, {transform_indices = @transform_6, window_bounds = array<i64: 1, 32, 384>}]} {
    %c0 = arith.constant 0 : index
    %c0_0 = arith.constant 0 : index
    %c0_1 = arith.constant 0 : index
    %0 = vector.load %arg1[%c0, %c0_0, %c0_1] : memref<1x32x384xf32, #tpu.memory_space<vmem>>, vector<1x32x384xf32>
    %1 = vector.shape_cast %0 : vector<1x32x384xf32> to vector<32x384xf32>
    %c0_2 = arith.constant 0 : index
    %c0_3 = arith.constant 0 : index
    %c0_4 = arith.constant 0 : index
    %2 = vector.load %arg6[%c0_2, %c0_3, %c0_4] : memref<1x1x384xf32, #tpu.memory_space<vmem>>, vector<1x1x384xf32>
    %3 = vector.shape_cast %2 : vector<1x1x384xf32> to vector<1x384xf32>
    %c0_5 = arith.constant 0 : index
    %c0_6 = arith.constant 0 : index
    %4 = vector.load %arg4[%c0_5, %c0_6] : memref<32x6xf32, #tpu.memory_space<vmem>>, vector<32x6xf32>
    %5 = vector.extract_strided_slice %4 {offsets = [0, 0], sizes = [32, 1], strides = [1, 1]} : vector<32x6xf32> to vector<32x1xf32>
    %6 = vector.extract_strided_slice %4 {offsets = [0, 1], sizes = [32, 1], strides = [1, 1]} : vector<32x6xf32> to vector<32x1xf32>
    %7 = vector.extract_strided_slice %4 {offsets = [0, 2], sizes = [32, 1], strides = [1, 1]} : vector<32x6xf32> to vector<32x1xf32>
    %8 = vector.extract_strided_slice %4 {offsets = [0, 3], sizes = [32, 1], strides = [1, 1]} : vector<32x6xf32> to vector<32x1xf32>
    %9 = vector.extract_strided_slice %4 {offsets = [0, 4], sizes = [32, 1], strides = [1, 1]} : vector<32x6xf32> to vector<32x1xf32>
    %10 = vector.extract_strided_slice %4 {offsets = [0, 5], sizes = [32, 1], strides = [1, 1]} : vector<32x6xf32> to vector<32x1xf32>
    %c0_7 = arith.constant 0 : index
    %c0_8 = arith.constant 0 : index
    %c0_9 = arith.constant 0 : index
    %11 = vector.load %arg5[%c0_7, %c0_8, %c0_9] : memref<1x32x4xf32, #tpu.memory_space<vmem>>, vector<1x32x4xf32>
    %12 = vector.shape_cast %11 : vector<1x32x4xf32> to vector<32x4xf32>
    %13 = vector.extract_strided_slice %12 {offsets = [0, 0], sizes = [32, 1], strides = [1, 1]} : vector<32x4xf32> to vector<32x1xf32>
    %14 = vector.extract_strided_slice %12 {offsets = [0, 1], sizes = [32, 1], strides = [1, 1]} : vector<32x4xf32> to vector<32x1xf32>
    %15 = vector.extract_strided_slice %12 {offsets = [0, 2], sizes = [32, 1], strides = [1, 1]} : vector<32x4xf32> to vector<32x1xf32>
    %16 = vector.extract_strided_slice %12 {offsets = [0, 3], sizes = [32, 1], strides = [1, 1]} : vector<32x4xf32> to vector<32x1xf32>
    %17 = vector.broadcast %5 : vector<32x1xf32> to vector<32x384xf32>
    %18 = arith.mulf %17, %1 : vector<32x384xf32>
    %19 = vector.broadcast %6 : vector<32x1xf32> to vector<32x384xf32>
    %20 = arith.addf %18, %19 : vector<32x384xf32>
    %cst = arith.constant 2.000000e-01 : f32
    %21 = vector.broadcast %cst : f32 to vector<32x384xf32>
    %22 = arith.mulf %21, %20 : vector<32x384xf32>
    %23 = arith.maximumf %20, %22 : vector<32x384xf32>
    %24 = vector.broadcast %3 : vector<1x384xf32> to vector<32x384xf32>
    %25 = arith.mulf %23, %24 : vector<32x384xf32>
    %cst_10 = arith.constant dense<0.000000e+00> : vector<32xf32>
    %26 = vector.multi_reduction <add>, %25, %cst_10 [1] : vector<32x384xf32> to vector<32xf32>
    %27 = vector.shape_cast %26 : vector<32xf32> to vector<32x1xf32>
    %cst_11 = arith.constant 3.906250e-03 : f32
    %28 = vector.broadcast %cst_11 : f32 to vector<32x1xf32>
    %29 = arith.mulf %27, %28 : vector<32x1xf32>
    %30 = arith.mulf %25, %23 : vector<32x384xf32>
    %cst_12 = arith.constant dense<0.000000e+00> : vector<32xf32>
    %31 = vector.multi_reduction <add>, %30, %cst_12 [1] : vector<32x384xf32> to vector<32xf32>
    %32 = vector.shape_cast %31 : vector<32xf32> to vector<32x1xf32>
    %cst_13 = arith.constant 3.906250e-03 : f32
    %33 = vector.broadcast %cst_13 : f32 to vector<32x1xf32>
    %34 = arith.mulf %32, %33 : vector<32x1xf32>
    %35 = arith.mulf %29, %29 : vector<32x1xf32>
    %36 = arith.subf %34, %35 : vector<32x1xf32>
    %cst_14 = arith.constant 0.000000e+00 : f32
    %37 = vector.broadcast %cst_14 : f32 to vector<32x1xf32>
    %38 = arith.maximumf %36, %37 : vector<32x1xf32>
    %39 = vector.broadcast %29 : vector<32x1xf32> to vector<32x384xf32>
    %40 = arith.subf %23, %39 : vector<32x384xf32>
    %cst_15 = arith.constant 9.99999974E-6 : f32
    %41 = vector.broadcast %cst_15 : f32 to vector<32x1xf32>
    %42 = arith.addf %38, %41 : vector<32x1xf32>
    %43 = math.rsqrt %42 : vector<32x1xf32>
    %44 = vector.broadcast %43 : vector<32x1xf32> to vector<32x384xf32>
    %45 = arith.mulf %40, %44 : vector<32x384xf32>
    %46 = vector.broadcast %7 : vector<32x1xf32> to vector<32x384xf32>
    %47 = arith.mulf %46, %45 : vector<32x384xf32>
    %48 = arith.mulf %8, %29 : vector<32x1xf32>
    %49 = arith.addf %48, %9 : vector<32x1xf32>
    %50 = vector.broadcast %49 : vector<32x1xf32> to vector<32x384xf32>
    %51 = arith.addf %47, %50 : vector<32x384xf32>
    %52 = arith.negf %51 : vector<32x384xf32>
    %53 = math.exp %52 : vector<32x384xf32>
    %cst_16 = arith.constant 1.000000e+00 : f32
    %54 = vector.broadcast %cst_16 : f32 to vector<32x384xf32>
    %55 = arith.addf %54, %53 : vector<32x384xf32>
    %56 = arith.divf %54, %55 : vector<32x384xf32>
    %57 = arith.mulf %23, %56 : vector<32x384xf32>
    %58 = vector.broadcast %13 : vector<32x1xf32> to vector<32x384xf32>
    %59 = arith.mulf %58, %57 : vector<32x384xf32>
    %60 = vector.broadcast %14 : vector<32x1xf32> to vector<32x384xf32>
    %61 = arith.addf %59, %60 : vector<32x384xf32>
    %cst_17 = arith.constant 2.000000e-01 : f32
    %62 = vector.broadcast %cst_17 : f32 to vector<32x384xf32>
    %63 = arith.mulf %62, %61 : vector<32x384xf32>
    %64 = arith.maximumf %61, %63 : vector<32x384xf32>
    %65 = vector.broadcast %15 : vector<32x1xf32> to vector<32x384xf32>
    %66 = arith.mulf %65, %64 : vector<32x384xf32>
    %67 = vector.broadcast %16 : vector<32x1xf32> to vector<32x384xf32>
    %68 = arith.addf %66, %67 : vector<32x384xf32>
    %cst_18 = arith.constant 2.000000e-01 : f32
    %69 = vector.broadcast %cst_18 : f32 to vector<32x384xf32>
    %70 = arith.mulf %69, %68 : vector<32x384xf32>
    %71 = arith.maximumf %68, %70 : vector<32x384xf32>
    %c0_19 = arith.constant 0 : index
    %c0_20 = arith.constant 0 : index
    %72 = vector.load %arg3[%c0_19, %c0_20] : memref<32x8xbf16, #tpu.memory_space<vmem>>, vector<32x8xbf16>
    %c0_21 = arith.constant 0 : index
    %c0_22 = arith.constant 0 : index
    %c0_23 = arith.constant 0 : index
    %73 = vector.load %arg2[%c0_21, %c0_22, %c0_23] : memref<1x8x384xbf16, #tpu.memory_space<vmem>>, vector<1x8x384xbf16>
    %74 = vector.shape_cast %73 : vector<1x8x384xbf16> to vector<8x384xbf16>
    %cst_24 = arith.constant dense<0.000000e+00> : vector<32x384xf32>
    %75 = tpu.matmul %72, %74, %cst_24 {dimension_numbers = #tpu.dot_dimension_numbers<[1], [0], [0], [1], [0, 0, 1, 1], [], []>} : vector<32x8xbf16>, vector<8x384xbf16>, vector<32x384xf32> -> vector<32x384xf32>
    %76 = arith.addf %71, %75 : vector<32x384xf32>
    %77 = vector.broadcast %10 : vector<32x1xf32> to vector<32x384xf32>
    %78 = arith.addf %76, %77 : vector<32x384xf32>
    %c0_25 = arith.constant 0 : index
    %c0_26 = arith.constant 0 : index
    %c0_27 = arith.constant 0 : index
    %79 = vector.load %arg7[%c0_25, %c0_26, %c0_27] : memref<1x32x384xf32, #tpu.memory_space<vmem>>, vector<1x32x384xf32>
    %80 = vector.shape_cast %79 : vector<1x32x384xf32> to vector<32x384xf32>
    %81 = vector.shape_cast %78 : vector<32x384xf32> to vector<1x32x384xf32>
    tpu.vector_store %arg7[%c0_25, %c0_26, %c0_27], %81 {strides = array<i32>} : memref<1x32x384xf32, #tpu.memory_space<vmem>>, vector<1x32x384xf32>,
    return
  }
  func.func @transform_0(%arg0: i32) -> (i32, i32, i32) {
    %c0_i32 = arith.constant 0 : i32
    %c0_i32_0 = arith.constant 0 : i32
    %c0_i32_1 = arith.constant 0 : i32
    return %arg0, %c0_i32, %c0_i32_0 : i32, i32, i32
  }
  func.func @transform_1(%arg0: i32) -> (i32, i32, i32) {
    %c0_i32 = arith.constant 0 : i32
    %c0_i32_0 = arith.constant 0 : i32
    %c0_i32_1 = arith.constant 0 : i32
    return %arg0, %c0_i32, %c0_i32_0 : i32, i32, i32
  }
  func.func @transform_2(%arg0: i32) -> (i32, i32) {
    %c0_i32 = arith.constant 0 : i32
    %c0_i32_0 = arith.constant 0 : i32
    %c0_i32_1 = arith.constant 0 : i32
    return %c0_i32, %c0_i32_0 : i32, i32
  }
  func.func @transform_3(%arg0: i32) -> (i32, i32) {
    %c0_i32 = arith.constant 0 : i32
    %c0_i32_0 = arith.constant 0 : i32
    %c0_i32_1 = arith.constant 0 : i32
    return %c0_i32, %c0_i32_0 : i32, i32
  }
  func.func @transform_4(%arg0: i32) -> (i32, i32, i32) {
    %c0_i32 = arith.constant 0 : i32
    %c0_i32_0 = arith.constant 0 : i32
    %c0_i32_1 = arith.constant 0 : i32
    return %arg0, %c0_i32, %c0_i32_0 : i32, i32, i32
  }
  func.func @transform_5(%arg0: i32) -> (i32, i32, i32) {
    %c0_i32 = arith.constant 0 : i32
    %c0_i32_0 = arith.constant 0 : i32
    %c0_i32_1 = arith.constant 0 : i32
    %c0_i32_2 = arith.constant 0 : i32
    return %c0_i32, %c0_i32_0, %c0_i32_1 : i32, i32, i32
  }
  func.func @transform_6(%arg0: i32) -> (i32, i32, i32) {
    %c0_i32 = arith.constant 0 : i32
    %c0_i32_0 = arith.constant 0 : i32
    %c0_i32_1 = arith.constant 0 : i32
    return %arg0, %c0_i32, %c0_i32_0 : i32, i32, i32
  }
}

</mosaic_0001>

<llo_original>
// kernel: m_block_forward.5
$region0: #{m_block_forward.5}
  #allocation0 [shape = 'u32[]', space=smem, size = 0x4, offset = 0x4, fixed_abs, tag = 'smem constant byte address 0x4 - core index']
  #allocation1 [shape = 'u32[144,128]{1,0:T(1,128)}', space=vmem, size = 0x12000, scoped, tag = 'internal scratch']
  %s0 = inlined_call_operand.vmem [shape: bf16[2,8,640], index: 0, kind: input, shape index: {}]
  %s1 = inlined_call_operand.vmem [shape: bf16[8,72], index: 1, kind: input, shape index: {}]
  %s2 = inlined_call_operand.vmem [shape: f32[2,8,4], index: 2, kind: input, shape index: {}]
  %s3 = inlined_call_operand.vmem [shape: f32[1,1,384], index: 3, kind: input, shape index: {}]
  %s4 = inlined_call_operand.vmem [shape: bf16[2,8,640], index: 4, kind: output, shape index: {}]
  %s5 = sld [smem:[#allocation0]]
  $region49: #{m_block_forward.5} parent=0
    _
  %s7 = ssub.s32 1, %s5
  %s8 = scalar_select 0, %s7, %s5
  loop: start=0, step=1, limit=4
  $region2: #{m_block_forward.5} parent=0 // loop_pre_header
    _
  $region3: #{m_block_forward.5} parent=0 // loop_header
    %s10 = sphi 0, %s14
    %p11 = scmp.ge.s32.totalorder %s10, 4
    %s20 = sphi 0, %s22
    %s23 = sphi 0, %s20
    %s24 = sphi 0, %s23
    %s40 = sphi 0, %s24
    %s44 = sphi 0, %s44
    %s46 = sphi 0, %s44
    %s47 = sphi 0, %s46
    %s61 = sphi 0, %s47
    %s67 = sphi 0, %s69
    %s70 = sphi 0, %s67
    %s71 = sphi 0, %s70
    %s87 = sphi 0, %s71
    %s91 = sphi 0, %s91
    %s93 = sphi 0, %s91
    %s94 = sphi 0, %s93
    %s108 = sphi 0, %s94
    %s114 = sphi 0, %s116
    %s117 = sphi 0, %s114
    %s118 = sphi 0, %s117
    %s134 = sphi 0, %s118
  $region4: #{m_block_forward.5} parent=0 // loop_header_branch
    %13 = sbr.rel (%p11) target = $region8
  $region5: #{m_block_forward.5} parent=0 // loop_body
    %s15 = ssub.s32 %s10, 1
    %s16 = ssub.s32 %s10, 2
    %s17 = sadd.s32 %s10, 1
    %s18 = ssub.s32 %s10, %s17
    %p19 = scmp.eq.s32.totalorder %s18, 0
    %s21 = sadd.s32 %s20, 1
    %s22 = scalar_select %p19, %s20, %s21
    %p25 = pneg %p19
    %p26 = scmp.eq.s32.totalorder %s10, 1
    %p27 = por %p25, %p26
    %p28 = scmp.ne.s32.totalorder %s20, %s23
    %p29 = scmp.eq.s32.totalorder %s10, 0
    %p30 = por %p28, %p29
    %p31 = scmp.ne.s32.totalorder %s20, %s23
    %p32 = scmp.eq.s32.totalorder %s15, 1
    %p33 = por %p31, %p32
    %p34 = scmp.ne.s32.totalorder %s23, %s24
    %p35 = scmp.eq.s32.totalorder %s15, 0
    %p36 = por %p34, %p35
    %p37 = scmp.ne.s32.totalorder %s23, %s24
    %p38 = scmp.eq.s32.totalorder %s16, 1
    %p39 = por %p37, %p38
    %p41 = scmp.ne.s32.totalorder %s24, %s40
    %p42 = scmp.eq.s32.totalorder %s16, 0
    %p43 = por %p41, %p42
    %s45 = sadd.s32 %s44, 1
    %p48 = scmp.eq.s32.totalorder %s10, 1
    %p49 = scmp.ne.s32.totalorder %s44, %s46
    %p50 = scmp.eq.s32.totalorder %s10, 0
    %p51 = por %p49, %p50
    %p52 = scmp.ne.s32.totalorder %s44, %s46
    %p53 = scmp.eq.s32.totalorder %s15, 1
    %p54 = por %p52, %p53
    %p55 = scmp.ne.s32.totalorder %s46, %s47
    %p56 = scmp.eq.s32.totalorder %s15, 0
    %p57 = por %p55, %p56
    %p58 = scmp.ne.s32.totalorder %s46, %s47
    %p59 = scmp.eq.s32.totalorder %s16, 1
    %p60 = por %p58, %p59
    %p62 = scmp.ne.s32.totalorder %s47, %s61
    %p63 = scmp.eq.s32.totalorder %s16, 0
    %p64 = por %p62, %p63
    %s65 = ssub.s32 %s10, %s17
    %p66 = scmp.eq.s32.totalorder %s65, 0
    %s68 = sadd.s32 %s67, 1
    %s69 = scalar_select %p66, %s67, %s68
    %p72 = pneg %p66
    %p73 = scmp.eq.s32.totalorder %s10, 1
    %p74 = por %p72, %p73
    %p75 = scmp.ne.s32.totalorder %s67, %s70
    %p76 = scmp.eq.s32.totalorder %s10, 0
    %p77 = por %p75, %p76
    %p78 = scmp.ne.s32.totalorder %s67, %s70
    %p79 = scmp.eq.s32.totalorder %s15, 1
    %p80 = por %p78, %p79
    %p81 = scmp.ne.s32.totalorder %s70, %s71
    %p82 = scmp.eq.s32.totalorder %s15, 0
    %p83 = por %p81, %p82
    %p84 = scmp.ne.s32.totalorder %s70, %s71
    %p85 = scmp.eq.s32.totalorder %s16, 1
    %p86 = por %p84, %p85
    %p88 = scmp.ne.s32.totalorder %s71, %s87
    %p89 = scmp.eq.s32.totalorder %s16, 0
    %p90 = por %p88, %p89
    %s92 = sadd.s32 %s91, 1
    %p95 = scmp.eq.s32.totalorder %s10, 1
    %p96 = scmp.ne.s32.totalorder %s91, %s93
    %p97 = scmp.eq.s32.totalorder %s10, 0
    %p98 = por %p96, %p97
    %p99 = scmp.ne.s32.totalorder %s91, %s93
    %p100 = scmp.eq.s32.totalorder %s15, 1
    %p101 = por %p99, %p100
    %p102 = scmp.ne.s32.totalorder %s93, %s94
    %p103 = scmp.eq.s32.totalorder %s15, 0
    %p104 = por %p102, %p103
    %p105 = scmp.ne.s32.totalorder %s93, %s94
    %p106 = scmp.eq.s32.totalorder %s16, 1
    %p107 = por %p105, %p106
    %p109 = scmp.ne.s32.totalorder %s94, %s108
    %p110 = scmp.eq.s32.totalorder %s16, 0
    %p111 = por %p109, %p110
    %s112 = ssub.s32 %s10, %s17
    %p113 = scmp.eq.s32.totalorder %s112, 0
    %s115 = sadd.s32 %s114, 1
    %s116 = scalar_select %p113, %s114, %s115
    %p119 = pneg %p113
    %p120 = scmp.eq.s32.totalorder %s10, 1
    %p121 = por %p119, %p120
    %p122 = scmp.ne.s32.totalorder %s114, %s117
    %p123 = scmp.eq.s32.totalorder %s10, 0
    %p124 = por %p122, %p123
    %p125 = scmp.ne.s32.totalorder %s114, %s117
    %p126 = scmp.eq.s32.totalorder %s15, 1
    %p127 = por %p125, %p126
    %p128 = scmp.ne.s32.totalorder %s117, %s118
    %p129 = scmp.eq.s32.totalorder %s15, 0
    %p130 = por %p128, %p129
    %p131 = scmp.ne.s32.totalorder %s117, %s118
    %p132 = scmp.eq.s32.totalorder %s16, 1
    %p133 = por %p131, %p132
    %p135 = scmp.ne.s32.totalorder %s118, %s134
    %p136 = scmp.eq.s32.totalorder %s16, 0
    %p137 = por %p135, %p136
    %p138 = scmp.le.s32.totalorder 1, %s10
    %p139 = scmp.lt.s32.totalorder %s10, 3
    %p140 = pnand %p138, %p139
    %p141 = pneg %p140
    // Predicated region
    $region9: #{m_block_forward.5} parent=5 // pred_check
      _
    $region10: #{m_block_forward.5} parent=5 // pred_check_branch
      %143 = sbr.rel (%p140) target = $region12
    $region11: #{m_block_forward.5} parent=5 // pred_region
      %s144 = ssub.s32 %s10, 1
      // Predicated region
      $region13: #{m_block_forward.5} parent=11 // pred_check
        %p145 = pneg %p57
      $region14: #{m_block_forward.5} parent=11 // pred_check_branch
        %147 = sbr.rel (%p145) target = $region16
      $region15: #{m_block_forward.5} parent=11 // pred_region
        _
      $region16: #{m_block_forward.5} parent=11 // pred_fallthru
        _
      // Predicated region
      $region17: #{m_block_forward.5} parent=11 // pred_check
        %p148 = pneg %p104
      $region18: #{m_block_forward.5} parent=11 // pred_check_branch
        %150 = sbr.rel (%p148) target = $region20
      $region19: #{m_block_forward.5} parent=11 // pred_region
        _
      $region20: #{m_block_forward.5} parent=11 // pred_fallthru
        _
    $region12: #{m_block_forward.5} parent=5 // pred_fallthru
      _
    %p151 = scmp.lt.s32.totalorder %s10, 2
    // Predicated region
    $region21: #{m_block_forward.5} parent=5 // pred_check
      %p152 = pneg %p151
    $region22: #{m_block_forward.5} parent=5 // pred_check_branch
      %154 = sbr.rel (%p152) target = $region24
    $region23: #{m_block_forward.5} parent=5 // pred_region
      // Predicated region
      $region25: #{m_block_forward.5} parent=23 // pred_check
        %p155 = pneg %p30
      $region26: #{m_block_forward.5} parent=23 // pred_check_branch
        %157 = sbr.rel (%p155) target = $region28
      $region27: #{m_block_forward.5} parent=23 // pred_region
        %p158 = scmp.lt.s32.totalorder %s10, 1
        %s159 = scalar_select %p158, %s10, 1
        %s160 = smul.addr %s159, 5
        %s161 = smul.addr %s160, 4
        %s162 = scalar_lea.vmem %s0, %s161
      $region28: #{m_block_forward.5} parent=23 // pred_fallthru
        _
      // Predicated region
      $region29: #{m_block_forward.5} parent=23 // pred_check
        %p163 = pneg %p77
      $region30: #{m_block_forward.5} parent=23 // pred_check_branch
        %165 = sbr.rel (%p163) target = $region32
      $region31: #{m_block_forward.5} parent=23 // pred_region
        %p166 = scmp.lt.s32.totalorder %s10, 1
        %s167 = scalar_select %p166, %s10, 1
        %s168 = smul.addr %s167, 8
        %s169 = scalar_lea.vmem %s2, %s168
      $region32: #{m_block_forward.5} parent=23 // pred_fallthru
        _
    $region24: #{m_block_forward.5} parent=5 // pred_fallthru
      _
    %p170 = scmp.le.s32.totalorder 1, %s10
    %p171 = scmp.lt.s32.totalorder %s10, 3
    %p172 = pnand %p170, %p171
    %p173 = pneg %p172
    // Predicated region
    $region33: #{m_block_forward.5} parent=5 // pred_check
      _
    $region34: #{m_block_forward.5} parent=5 // pred_check_branch
      %175 = sbr.rel (%p172) target = $region36
    $region35: #{m_block_forward.5} parent=5 // pred_region
      %s176 = ssub.s32 %s10, 1
      %p177 = scmp.lt.s32.totalorder %s15, 1
      %s178 = scalar_select %p177, %s15, 1
      %s179 = smul.addr %s178, 5
      %s180 = smul.addr %s179, 4
      %s181 = scalar_lea.vmem %s0, %s180
      %p182 = pneg %p36
      %p183 = pneg %p33
      %p184 = pneg %p57
      %p185 = pneg %p54
      %p186 = scmp.lt.s32.totalorder %s15, 1
      %s187 = scalar_select %p186, %s15, 1
      %s188 = smul.addr %s187, 8
      %s189 = scalar_lea.vmem %s2, %s188
      %p190 = pneg %p83
      %p191 = pneg %p80
      %p192 = pneg %p104
      %p193 = pneg %p101
      %p194 = pneg %p130
      %p195 = pneg %p127
      %p196 = scmp.lt.s32.totalorder %s15, 1
      %s197 = scalar_select %p196, %s15, 1
      %s198 = smul.addr %s197, 5
      %s199 = smul.addr %s198, 4
      %s200 = scalar_lea.vmem %s4, %s199
      %p201 = scmp.lt.s32.totalorder %s15, 1
      %s202 = scalar_select %p201, %s15, 1
      %s203 = smul.addr %s202, 5
      %s204 = smul.addr %s203, 4
      %s205 = scalar_lea.vmem %s0, %s204
      %p206 = scmp.lt.s32.totalorder %s15, 1
      %s207 = scalar_select %p206, %s15, 1
      %s208 = smul.addr %s207, 8
      %s209 = scalar_lea.vmem %s2, %s208
      %p210 = scmp.lt.s32.totalorder %s15, 1
      %s211 = scalar_select %p210, %s15, 1
      %s212 = smul.addr %s211, 5
      %s213 = smul.addr %s212, 4
      %s214 = scalar_lea.vmem %s4, %s213
      %v216 = vld [vmem:[%s205] sm:$0xff]
      %v217 = vld [vmem:[%s205 + $0x8] sm:$0xff]
      %v218 = vld [vmem:[%s205 + $0x10] sm:$0xf]
      %v219 = vunpack.c.l.bf16 %v216
      %v220 = vunpack.c.h.bf16 %v216
      %v221 = vunpack.c.l.bf16 %v217
      %v222 = vunpack.c.h.bf16 %v217
      %v223 = vunpack.c.l.bf16 %v218
      %228 = vrot.lane.b32.xlu0 %v219, 127
      %v229 = vpop.permute.xlu0 %228
      %230 = vrot.lane.b32.xlu0 %v220, 127
      %v231 = vpop.permute.xlu0 %230
      %232 = vrot.lane.b32.xlu0 %v221, 127
      %v233 = vpop.permute.xlu0 %232
      %234 = vrot.lane.b32.xlu0 %v222, 127
      %v235 = vpop.permute.xlu0 %234
      %vm236 = vcmask 1039360
      %v237 = vsel %vm236, %v229, %v231
      %v238 = vsel %vm236, %v231, %v233
      %v239 = vsel %vm236, %v233, %v235
      %244 = vrot.lane.b32.xlu0 %v219, 126
      %v245 = vpop.permute.xlu0 %244
      %246 = vrot.lane.b32.xlu0 %v220, 126
      %v247 = vpop.permute.xlu0 %246
      %248 = vrot.lane.b32.xlu0 %v221, 126
      %v249 = vpop.permute.xlu0 %248
      %250 = vrot.lane.b32.xlu0 %v222, 126
      %v251 = vpop.permute.xlu0 %250
      %vm252 = vcmask 1031168
      %v253 = vsel %vm252, %v245, %v247
      %v254 = vsel %vm252, %v247, %v249
      %v255 = vsel %vm252, %v249, %v251
      %260 = vrot.lane.b32.xlu0 %v219, 110
      %v261 = vpop.permute.xlu0 %260
      %262 = vrot.lane.b32.xlu0 %v220, 110
      %v263 = vpop.permute.xlu0 %262
      %264 = vrot.lane.b32.xlu0 %v221, 110
      %v265 = vpop.permute.xlu0 %264
      %266 = vrot.lane.b32.xlu0 %v222, 110
      %v267 = vpop.permute.xlu0 %266
      %vm268 = vcmask 900096
      %v269 = vsel %vm268, %v261, %v263
      %v270 = vsel %vm268, %v263, %v265
      %v271 = vsel %vm268, %v265, %v267
      %276 = vrot.lane.b32.xlu0 %v220, 109
      %v277 = vpop.permute.xlu0 %276
      %278 = vrot.lane.b32.xlu0 %v221, 109
      %v279 = vpop.permute.xlu0 %278
      %280 = vrot.lane.b32.xlu0 %v222, 109
      %v281 = vpop.permute.xlu0 %280
      %vm282 = vcmask 891904
      %v283 = vsel %vm282, %v277, %v279
      %v284 = vsel %vm282, %v279, %v281
      %290 = vrot.lane.b32.xlu0 %v220, 108
      %v291 = vpop.permute.xlu0 %290
      %292 = vrot.lane.b32.xlu0 %v221, 108
      %v293 = vpop.permute.xlu0 %292
      %294 = vrot.lane.b32.xlu0 %v222, 108
      %v295 = vpop.permute.xlu0 %294
      %296 = vrot.lane.b32.xlu0 %v223, 108
      %v297 = vpop.permute.xlu0 %296
      %vm298 = vcmask 883712
      %v299 = vsel %vm298, %v291, %v293
      %v300 = vsel %vm298, %v293, %v295
      %v301 = vsel %vm298, %v295, %v297
      %306 = vrot.lane.b32.xlu0 %v220, 92
      %v307 = vpop.permute.xlu0 %306
      %308 = vrot.lane.b32.xlu0 %v221, 92
      %v309 = vpop.permute.xlu0 %308
      %310 = vrot.lane.b32.xlu0 %v222, 92
      %v311 = vpop.permute.xlu0 %310
      %312 = vrot.lane.b32.xlu0 %v223, 92
      %v313 = vpop.permute.xlu0 %312
      %vm314 = vcmask 752640
      %v315 = vsel %vm314, %v307, %v309
      %v316 = vsel %vm314, %v309, %v311
      %v317 = vsel %vm314, %v311, %v313
      %322 = vrot.lane.b32.xlu0 %v220, 91
      %v323 = vpop.permute.xlu0 %322
      %324 = vrot.lane.b32.xlu0 %v221, 91
      %v325 = vpop.permute.xlu0 %324
      %326 = vrot.lane.b32.xlu0 %v222, 91
      %v327 = vpop.permute.xlu0 %326
      %328 = vrot.lane.b32.xlu0 %v223, 91
      %v329 = vpop.permute.xlu0 %328
      %vm330 = vcmask 744448
      %v331 = vsel %vm330, %v323, %v325
      %v332 = vsel %vm330, %v325, %v327
      %v333 = vsel %vm330, %v327, %v329
      %338 = vrot.lane.b32.xlu0 %v220, 90
      %v339 = vpop.permute.xlu0 %338
      %340 = vrot.lane.b32.xlu0 %v221, 90
      %v341 = vpop.permute.xlu0 %340
      %342 = vrot.lane.b32.xlu0 %v222, 90
      %v343 = vpop.permute.xlu0 %342
      %344 = vrot.lane.b32.xlu0 %v223, 90
      %v345 = vpop.permute.xlu0 %344
      %vm346 = vcmask 736256
      %v347 = vsel %vm346, %v339, %v341
      %v348 = vsel %vm346, %v341, %v343
      %v349 = vsel %vm346, %v343, %v345
      %v354 = vpack.c.bf16 %v237, %v219
      %v355 = vpack.c.bf16 %v238, %v220
      %v356 = vpack.c.bf16 %v239, %v221
      %v357 = vpack.c.bf16 %v235, %v222
      %v358 = vpack.c.bf16 %v269, %v253
      %v359 = vpack.c.bf16 %v270, %v254
      %v360 = vpack.c.bf16 %v271, %v255
      %v361 = vpack.c.bf16 %v267, %v251
      %v362 = vpack.c.bf16 %v291, %v277
      %v363 = vpack.c.bf16 %v299, %v283
      %v364 = vpack.c.bf16 %v300, %v284
      %v365 = vpack.c.bf16 %v301, %v281
      %v366 = vpack.c.bf16 %v323, %v307
      %v367 = vpack.c.bf16 %v331, %v315
      %v368 = vpack.c.bf16 %v332, %v316
      %v369 = vpack.c.bf16 %v333, %v317
      %v370 = vpack.c.bf16 %v339, %v339
      %v371 = vpack.c.bf16 %v347, %v347
      %v372 = vpack.c.bf16 %v348, %v348
      %v373 = vpack.c.bf16 %v349, %v349
      %v374 = vld [vmem:[%s1] sm:$0xf]
      %395 = vrot.lane.b32.xlu0 %v354, 19
      %v396 = vpop.permute.xlu0 %395
      %397 = vrot.lane.b32.xlu0 %v355, 19
      %v398 = vpop.permute.xlu0 %397
      %399 = vrot.lane.b32.xlu0 %v356, 19
      %v400 = vpop.permute.xlu0 %399
      %401 = vrot.lane.b32.xlu0 %v357, 19
      %v402 = vpop.permute.xlu0 %401
      %403 = vrot.lane.b32.xlu0 %v358, 19
      %v404 = vpop.permute.xlu0 %403
      %405 = vrot.lane.b32.xlu0 %v359, 19
      %v406 = vpop.permute.xlu0 %405
      %407 = vrot.lane.b32.xlu0 %v360, 19
      %v408 = vpop.permute.xlu0 %407
      %409 = vrot.lane.b32.xlu0 %v361, 19
      %v410 = vpop.permute.xlu0 %409
      %411 = vrot.lane.b32.xlu0 %v362, 19
      %v412 = vpop.permute.xlu0 %411
      %413 = vrot.lane.b32.xlu0 %v363, 19
      %v414 = vpop.permute.xlu0 %413
      %415 = vrot.lane.b32.xlu0 %v364, 19
      %v416 = vpop.permute.xlu0 %415
      %417 = vrot.lane.b32.xlu0 %v365, 19
      %v418 = vpop.permute.xlu0 %417
      %419 = vrot.lane.b32.xlu0 %v366, 19
      %v420 = vpop.permute.xlu0 %419
      %421 = vrot.lane.b32.xlu0 %v367, 19
      %v422 = vpop.permute.xlu0 %421
      %423 = vrot.lane.b32.xlu0 %v368, 19
      %v424 = vpop.permute.xlu0 %423
      %425 = vrot.lane.b32.xlu0 %v369, 19
      %v426 = vpop.permute.xlu0 %425
      %427 = vrot.lane.b32.xlu0 %v370, 19
      %v428 = vpop.permute.xlu0 %427
      %429 = vrot.lane.b32.xlu0 %v371, 19
      %v430 = vpop.permute.xlu0 %429
      %431 = vrot.lane.b32.xlu0 %v372, 19
      %v432 = vpop.permute.xlu0 %431
      %433 = vrot.lane.b32.xlu0 %v373, 19
      %v434 = vpop.permute.xlu0 %433
      %vm435 = vcmask 154624
      %v436 = vsel %vm435, %v396, %v398
      %v437 = vsel %vm435, %v398, %v400
      %v438 = vsel %vm435, %v400, %v402
      %v439 = vsel %vm435, %v404, %v406
      %v440 = vsel %vm435, %v406, %v408
      %v441 = vsel %vm435, %v408, %v410
      %v442 = vsel %vm435, %v412, %v414
      %v443 = vsel %vm435, %v414, %v416
      %v444 = vsel %vm435, %v416, %v418
      %v445 = vsel %vm435, %v420, %v422
      %v446 = vsel %vm435, %v422, %v424
      %v447 = vsel %vm435, %v424, %v426
      %v448 = vsel %vm435, %v428, %v430
      %v449 = vsel %vm435, %v430, %v432
      %v450 = vsel %vm435, %v432, %v434
      %vm463 = vcmask 588800
      %v465 = vsel %vm463, %v374, 0
      %vm467 = vcmask 1043456
      %v469 = vsel %vm467, %v448, 0
      %v472 = vsel %vm467, %v449, 0
      %v475 = vsel %vm467, %v450, 0
      %477 = vmatprep.subr.bf16.mxu0 %v437
      %478 = vmatpush1.bf16.msra.mxu0 %v436
      %479 = vmatprep.subr.bf16.mxu0 %v440
      %480 = vmatpush1.bf16.msra.mxu0 %v439
      %481 = vmatprep.subr.bf16.mxu0 %v443
      %482 = vmatpush1.bf16.msra.mxu0 %v442
      %483 = vmatprep.subr.bf16.mxu0 %v446
      %484 = vmatpush1.bf16.msra.mxu0 %v445
      %485 = vmatprep.subr.bf16.mxu0 %v472
      %486 = vmatpush1.bf16.msra.mxu0 %v469
      %487 = vmatprep.subr.bf16.mxu0 0
      %488 = vmatpush1.bf16.msra.mxu0 0
      %489 = vmatprep.subr.bf16.mxu0 0
      %490 = vmatpush1.bf16.msra.mxu0 0
      %491 = vmatprep.subr.bf16.mxu0 0
      %492 = vmatpush1.bf16.msra.mxu0 0
      %493 = vmatprep.subr.bf16.mxu0 0
      %494 = vmatpush1.bf16.msra.mxu0 0
      %495 = vmatprep.subr.bf16.mxu0 0
      %496 = vmatpush1.bf16.msra.mxu0 0
      %497 = vmatprep.subr.bf16.mxu0 0
      %498 = vmatpush1.bf16.msra.mxu0 0
      %499 = vmatprep.subr.bf16.mxu0 0
      %500 = vmatpush1.bf16.msra.mxu0 0
      %501 = vmatprep.subr.bf16.mxu0 0
      %502 = vmatpush1.bf16.msra.mxu0 0
      %503 = vmatprep.subr.bf16.mxu0 0
      %504 = vmatpush1.bf16.msra.mxu0 0
      %505 = vmatprep.subr.bf16.mxu0 0
      %506 = vmatpush1.bf16.msra.mxu0 0
      %507 = vmatprep.subr.bf16.mxu0 0
      %508 = vmatpush1.bf16.msra.mxu0 0
      %509 = vmatprep.mubr.bf16.mxu0 0
      %510 = vmatmul.mubr.bf16.gmra.mrb[0].mxu0 %v465
      %v511 = vpop.f32.mrb[0].mxu0
      %v512 = vadd.f32 0.0, %v511
      %v513 = vpop.f32.mrb[0].mxu0
      %v514 = vadd.f32 0.0, %v513
      %v515 = vpop.f32.mrb[0].mxu0
      %v516 = vpop.f32.mrb[0].mxu0
      %517 = vdwg.mxu0
      %518 = vmatprep.subr.bf16.mxu0 0
      %519 = vmatpush1.bf16.msra.mxu0 %v438
      %520 = vmatprep.subr.bf16.mxu0 0
      %521 = vmatpush1.bf16.msra.mxu0 %v441
      %522 = vmatprep.subr.bf16.mxu0 0
      %523 = vmatpush1.bf16.msra.mxu0 %v444
      %524 = vmatprep.subr.bf16.mxu0 0
      %525 = vmatpush1.bf16.msra.mxu0 %v447
      %526 = vmatprep.subr.bf16.mxu0 0
      %527 = vmatpush1.bf16.msra.mxu0 %v475
      %528 = vmatprep.subr.bf16.mxu0 0
      %529 = vmatpush1.bf16.msra.mxu0 0
      %530 = vmatprep.subr.bf16.mxu0 0
      %531 = vmatpush1.bf16.msra.mxu0 0
      %532 = vmatprep.subr.bf16.mxu0 0
      %533 = vmatpush1.bf16.msra.mxu0 0
      %534 = vmatprep.subr.bf16.mxu0 0
      %535 = vmatpush1.bf16.msra.mxu0 0
      %536 = vmatprep.subr.bf16.mxu0 0
      %537 = vmatpush1.bf16.msra.mxu0 0
      %538 = vmatprep.subr.bf16.mxu0 0
      %539 = vmatpush1.bf16.msra.mxu0 0
      %540 = vmatprep.subr.bf16.mxu0 0
      %541 = vmatpush1.bf16.msra.mxu0 0
      %542 = vmatprep.subr.bf16.mxu0 0
      %543 = vmatpush1.bf16.msra.mxu0 0
      %544 = vmatprep.subr.bf16.mxu0 0
      %545 = vmatpush1.bf16.msra.mxu0 0
      %546 = vmatprep.subr.bf16.mxu0 0
      %547 = vmatpush1.bf16.msra.mxu0 0
      %548 = vmatprep.subr.bf16.mxu0 0
      %549 = vmatpush1.bf16.msra.mxu0 0
      %550 = vmatprep.mubr.bf16.mxu0 0
      %551 = vmatmul.mubr.bf16.gmra.mrb[0].mxu0 %v465
      %v552 = vpop.f32.mrb[0].mxu0
      %v553 = vadd.f32 0.0, %v552
      %v554 = vpop.f32.mrb[0].mxu0
      %v555 = vpop.f32.mrb[0].mxu0
      %v556 = vpop.f32.mrb[0].mxu0
      %557 = vdwg.mxu0
      %v558 = vld [vmem:[%s209] sm:$0xff]
      %560 = vset.pattern.permute.xlu0 0
      %561 = vperm.xlu0 %560, %v558
      %v562 = vpop.permute.xlu0 %561
      %v564 = vmul.f32 %v562, %v512
      %v565 = vmul.f32 %v562, %v514
      %v566 = vmul.f32 %v562, %v553
      %567 = vset.pattern.permute.xlu0 1
      %568 = vperm.xlu0 %567, %v558
      %v569 = vpop.permute.xlu0 %568
      %v571 = vadd.f32 %v564, %v569
      %v572 = vadd.f32 %v565, %v569
      %v573 = vadd.f32 %v566, %v569
      %v574 = vmul.f32 %v571, 0.2
      %v575 = vmul.f32 %v572, 0.2
      %v576 = vmul.f32 %v573, 0.2
      %v577 = vmax.f32 %v571, %v574
      %v578 = vmax.f32 %v572, %v575
      %v579 = vmax.f32 %v573, %v576
      %580 = vset.pattern.permute.xlu0 2
      %581 = vperm.xlu0 %580, %v558
      %v582 = vpop.permute.xlu0 %581
      %v584 = vmul.f32 %v582, %v577
      %v585 = vmul.f32 %v582, %v578
      %v586 = vmul.f32 %v582, %v579
      %587 = vset.pattern.permute.xlu0 3
      %588 = vperm.xlu0 %587, %v558
      %v589 = vpop.permute.xlu0 %588
      %v591 = vadd.f32 %v584, %v589
      %v592 = vadd.f32 %v585, %v589
      %v593 = vadd.f32 %v586, %v589
      %v594 = vmul.f32 %v591, 0.2
      %v595 = vmul.f32 %v592, 0.2
      %v596 = vmul.f32 %v593, 0.2
      %v597 = vmax.f32 %v591, %v594
      %v598 = vmax.f32 %v592, %v595
      %v599 = vmax.f32 %v593, %v596
      %v600 = vld [vmem:[%s3] sm:$0x7]
      %v602 = vlaneseq
      %v603 = vshrl.u32 %v602, 7
      %v604 = vsub.s32 0, %v603
      %v605 = vrot.slane %v600, %v604
      %v606 = vlaneseq
      %v607 = vshrl.u32 %v606, 7
      %v608 = vsub.s32 1, %v607
      %v609 = vrot.slane %v600, %v608
      %v610 = vlaneseq
      %v611 = vshrl.u32 %v610, 7
      %v612 = vsub.s32 2, %v611
      %v613 = vrot.slane %v600, %v612
      %v617 = vmul.f32 %v597, %v605
      %v618 = vmul.f32 %v598, %v609
      %v619 = vmul.f32 %v599, %v613
      %v620 = vpack.c.bf16 %v617, %v617
      %v621 = vpack.c.bf16 %v618, %v618
      %v622 = vpack.c.bf16 %v619, %v619
      %623 = vst [vmem:[%s214] sm:$0xf] 0
      %v627 = vunpack.c.l.b16 %v620
      %v628 = vunpack.c.l.b16 %v621
      %v629 = vunpack.c.l.b16 %v622
      %v630 = vpack.c.b16 %v628, %v627
      %v631 = vpack.c.b16 %v629, %v629
      %634 = vst [vmem:[%s214 + $0x4] sm:$0xff] %v630
      %635 = vst [vmem:[%s214 + $0xc] sm:$0xf] %v631
      %636 = vst [vmem:[%s214 + $0x10] sm:$0xf] 0
      %p637 = scmp.lt.s32.totalorder %s15, 1
      %s638 = scalar_select %p637, %s15, 1
      %s639 = smul.addr %s638, 5
      %s640 = smul.addr %s639, 4
      %s641 = scalar_lea.vmem %s4, %s640
      // Predicated region
      $region37: #{m_block_forward.5} parent=35 // pred_check
        %p642 = pneg %p127
      $region38: #{m_block_forward.5} parent=35 // pred_check_branch
        %644 = sbr.rel (%p642) target = $region40
      $region39: #{m_block_forward.5} parent=35 // pred_region
        _
      $region40: #{m_block_forward.5} parent=35 // pred_fallthru
        _
    $region36: #{m_block_forward.5} parent=5 // pred_fallthru
      _
    %p645 = scmp.le.s32.totalorder 2, %s10
    // Predicated region
    $region41: #{m_block_forward.5} parent=5 // pred_check
      %p646 = pneg %p645
    $region42: #{m_block_forward.5} parent=5 // pred_check_branch
      %648 = sbr.rel (%p646) target = $region44
    $region43: #{m_block_forward.5} parent=5 // pred_region
      %s649 = ssub.s32 %s10, 2
      // Predicated region
      $region45: #{m_block_forward.5} parent=43 // pred_check
        %p650 = pneg %p133
      $region46: #{m_block_forward.5} parent=43 // pred_check_branch
        %652 = sbr.rel (%p650) target = $region48
      $region47: #{m_block_forward.5} parent=43 // pred_region
        %p653 = scmp.lt.s32.totalorder %s16, 1
        %s654 = scalar_select %p653, %s16, 1
        %s655 = smul.addr %s654, 5
        %s656 = smul.addr %s655, 4
        %s657 = scalar_lea.vmem %s4, %s656
      $region48: #{m_block_forward.5} parent=43 // pred_fallthru
        _
    $region44: #{m_block_forward.5} parent=5 // pred_fallthru
      _
  $region6: #{m_block_forward.5} parent=0 // loop_footer
    %s14 = sadd.s32 1, %s10
  $region7: #{m_block_forward.5} parent=0 // loop_footer_branch
    %9 = sbr.rel target = $region3
  $region8: #{m_block_forward.5} parent=0 // loop_exit
    _

// kernel: m_block_forward.4
$region0: #{m_block_forward.4}
  #allocation0 [shape = 'u32[]', space=smem, size = 0x4, offset = 0x4, fixed_abs, tag = 'smem constant byte address 0x4 - core index']
  #allocation1 [shape = 'u32[144,128]{1,0:T(1,128)}', space=vmem, size = 0x12000, scoped, tag = 'internal scratch']
  %s0 = inlined_call_operand.vmem [shape: f32[2,16], index: 0, kind: input, shape index: {}]
  %s1 = inlined_call_operand.vmem [shape: f32[16,32], index: 1, kind: input, shape index: {}]
  %s2 = inlined_call_operand.vmem [shape: f32[1,32], index: 2, kind: input, shape index: {}]
  %s3 = inlined_call_operand.vmem [shape: f32[4,8,8], index: 3, kind: input, shape index: {}]
  %s4 = inlined_call_operand.vmem [shape: f32[1,32], index: 4, kind: input, shape index: {}]
  %s5 = inlined_call_operand.vmem [shape: f32[16,128], index: 5, kind: input, shape index: {}]
  %s6 = inlined_call_operand.vmem [shape: f32[1,128], index: 6, kind: input, shape index: {}]
  %s7 = inlined_call_operand.vmem [shape: f32[4,32,32], index: 7, kind: input, shape index: {}]
  %s8 = inlined_call_operand.vmem [shape: f32[1,128], index: 8, kind: input, shape index: {}]
  %s9 = inlined_call_operand.vmem [shape: f32[2,32], index: 9, kind: output, shape index: {0}]
  %s10 = inlined_call_operand.vmem [shape: f32[2,128], index: 10, kind: output, shape index: {1}]
  %11 = xla_tuple %s9, %s10
  %s12 = sld [smem:[#allocation0]]
  $region54: #{m_block_forward.4} parent=0
    _
  %s14 = ssub.s32 1, %s12
  %s15 = scalar_select 0, %s14, %s12
  // Predicated region
  $region2: #{m_block_forward.4} parent=0 // pred_check
    _
  $region3: #{m_block_forward.4} parent=0 // pred_check_branch
    %17 = sbr.rel (0) target = $region5
  $region4: #{m_block_forward.4} parent=0 // pred_region
    _
  $region5: #{m_block_forward.4} parent=0 // pred_fallthru
    _
  // Predicated region
  $region6: #{m_block_forward.4} parent=0 // pred_check
    _
  $region7: #{m_block_forward.4} parent=0 // pred_check_branch
    %19 = sbr.rel (0) target = $region9
  $region8: #{m_block_forward.4} parent=0 // pred_region
    _
  $region9: #{m_block_forward.4} parent=0 // pred_fallthru
    _
  // Predicated region
  $region10: #{m_block_forward.4} parent=0 // pred_check
    _
  $region11: #{m_block_forward.4} parent=0 // pred_check_branch
    %21 = sbr.rel (0) target = $region13
  $region12: #{m_block_forward.4} parent=0 // pred_region
    _
  $region13: #{m_block_forward.4} parent=0 // pred_fallthru
    _
  // Predicated region
  $region14: #{m_block_forward.4} parent=0 // pred_check
    _
  $region15: #{m_block_forward.4} parent=0 // pred_check_branch
    %23 = sbr.rel (0) target = $region17
  $region16: #{m_block_forward.4} parent=0 // pred_region
    _
  $region17: #{m_block_forward.4} parent=0 // pred_fallthru
    _
  // Predicated region
  $region18: #{m_block_forward.4} parent=0 // pred_check
    _
  $region19: #{m_block_forward.4} parent=0 // pred_check_branch
    %25 = sbr.rel (0) target = $region21
  $region20: #{m_block_forward.4} parent=0 // pred_region
    _
  $region21: #{m_block_forward.4} parent=0 // pred_fallthru
    _
  // Predicated region
  $region22: #{m_block_forward.4} parent=0 // pred_check
    _
  $region23: #{m_block_forward.4} parent=0 // pred_check_branch
    %27 = sbr.rel (0) target = $region25
  $region24: #{m_block_forward.4} parent=0 // pred_region
    _
  $region25: #{m_block_forward.4} parent=0 // pred_fallthru
    _
  // Predicated region
  $region26: #{m_block_forward.4} parent=0 // pred_check
    _
  $region27: #{m_block_forward.4} parent=0 // pred_check_branch
    %29 = sbr.rel (0) target = $region29
  $region28: #{m_block_forward.4} parent=0 // pred_region
    _
  $region29: #{m_block_forward.4} parent=0 // pred_fallthru
    _
  // Predicated region
  $region30: #{m_block_forward.4} parent=0 // pred_check
    _
  $region31: #{m_block_forward.4} parent=0 // pred_check_branch
    %31 = sbr.rel (0) target = $region33
  $region32: #{m_block_forward.4} parent=0 // pred_region
    _
  $region33: #{m_block_forward.4} parent=0 // pred_fallthru
    _
  // Predicated region
  $region34: #{m_block_forward.4} parent=0 // pred_check
    _
  $region35: #{m_block_forward.4} parent=0 // pred_check_branch
    %33 = sbr.rel (0) target = $region37
  $region36: #{m_block_forward.4} parent=0 // pred_region
    _
  $region37: #{m_block_forward.4} parent=0 // pred_fallthru
    _
  %v34 = vld [vmem:[%s0] sm:$0x3]
  %v35 = vld [vmem:[%s1] sm:$0xff]
  %v36 = vld [vmem:[%s1 + $0x8] sm:$0xff]
  %v37 = vld [vmem:[%s2] sm:$0x1]
  %v39 = vlaneseq
  %v40 = vshrl.u32 %v39, 7
  %v41 = vsub.s32 0, %v40
  %v42 = vrot.slane %v37, %v41
  %vm44 = vcmask 130048
  %v46 = vsel %vm44, %v34, 0
  %48 = vmatprep.subr.mxu0 0.0
  %49 = vmatpush1.msra.mxu0 %v35
  %50 = vmatprep.subr.mxu0 0.0
  %51 = vmatpush1.msra.mxu0 %v36
  %52 = vmatprep.subr.mxu0 0.0
  %53 = vmatpush1.msra.mxu0 0.0
  %54 = vmatprep.subr.mxu0 0.0
  %55 = vmatpush1.msra.mxu0 0.0
  %56 = vmatprep.subr.mxu0 0.0
  %57 = vmatpush1.msra.mxu0 0.0
  %58 = vmatprep.subr.mxu0 0.0
  %59 = vmatpush1.msra.mxu0 0.0
  %60 = vmatprep.subr.mxu0 0.0
  %61 = vmatpush1.msra.mxu0 0.0
  %62 = vmatprep.subr.mxu0 0.0
  %63 = vmatpush1.msra.mxu0 0.0
  %64 = vmatprep.subr.mxu0 0.0
  %65 = vmatpush1.msra.mxu0 0.0
  %66 = vmatprep.subr.mxu0 0.0
  %67 = vmatpush1.msra.mxu0 0.0
  %68 = vmatprep.subr.mxu0 0.0
  %69 = vmatpush1.msra.mxu0 0.0
  %70 = vmatprep.subr.mxu0 0.0
  %71 = vmatpush1.msra.mxu0 0.0
  %72 = vmatprep.subr.mxu0 0.0
  %73 = vmatpush1.msra.mxu0 0.0
  %74 = vmatprep.subr.mxu0 0.0
  %75 = vmatpush1.msra.mxu0 0.0
  %76 = vmatprep.subr.mxu0 0.0
  %77 = vmatpush1.msra.mxu0 0.0
  %78 = vmatprep.subr.mxu0 0.0
  %79 = vmatpush1.msra.mxu0 0.0
  %80 = vmatprep.subr.mxu0 0.0
  %81 = vmatpush1.msra.mxu0 0.0
  %82 = vmatprep.subr.mxu0 0.0
  %83 = vmatpush1.msra.mxu0 0.0
  %84 = vmatprep.subr.mxu0 0.0
  %85 = vmatpush1.msra.mxu0 0.0
  %86 = vmatprep.subr.mxu0 0.0
  %87 = vmatpush1.msra.mxu0 0.0
  %88 = vmatprep.subr.mxu0 0.0
  %89 = vmatpush1.msra.mxu0 0.0
  %90 = vmatprep.subr.mxu0 0.0
  %91 = vmatpush1.msra.mxu0 0.0
  %92 = vmatprep.subr.mxu0 0.0
  %93 = vmatpush1.msra.mxu0 0.0
  %94 = vmatprep.subr.mxu0 0.0
  %95 = vmatpush1.msra.mxu0 0.0
  %96 = vmatprep.subr.mxu0 0.0
  %97 = vmatpush1.msra.mxu0 0.0
  %98 = vmatprep.subr.mxu0 0.0
  %99 = vmatpush1.msra.mxu0 0.0
  %100 = vmatprep.subr.mxu0 0.0
  %101 = vmatpush1.msra.mxu0 0.0
  %102 = vmatprep.subr.mxu0 0.0
  %103 = vmatpush1.msra.mxu0 0.0
  %104 = vmatprep.subr.mxu0 0.0
  %105 = vmatpush1.msra.mxu0 0.0
  %106 = vmatprep.subr.mxu0 0.0
  %107 = vmatpush1.msra.mxu0 0.0
  %108 = vmatprep.subr.mxu0 0.0
  %109 = vmatpush1.msra.mxu0 0.0
  %110 = vmatprep.subr.mxu0 0.0
  %111 = vmatpush1.msra.mxu0 0.0
  %112 = vmatprep.mubr.f32.mxu0 0.0
  %113 = vmatmul.mubr.f32.gmra.mrb[0].mxu0 %v46
  %v114 = vpop.f32.mrb[0].mxu0
  %v115 = vadd.f32 %v42, %v114
  %v116 = vpop.f32.mrb[0].mxu0
  %117 = vdwg.mxu0
  %v118 = vmax.f32 %v115, 0.0
  %v119 = vld [vmem:[%s3] sm:$0xff]
  %vm120 = vcmask 64512
  %v122 = vsel %vm120, %v118, 0
  %124 = vmatprep.subr.mxu0 0.0
  %125 = vmatpush1.msra.mxu0 %v119
  %126 = vmatprep.subr.mxu0 0.0
  %127 = vmatpush1.msra.mxu0 0.0
  %128 = vmatprep.subr.mxu0 0.0
  %129 = vmatpush1.msra.mxu0 0.0
  %130 = vmatprep.subr.mxu0 0.0
  %131 = vmatpush1.msra.mxu0 0.0
  %132 = vmatprep.subr.mxu0 0.0
  %133 = vmatpush1.msra.mxu0 0.0
  %134 = vmatprep.subr.mxu0 0.0
  %135 = vmatpush1.msra.mxu0 0.0
  %136 = vmatprep.subr.mxu0 0.0
  %137 = vmatpush1.msra.mxu0 0.0
  %138 = vmatprep.subr.mxu0 0.0
  %139 = vmatpush1.msra.mxu0 0.0
  %140 = vmatprep.subr.mxu0 0.0
  %141 = vmatpush1.msra.mxu0 0.0
  %142 = vmatprep.subr.mxu0 0.0
  %143 = vmatpush1.msra.mxu0 0.0
  %144 = vmatprep.subr.mxu0 0.0
  %145 = vmatpush1.msra.mxu0 0.0
  %146 = vmatprep.subr.mxu0 0.0
  %147 = vmatpush1.msra.mxu0 0.0
  %148 = vmatprep.subr.mxu0 0.0
  %149 = vmatpush1.msra.mxu0 0.0
  %150 = vmatprep.subr.mxu0 0.0
  %151 = vmatpush1.msra.mxu0 0.0
  %152 = vmatprep.subr.mxu0 0.0
  %153 = vmatpush1.msra.mxu0 0.0
  %154 = vmatprep.subr.mxu0 0.0
  %155 = vmatpush1.msra.mxu0 0.0
  %156 = vmatprep.subr.mxu0 0.0
  %157 = vmatpush1.msra.mxu0 0.0
  %158 = vmatprep.subr.mxu0 0.0
  %159 = vmatpush1.msra.mxu0 0.0
  %160 = vmatprep.subr.mxu0 0.0
  %161 = vmatpush1.msra.mxu0 0.0
  %162 = vmatprep.subr.mxu0 0.0
  %163 = vmatpush1.msra.mxu0 0.0
  %164 = vmatprep.subr.mxu0 0.0
  %165 = vmatpush1.msra.mxu0 0.0
  %166 = vmatprep.subr.mxu0 0.0
  %167 = vmatpush1.msra.mxu0 0.0
  %168 = vmatprep.subr.mxu0 0.0
  %169 = vmatpush1.msra.mxu0 0.0
  %170 = vmatprep.subr.mxu0 0.0
  %171 = vmatpush1.msra.mxu0 0.0
  %172 = vmatprep.subr.mxu0 0.0
  %173 = vmatpush1.msra.mxu0 0.0
  %174 = vmatprep.subr.mxu0 0.0
  %175 = vmatpush1.msra.mxu0 0.0
  %176 = vmatprep.subr.mxu0 0.0
  %177 = vmatpush1.msra.mxu0 0.0
  %178 = vmatprep.subr.mxu0 0.0
  %179 = vmatpush1.msra.mxu0 0.0
  %180 = vmatprep.subr.mxu0 0.0
  %181 = vmatpush1.msra.mxu0 0.0
  %182 = vmatprep.subr.mxu0 0.0
  %183 = vmatpush1.msra.mxu0 0.0
  %184 = vmatprep.subr.mxu0 0.0
  %185 = vmatpush1.msra.mxu0 0.0
  %186 = vmatprep.subr.mxu0 0.0
  %187 = vmatpush1.msra.mxu0 0.0
  %188 = vmatprep.mubr.f32.mxu0 0.0
  %189 = vmatmul.mubr.f32.gmra.mrb[0].mxu0 %v122
  %v190 = vpop.f32.mrb[0].mxu0
  %v191 = vadd.f32 0.0, %v190
  %v192 = vpop.f32.mrb[0].mxu0
  %193 = vdwg.mxu0
  %s194 = scalar_lea.vmem %s3, 8
  %v195 = vld [vmem:[%s194] sm:$0xff]
  %196 = vrot.lane.b32.xlu0 %v118, 120
  %v197 = vpop.permute.xlu0 %196
  %v198 = vsel %vm120, %v197, 0
  %200 = vmatprep.subr.mxu0 0.0
  %201 = vmatpush1.msra.mxu0 %v195
  %202 = vmatprep.subr.mxu0 0.0
  %203 = vmatpush1.msra.mxu0 0.0
  %204 = vmatprep.subr.mxu0 0.0
  %205 = vmatpush1.msra.mxu0 0.0
  %206 = vmatprep.subr.mxu0 0.0
  %207 = vmatpush1.msra.mxu0 0.0
  %208 = vmatprep.subr.mxu0 0.0
  %209 = vmatpush1.msra.mxu0 0.0
  %210 = vmatprep.subr.mxu0 0.0
  %211 = vmatpush1.msra.mxu0 0.0
  %212 = vmatprep.subr.mxu0 0.0
  %213 = vmatpush1.msra.mxu0 0.0
  %214 = vmatprep.subr.mxu0 0.0
  %215 = vmatpush1.msra.mxu0 0.0
  %216 = vmatprep.subr.mxu0 0.0
  %217 = vmatpush1.msra.mxu0 0.0
  %218 = vmatprep.subr.mxu0 0.0
  %219 = vmatpush1.msra.mxu0 0.0
  %220 = vmatprep.subr.mxu0 0.0
  %221 = vmatpush1.msra.mxu0 0.0
  %222 = vmatprep.subr.mxu0 0.0
  %223 = vmatpush1.msra.mxu0 0.0
  %224 = vmatprep.subr.mxu0 0.0
  %225 = vmatpush1.msra.mxu0 0.0
  %226 = vmatprep.subr.mxu0 0.0
  %227 = vmatpush1.msra.mxu0 0.0
  %228 = vmatprep.subr.mxu0 0.0
  %229 = vmatpush1.msra.mxu0 0.0
  %230 = vmatprep.subr.mxu0 0.0
  %231 = vmatpush1.msra.mxu0 0.0
  %232 = vmatprep.subr.mxu0 0.0
  %233 = vmatpush1.msra.mxu0 0.0
  %234 = vmatprep.subr.mxu0 0.0
  %235 = vmatpush1.msra.mxu0 0.0
  %236 = vmatprep.subr.mxu0 0.0
  %237 = vmatpush1.msra.mxu0 0.0
  %238 = vmatprep.subr.mxu0 0.0
  %239 = vmatpush1.msra.mxu0 0.0
  %240 = vmatprep.subr.mxu0 0.0
  %241 = vmatpush1.msra.mxu0 0.0
  %242 = vmatprep.subr.mxu0 0.0
  %243 = vmatpush1.msra.mxu0 0.0
  %244 = vmatprep.subr.mxu0 0.0
  %245 = vmatpush1.msra.mxu0 0.0
  %246 = vmatprep.subr.mxu0 0.0
  %247 = vmatpush1.msra.mxu0 0.0
  %248 = vmatprep.subr.mxu0 0.0
  %249 = vmatpush1.msra.mxu0 0.0
  %250 = vmatprep.subr.mxu0 0.0
  %251 = vmatpush1.msra.mxu0 0.0
  %252 = vmatprep.subr.mxu0 0.0
  %253 = vmatpush1.msra.mxu0 0.0
  %254 = vmatprep.subr.mxu0 0.0
  %255 = vmatpush1.msra.mxu0 0.0
  %256 = vmatprep.subr.mxu0 0.0
  %257 = vmatpush1.msra.mxu0 0.0
  %258 = vmatprep.subr.mxu0 0.0
  %259 = vmatpush1.msra.mxu0 0.0
  %260 = vmatprep.subr.mxu0 0.0
  %261 = vmatpush1.msra.mxu0 0.0
  %262 = vmatprep.subr.mxu0 0.0
  %263 = vmatpush1.msra.mxu0 0.0
  %264 = vmatprep.mubr.f32.mxu0 0.0
  %265 = vmatmul.mubr.f32.gmra.mrb[0].mxu0 %v198
  %v266 = vpop.f32.mrb[0].mxu0
  %v267 = vadd.f32 0.0, %v266
  %v268 = vpop.f32.mrb[0].mxu0
  %269 = vdwg.mxu0
  %s270 = scalar_lea.vmem %s3, 16
  %v271 = vld [vmem:[%s270] sm:$0xff]
  %272 = vrot.lane.b32.xlu0 %v118, 112
  %v273 = vpop.permute.xlu0 %272
  %v274 = vsel %vm120, %v273, 0
  %276 = vmatprep.subr.mxu0 0.0
  %277 = vmatpush1.msra.mxu0 %v271
  %278 = vmatprep.subr.mxu0 0.0
  %279 = vmatpush1.msra.mxu0 0.0
  %280 = vmatprep.subr.mxu0 0.0
  %281 = vmatpush1.msra.mxu0 0.0
  %282 = vmatprep.subr.mxu0 0.0
  %283 = vmatpush1.msra.mxu0 0.0
  %284 = vmatprep.subr.mxu0 0.0
  %285 = vmatpush1.msra.mxu0 0.0
  %286 = vmatprep.subr.mxu0 0.0
  %287 = vmatpush1.msra.mxu0 0.0
  %288 = vmatprep.subr.mxu0 0.0
  %289 = vmatpush1.msra.mxu0 0.0
  %290 = vmatprep.subr.mxu0 0.0
  %291 = vmatpush1.msra.mxu0 0.0
  %292 = vmatprep.subr.mxu0 0.0
  %293 = vmatpush1.msra.mxu0 0.0
  %294 = vmatprep.subr.mxu0 0.0
  %295 = vmatpush1.msra.mxu0 0.0
  %296 = vmatprep.subr.mxu0 0.0
  %297 = vmatpush1.msra.mxu0 0.0
  %298 = vmatprep.subr.mxu0 0.0
  %299 = vmatpush1.msra.mxu0 0.0
  %300 = vmatprep.subr.mxu0 0.0
  %301 = vmatpush1.msra.mxu0 0.0
  %302 = vmatprep.subr.mxu0 0.0
  %303 = vmatpush1.msra.mxu0 0.0
  %304 = vmatprep.subr.mxu0 0.0
  %305 = vmatpush1.msra.mxu0 0.0
  %306 = vmatprep.subr.mxu0 0.0
  %307 = vmatpush1.msra.mxu0 0.0
  %308 = vmatprep.subr.mxu0 0.0
  %309 = vmatpush1.msra.mxu0 0.0
  %310 = vmatprep.subr.mxu0 0.0
  %311 = vmatpush1.msra.mxu0 0.0
  %312 = vmatprep.subr.mxu0 0.0
  %313 = vmatpush1.msra.mxu0 0.0
  %314 = vmatprep.subr.mxu0 0.0
  %315 = vmatpush1.msra.mxu0 0.0
  %316 = vmatprep.subr.mxu0 0.0
  %317 = vmatpush1.msra.mxu0 0.0
  %318 = vmatprep.subr.mxu0 0.0
  %319 = vmatpush1.msra.mxu0 0.0
  %320 = vmatprep.subr.mxu0 0.0
  %321 = vmatpush1.msra.mxu0 0.0
  %322 = vmatprep.subr.mxu0 0.0
  %323 = vmatpush1.msra.mxu0 0.0
  %324 = vmatprep.subr.mxu0 0.0
  %325 = vmatpush1.msra.mxu0 0.0
  %326 = vmatprep.subr.mxu0 0.0
  %327 = vmatpush1.msra.mxu0 0.0
  %328 = vmatprep.subr.mxu0 0.0
  %329 = vmatpush1.msra.mxu0 0.0
  %330 = vmatprep.subr.mxu0 0.0
  %331 = vmatpush1.msra.mxu0 0.0
  %332 = vmatprep.subr.mxu0 0.0
  %333 = vmatpush1.msra.mxu0 0.0
  %334 = vmatprep.subr.mxu0 0.0
  %335 = vmatpush1.msra.mxu0 0.0
  %336 = vmatprep.subr.mxu0 0.0
  %337 = vmatpush1.msra.mxu0 0.0
  %338 = vmatprep.subr.mxu0 0.0
  %339 = vmatpush1.msra.mxu0 0.0
  %340 = vmatprep.mubr.f32.mxu0 0.0
  %341 = vmatmul.mubr.f32.gmra.mrb[0].mxu0 %v274
  %v342 = vpop.f32.mrb[0].mxu0
  %v343 = vadd.f32 0.0, %v342
  %v344 = vpop.f32.mrb[0].mxu0
  %345 = vdwg.mxu0
  %s346 = scalar_lea.vmem %s3, 24
  %v347 = vld [vmem:[%s346] sm:$0xff]
  %348 = vrot.lane.b32.xlu0 %v118, 104
  %v349 = vpop.permute.xlu0 %348
  %v350 = vsel %vm120, %v349, 0
  %352 = vmatprep.subr.mxu0 0.0
  %353 = vmatpush1.msra.mxu0 %v347
  %354 = vmatprep.subr.mxu0 0.0
  %355 = vmatpush1.msra.mxu0 0.0
  %356 = vmatprep.subr.mxu0 0.0
  %357 = vmatpush1.msra.mxu0 0.0
  %358 = vmatprep.subr.mxu0 0.0
  %359 = vmatpush1.msra.mxu0 0.0
  %360 = vmatprep.subr.mxu0 0.0
  %361 = vmatpush1.msra.mxu0 0.0
  %362 = vmatprep.subr.mxu0 0.0
  %363 = vmatpush1.msra.mxu0 0.0
  %364 = vmatprep.subr.mxu0 0.0
  %365 = vmatpush1.msra.mxu0 0.0
  %366 = vmatprep.subr.mxu0 0.0
  %367 = vmatpush1.msra.mxu0 0.0
  %368 = vmatprep.subr.mxu0 0.0
  %369 = vmatpush1.msra.mxu0 0.0
  %370 = vmatprep.subr.mxu0 0.0
  %371 = vmatpush1.msra.mxu0 0.0
  %372 = vmatprep.subr.mxu0 0.0
  %373 = vmatpush1.msra.mxu0 0.0
  %374 = vmatprep.subr.mxu0 0.0
  %375 = vmatpush1.msra.mxu0 0.0
  %376 = vmatprep.subr.mxu0 0.0
  %377 = vmatpush1.msra.mxu0 0.0
  %378 = vmatprep.subr.mxu0 0.0
  %379 = vmatpush1.msra.mxu0 0.0
  %380 = vmatprep.subr.mxu0 0.0
  %381 = vmatpush1.msra.mxu0 0.0
  %382 = vmatprep.subr.mxu0 0.0
  %383 = vmatpush1.msra.mxu0 0.0
  %384 = vmatprep.subr.mxu0 0.0
  %385 = vmatpush1.msra.mxu0 0.0
  %386 = vmatprep.subr.mxu0 0.0
  %387 = vmatpush1.msra.mxu0 0.0
  %388 = vmatprep.subr.mxu0 0.0
  %389 = vmatpush1.msra.mxu0 0.0
  %390 = vmatprep.subr.mxu0 0.0
  %391 = vmatpush1.msra.mxu0 0.0
  %392 = vmatprep.subr.mxu0 0.0
  %393 = vmatpush1.msra.mxu0 0.0
  %394 = vmatprep.subr.mxu0 0.0
  %395 = vmatpush1.msra.mxu0 0.0
  %396 = vmatprep.subr.mxu0 0.0
  %397 = vmatpush1.msra.mxu0 0.0
  %398 = vmatprep.subr.mxu0 0.0
  %399 = vmatpush1.msra.mxu0 0.0
  %400 = vmatprep.subr.mxu0 0.0
  %401 = vmatpush1.msra.mxu0 0.0
  %402 = vmatprep.subr.mxu0 0.0
  %403 = vmatpush1.msra.mxu0 0.0
  %404 = vmatprep.subr.mxu0 0.0
  %405 = vmatpush1.msra.mxu0 0.0
  %406 = vmatprep.subr.mxu0 0.0
  %407 = vmatpush1.msra.mxu0 0.0
  %408 = vmatprep.subr.mxu0 0.0
  %409 = vmatpush1.msra.mxu0 0.0
  %410 = vmatprep.subr.mxu0 0.0
  %411 = vmatpush1.msra.mxu0 0.0
  %412 = vmatprep.subr.mxu0 0.0
  %413 = vmatpush1.msra.mxu0 0.0
  %414 = vmatprep.subr.mxu0 0.0
  %415 = vmatpush1.msra.mxu0 0.0
  %416 = vmatprep.mubr.f32.mxu0 0.0
  %417 = vmatmul.mubr.f32.gmra.mrb[0].mxu0 %v350
  %v418 = vpop.f32.mrb[0].mxu0
  %v419 = vadd.f32 0.0, %v418
  %v420 = vpop.f32.mrb[0].mxu0
  %421 = vdwg.mxu0
  %423 = vrot.lane.b32.xlu0 %v267, 8
  %v424 = vpop.permute.xlu0 %423
  %427 = vrot.lane.b32.xlu0 %v343, 16
  %v428 = vpop.permute.xlu0 %427
  %431 = vrot.lane.b32.xlu0 %v419, 24
  %v432 = vpop.permute.xlu0 %431
  %v434 = vsel %vm120, %v191, %v424
  %v435 = vsel %vm44, %v434, %v428
  %vm436 = vcmask 195584
  %v437 = vsel %vm436, %v435, %v432
  %v438 = vld [vmem:[%s4] sm:$0x1]
  %v440 = vlaneseq
  %v441 = vshrl.u32 %v440, 7
  %v442 = vsub.s32 0, %v441
  %v443 = vrot.slane %v438, %v442
  %v445 = vadd.f32 %v437, %v443
  %vm446 = vcmask 254976
  %447 = vst.msk [vmem:[%s9] sm:$0x3] %vm446, %v445
  %v448 = vld [vmem:[%s5] sm:$0xff]
  %v449 = vld [vmem:[%s5 + $0x8] sm:$0xff]
  %v450 = vld [vmem:[%s6] sm:$0x1]
  %v452 = vlaneseq
  %v453 = vshrl.u32 %v452, 7
  %v454 = vsub.s32 0, %v453
  %v455 = vrot.slane %v450, %v454
  %457 = vmatprep.subr.mxu0 0.0
  %458 = vmatpush1.msra.mxu0 %v448
  %459 = vmatprep.subr.mxu0 0.0
  %460 = vmatpush1.msra.mxu0 %v449
  %461 = vmatprep.subr.mxu0 0.0
  %462 = vmatpush1.msra.mxu0 0.0
  %463 = vmatprep.subr.mxu0 0.0
  %464 = vmatpush1.msra.mxu0 0.0
  %465 = vmatprep.subr.mxu0 0.0
  %466 = vmatpush1.msra.mxu0 0.0
  %467 = vmatprep.subr.mxu0 0.0
  %468 = vmatpush1.msra.mxu0 0.0
  %469 = vmatprep.subr.mxu0 0.0
  %470 = vmatpush1.msra.mxu0 0.0
  %471 = vmatprep.subr.mxu0 0.0
  %472 = vmatpush1.msra.mxu0 0.0
  %473 = vmatprep.subr.mxu0 0.0
  %474 = vmatpush1.msra.mxu0 0.0
  %475 = vmatprep.subr.mxu0 0.0
  %476 = vmatpush1.msra.mxu0 0.0
  %477 = vmatprep.subr.mxu0 0.0
  %478 = vmatpush1.msra.mxu0 0.0
  %479 = vmatprep.subr.mxu0 0.0
  %480 = vmatpush1.msra.mxu0 0.0
  %481 = vmatprep.subr.mxu0 0.0
  %482 = vmatpush1.msra.mxu0 0.0
  %483 = vmatprep.subr.mxu0 0.0
  %484 = vmatpush1.msra.mxu0 0.0
  %485 = vmatprep.subr.mxu0 0.0
  %486 = vmatpush1.msra.mxu0 0.0
  %487 = vmatprep.subr.mxu0 0.0
  %488 = vmatpush1.msra.mxu0 0.0
  %489 = vmatprep.subr.mxu0 0.0
  %490 = vmatpush1.msra.mxu0 0.0
  %491 = vmatprep.subr.mxu0 0.0
  %492 = vmatpush1.msra.mxu0 0.0
  %493 = vmatprep.subr.mxu0 0.0
  %494 = vmatpush1.msra.mxu0 0.0
  %495 = vmatprep.subr.mxu0 0.0
  %496 = vmatpush1.msra.mxu0 0.0
  %497 = vmatprep.subr.mxu0 0.0
  %498 = vmatpush1.msra.mxu0 0.0
  %499 = vmatprep.subr.mxu0 0.0
  %500 = vmatpush1.msra.mxu0 0.0
  %501 = vmatprep.subr.mxu0 0.0
  %502 = vmatpush1.msra.mxu0 0.0
  %503 = vmatprep.subr.mxu0 0.0
  %504 = vmatpush1.msra.mxu0 0.0
  %505 = vmatprep.subr.mxu0 0.0
  %506 = vmatpush1.msra.mxu0 0.0
  %507 = vmatprep.subr.mxu0 0.0
  %508 = vmatpush1.msra.mxu0 0.0
  %509 = vmatprep.subr.mxu0 0.0
  %510 = vmatpush1.msra.mxu0 0.0
  %511 = vmatprep.subr.mxu0 0.0
  %512 = vmatpush1.msra.mxu0 0.0
  %513 = vmatprep.subr.mxu0 0.0
  %514 = vmatpush1.msra.mxu0 0.0
  %515 = vmatprep.subr.mxu0 0.0
  %516 = vmatpush1.msra.mxu0 0.0
  %517 = vmatprep.subr.mxu0 0.0
  %518 = vmatpush1.msra.mxu0 0.0
  %519 = vmatprep.subr.mxu0 0.0
  %520 = vmatpush1.msra.mxu0 0.0
  %521 = vmatprep.mubr.f32.mxu0 0.0
  %522 = vmatmul.mubr.f32.gmra.mrb[0].mxu0 %v46
  %v523 = vpop.f32.mrb[0].mxu0
  %v524 = vadd.f32 %v455, %v523
  %v525 = vpop.f32.mrb[0].mxu0
  %526 = vdwg.mxu0
  %v527 = vmax.f32 %v524, 0.0
  %v528 = vld [vmem:[%s7] sm:$0xff]
  %v529 = vld [vmem:[%s7 + $0x8] sm:$0xff]
  %v530 = vld [vmem:[%s7 + $0x10] sm:$0xff]
  %v531 = vld [vmem:[%s7 + $0x18] sm:$0xff]
  %vm532 = vcmask 261120
  %v534 = vsel %vm532, %v527, 0
  %536 = vmatprep.subr.mxu0 0.0
  %537 = vmatpush1.msra.mxu0 %v528
  %538 = vmatprep.subr.mxu0 0.0
  %539 = vmatpush1.msra.mxu0 %v529
  %540 = vmatprep.subr.mxu0 0.0
  %541 = vmatpush1.msra.mxu0 %v530
  %542 = vmatprep.subr.mxu0 0.0
  %543 = vmatpush1.msra.mxu0 %v531
  %544 = vmatprep.subr.mxu0 0.0
  %545 = vmatpush1.msra.mxu0 0.0
  %546 = vmatprep.subr.mxu0 0.0
  %547 = vmatpush1.msra.mxu0 0.0
  %548 = vmatprep.subr.mxu0 0.0
  %549 = vmatpush1.msra.mxu0 0.0
  %550 = vmatprep.subr.mxu0 0.0
  %551 = vmatpush1.msra.mxu0 0.0
  %552 = vmatprep.subr.mxu0 0.0
  %553 = vmatpush1.msra.mxu0 0.0
  %554 = vmatprep.subr.mxu0 0.0
  %555 = vmatpush1.msra.mxu0 0.0
  %556 = vmatprep.subr.mxu0 0.0
  %557 = vmatpush1.msra.mxu0 0.0
  %558 = vmatprep.subr.mxu0 0.0
  %559 = vmatpush1.msra.mxu0 0.0
  %560 = vmatprep.subr.mxu0 0.0
  %561 = vmatpush1.msra.mxu0 0.0
  %562 = vmatprep.subr.mxu0 0.0
  %563 = vmatpush1.msra.mxu0 0.0
  %564 = vmatprep.subr.mxu0 0.0
  %565 = vmatpush1.msra.mxu0 0.0
  %566 = vmatprep.subr.mxu0 0.0
  %567 = vmatpush1.msra.mxu0 0.0
  %568 = vmatprep.subr.mxu0 0.0
  %569 = vmatpush1.msra.mxu0 0.0
  %570 = vmatprep.subr.mxu0 0.0
  %571 = vmatpush1.msra.mxu0 0.0
  %572 = vmatprep.subr.mxu0 0.0
  %573 = vmatpush1.msra.mxu0 0.0
  %574 = vmatprep.subr.mxu0 0.0
  %575 = vmatpush1.msra.mxu0 0.0
  %576 = vmatprep.subr.mxu0 0.0
  %577 = vmatpush1.msra.mxu0 0.0
  %578 = vmatprep.subr.mxu0 0.0
  %579 = vmatpush1.msra.mxu0 0.0
  %580 = vmatprep.subr.mxu0 0.0
  %581 = vmatpush1.msra.mxu0 0.0
  %582 = vmatprep.subr.mxu0 0.0
  %583 = vmatpush1.msra.mxu0 0.0
  %584 = vmatprep.subr.mxu0 0.0
  %585 = vmatpush1.msra.mxu0 0.0
  %586 = vmatprep.subr.mxu0 0.0
  %587 = vmatpush1.msra.mxu0 0.0
  %588 = vmatprep.subr.mxu0 0.0
  %589 = vmatpush1.msra.mxu0 0.0
  %590 = vmatprep.subr.mxu0 0.0
  %591 = vmatpush1.msra.mxu0 0.0
  %592 = vmatprep.subr.mxu0 0.0
  %593 = vmatpush1.msra.mxu0 0.0
  %594 = vmatprep.subr.mxu0 0.0
  %595 = vmatpush1.msra.mxu0 0.0
  %596 = vmatprep.subr.mxu0 0.0
  %597 = vmatpush1.msra.mxu0 0.0
  %598 = vmatprep.subr.mxu0 0.0
  %599 = vmatpush1.msra.mxu0 0.0
  %600 = vmatprep.mubr.f32.mxu0 0.0
  %601 = vmatmul.mubr.f32.gmra.mrb[0].mxu0 %v534
  %v602 = vpop.f32.mrb[0].mxu0
  %v603 = vadd.f32 0.0, %v602
  %v604 = vpop.f32.mrb[0].mxu0
  %605 = vdwg.mxu0
  %s606 = scalar_lea.vmem %s7, 32
  %v607 = vld [vmem:[%s606] sm:$0xff]
  %v608 = vld [vmem:[%s606 + $0x8] sm:$0xff]
  %v609 = vld [vmem:[%s606 + $0x10] sm:$0xff]
  %v610 = vld [vmem:[%s606 + $0x18] sm:$0xff]
  %611 = vrot.lane.b32.xlu0 %v527, 96
  %v612 = vpop.permute.xlu0 %611
  %v613 = vsel %vm532, %v612, 0
  %615 = vmatprep.subr.mxu0 0.0
  %616 = vmatpush1.msra.mxu0 %v607
  %617 = vmatprep.subr.mxu0 0.0
  %618 = vmatpush1.msra.mxu0 %v608
  %619 = vmatprep.subr.mxu0 0.0
  %620 = vmatpush1.msra.mxu0 %v609
  %621 = vmatprep.subr.mxu0 0.0
  %622 = vmatpush1.msra.mxu0 %v610
  %623 = vmatprep.subr.mxu0 0.0
  %624 = vmatpush1.msra.mxu0 0.0
  %625 = vmatprep.subr.mxu0 0.0
  %626 = vmatpush1.msra.mxu0 0.0
  %627 = vmatprep.subr.mxu0 0.0
  %628 = vmatpush1.msra.mxu0 0.0
  %629 = vmatprep.subr.mxu0 0.0
  %630 = vmatpush1.msra.mxu0 0.0
  %631 = vmatprep.subr.mxu0 0.0
  %632 = vmatpush1.msra.mxu0 0.0
  %633 = vmatprep.subr.mxu0 0.0
  %634 = vmatpush1.msra.mxu0 0.0
  %635 = vmatprep.subr.mxu0 0.0
  %636 = vmatpush1.msra.mxu0 0.0
  %637 = vmatprep.subr.mxu0 0.0
  %638 = vmatpush1.msra.mxu0 0.0
  %639 = vmatprep.subr.mxu0 0.0
  %640 = vmatpush1.msra.mxu0 0.0
  %641 = vmatprep.subr.mxu0 0.0
  %642 = vmatpush1.msra.mxu0 0.0
  %643 = vmatprep.subr.mxu0 0.0
  %644 = vmatpush1.msra.mxu0 0.0
  %645 = vmatprep.subr.mxu0 0.0
  %646 = vmatpush1.msra.mxu0 0.0
  %647 = vmatprep.subr.mxu0 0.0
  %648 = vmatpush1.msra.mxu0 0.0
  %649 = vmatprep.subr.mxu0 0.0
  %650 = vmatpush1.msra.mxu0 0.0
  %651 = vmatprep.subr.mxu0 0.0
  %652 = vmatpush1.msra.mxu0 0.0
  %653 = vmatprep.subr.mxu0 0.0
  %654 = vmatpush1.msra.mxu0 0.0
  %655 = vmatprep.subr.mxu0 0.0
  %656 = vmatpush1.msra.mxu0 0.0
  %657 = vmatprep.subr.mxu0 0.0
  %658 = vmatpush1.msra.mxu0 0.0
  %659 = vmatprep.subr.mxu0 0.0
  %660 = vmatpush1.msra.mxu0 0.0
  %661 = vmatprep.subr.mxu0 0.0
  %662 = vmatpush1.msra.mxu0 0.0
  %663 = vmatprep.subr.mxu0 0.0
  %664 = vmatpush1.msra.mxu0 0.0
  %665 = vmatprep.subr.mxu0 0.0
  %666 = vmatpush1.msra.mxu0 0.0
  %667 = vmatprep.subr.mxu0 0.0
  %668 = vmatpush1.msra.mxu0 0.0
  %669 = vmatprep.subr.mxu0 0.0
  %670 = vmatpush1.msra.mxu0 0.0
  %671 = vmatprep.subr.mxu0 0.0
  %672 = vmatpush1.msra.mxu0 0.0
  %673 = vmatprep.subr.mxu0 0.0
  %674 = vmatpush1.msra.mxu0 0.0
  %675 = vmatprep.subr.mxu0 0.0
  %676 = vmatpush1.msra.mxu0 0.0
  %677 = vmatprep.subr.mxu0 0.0
  %678 = vmatpush1.msra.mxu0 0.0
  %679 = vmatprep.mubr.f32.mxu0 0.0
  %680 = vmatmul.mubr.f32.gmra.mrb[0].mxu0 %v613
  %v681 = vpop.f32.mrb[0].mxu0
  %v682 = vadd.f32 0.0, %v681
  %v683 = vpop.f32.mrb[0].mxu0
  %684 = vdwg.mxu0
  %s685 = scalar_lea.vmem %s7, 64
  %v686 = vld [vmem:[%s685] sm:$0xff]
  %v687 = vld [vmem:[%s685 + $0x8] sm:$0xff]
  %v688 = vld [vmem:[%s685 + $0x10] sm:$0xff]
  %v689 = vld [vmem:[%s685 + $0x18] sm:$0xff]
  %690 = vrot.lane.b32.xlu0 %v527, 64
  %v691 = vpop.permute.xlu0 %690
  %v692 = vsel %vm532, %v691, 0
  %694 = vmatprep.subr.mxu0 0.0
  %695 = vmatpush1.msra.mxu0 %v686
  %696 = vmatprep.subr.mxu0 0.0
  %697 = vmatpush1.msra.mxu0 %v687
  %698 = vmatprep.subr.mxu0 0.0
  %699 = vmatpush1.msra.mxu0 %v688
  %700 = vmatprep.subr.mxu0 0.0
  %701 = vmatpush1.msra.mxu0 %v689
  %702 = vmatprep.subr.mxu0 0.0
  %703 = vmatpush1.msra.mxu0 0.0
  %704 = vmatprep.subr.mxu0 0.0
  %705 = vmatpush1.msra.mxu0 0.0
  %706 = vmatprep.subr.mxu0 0.0
  %707 = vmatpush1.msra.mxu0 0.0
  %708 = vmatprep.subr.mxu0 0.0
  %709 = vmatpush1.msra.mxu0 0.0
  %710 = vmatprep.subr.mxu0 0.0
  %711 = vmatpush1.msra.mxu0 0.0
  %712 = vmatprep.subr.mxu0 0.0
  %713 = vmatpush1.msra.mxu0 0.0
  %714 = vmatprep.subr.mxu0 0.0
  %715 = vmatpush1.msra.mxu0 0.0
  %716 = vmatprep.subr.mxu0 0.0
  %717 = vmatpush1.msra.mxu0 0.0
  %718 = vmatprep.subr.mxu0 0.0
  %719 = vmatpush1.msra.mxu0 0.0
  %720 = vmatprep.subr.mxu0 0.0
  %721 = vmatpush1.msra.mxu0 0.0
  %722 = vmatprep.subr.mxu0 0.0
  %723 = vmatpush1.msra.mxu0 0.0
  %724 = vmatprep.subr.mxu0 0.0
  %725 = vmatpush1.msra.mxu0 0.0
  %726 = vmatprep.subr.mxu0 0.0
  %727 = vmatpush1.msra.mxu0 0.0
  %728 = vmatprep.subr.mxu0 0.0
  %729 = vmatpush1.msra.mxu0 0.0
  %730 = vmatprep.subr.mxu0 0.0
  %731 = vmatpush1.msra.mxu0 0.0
  %732 = vmatprep.subr.mxu0 0.0
  %733 = vmatpush1.msra.mxu0 0.0
  %734 = vmatprep.subr.mxu0 0.0
  %735 = vmatpush1.msra.mxu0 0.0
  %736 = vmatprep.subr.mxu0 0.0
  %737 = vmatpush1.msra.mxu0 0.0
  %738 = vmatprep.subr.mxu0 0.0
  %739 = vmatpush1.msra.mxu0 0.0
  %740 = vmatprep.subr.mxu0 0.0
  %741 = vmatpush1.msra.mxu0 0.0
  %742 = vmatprep.subr.mxu0 0.0
  %743 = vmatpush1.msra.mxu0 0.0
  %744 = vmatprep.subr.mxu0 0.0
  %745 = vmatpush1.msra.mxu0 0.0
  %746 = vmatprep.subr.mxu0 0.0
  %747 = vmatpush1.msra.mxu0 0.0
  %748 = vmatprep.subr.mxu0 0.0
  %749 = vmatpush1.msra.mxu0 0.0
  %750 = vmatprep.subr.mxu0 0.0
  %751 = vmatpush1.msra.mxu0 0.0
  %752 = vmatprep.subr.mxu0 0.0
  %753 = vmatpush1.msra.mxu0 0.0
  %754 = vmatprep.subr.mxu0 0.0
  %755 = vmatpush1.msra.mxu0 0.0
  %756 = vmatprep.subr.mxu0 0.0
  %757 = vmatpush1.msra.mxu0 0.0
  %758 = vmatprep.mubr.f32.mxu0 0.0
  %759 = vmatmul.mubr.f32.gmra.mrb[0].mxu0 %v692
  %v760 = vpop.f32.mrb[0].mxu0
  %v761 = vadd.f32 0.0, %v760
  %v762 = vpop.f32.mrb[0].mxu0
  %763 = vdwg.mxu0
  %s764 = scalar_lea.vmem %s7, 96
  %v765 = vld [vmem:[%s764] sm:$0xff]
  %v766 = vld [vmem:[%s764 + $0x8] sm:$0xff]
  %v767 = vld [vmem:[%s764 + $0x10] sm:$0xff]
  %v768 = vld [vmem:[%s764 + $0x18] sm:$0xff]
  %769 = vrot.lane.b32.xlu0 %v527, 32
  %v770 = vpop.permute.xlu0 %769
  %v771 = vsel %vm532, %v770, 0
  %773 = vmatprep.subr.mxu0 0.0
  %774 = vmatpush1.msra.mxu0 %v765
  %775 = vmatprep.subr.mxu0 0.0
  %776 = vmatpush1.msra.mxu0 %v766
  %777 = vmatprep.subr.mxu0 0.0
  %778 = vmatpush1.msra.mxu0 %v767
  %779 = vmatprep.subr.mxu0 0.0
  %780 = vmatpush1.msra.mxu0 %v768
  %781 = vmatprep.subr.mxu0 0.0
  %782 = vmatpush1.msra.mxu0 0.0
  %783 = vmatprep.subr.mxu0 0.0
  %784 = vmatpush1.msra.mxu0 0.0
  %785 = vmatprep.subr.mxu0 0.0
  %786 = vmatpush1.msra.mxu0 0.0
  %787 = vmatprep.subr.mxu0 0.0
  %788 = vmatpush1.msra.mxu0 0.0
  %789 = vmatprep.subr.mxu0 0.0
  %790 = vmatpush1.msra.mxu0 0.0
  %791 = vmatprep.subr.mxu0 0.0
  %792 = vmatpush1.msra.mxu0 0.0
  %793 = vmatprep.subr.mxu0 0.0
  %794 = vmatpush1.msra.mxu0 0.0
  %795 = vmatprep.subr.mxu0 0.0
  %796 = vmatpush1.msra.mxu0 0.0
  %797 = vmatprep.subr.mxu0 0.0
  %798 = vmatpush1.msra.mxu0 0.0
  %799 = vmatprep.subr.mxu0 0.0
  %800 = vmatpush1.msra.mxu0 0.0
  %801 = vmatprep.subr.mxu0 0.0
  %802 = vmatpush1.msra.mxu0 0.0
  %803 = vmatprep.subr.mxu0 0.0
  %804 = vmatpush1.msra.mxu0 0.0
  %805 = vmatprep.subr.mxu0 0.0
  %806 = vmatpush1.msra.mxu0 0.0
  %807 = vmatprep.subr.mxu0 0.0
  %808 = vmatpush1.msra.mxu0 0.0
  %809 = vmatprep.subr.mxu0 0.0
  %810 = vmatpush1.msra.mxu0 0.0
  %811 = vmatprep.subr.mxu0 0.0
  %812 = vmatpush1.msra.mxu0 0.0
  %813 = vmatprep.subr.mxu0 0.0
  %814 = vmatpush1.msra.mxu0 0.0
  %815 = vmatprep.subr.mxu0 0.0
  %816 = vmatpush1.msra.mxu0 0.0
  %817 = vmatprep.subr.mxu0 0.0
  %818 = vmatpush1.msra.mxu0 0.0
  %819 = vmatprep.subr.mxu0 0.0
  %820 = vmatpush1.msra.mxu0 0.0
  %821 = vmatprep.subr.mxu0 0.0
  %822 = vmatpush1.msra.mxu0 0.0
  %823 = vmatprep.subr.mxu0 0.0
  %824 = vmatpush1.msra.mxu0 0.0
  %825 = vmatprep.subr.mxu0 0.0
  %826 = vmatpush1.msra.mxu0 0.0
  %827 = vmatprep.subr.mxu0 0.0
  %828 = vmatpush1.msra.mxu0 0.0
  %829 = vmatprep.subr.mxu0 0.0
  %830 = vmatpush1.msra.mxu0 0.0
  %831 = vmatprep.subr.mxu0 0.0
  %832 = vmatpush1.msra.mxu0 0.0
  %833 = vmatprep.subr.mxu0 0.0
  %834 = vmatpush1.msra.mxu0 0.0
  %835 = vmatprep.subr.mxu0 0.0
  %836 = vmatpush1.msra.mxu0 0.0
  %837 = vmatprep.mubr.f32.mxu0 0.0
  %838 = vmatmul.mubr.f32.gmra.mrb[0].mxu0 %v771
  %v839 = vpop.f32.mrb[0].mxu0
  %v840 = vadd.f32 0.0, %v839
  %v841 = vpop.f32.mrb[0].mxu0
  %842 = vdwg.mxu0
  %844 = vrot.lane.b32.xlu0 %v682, 32
  %v845 = vpop.permute.xlu0 %844
  %848 = vrot.lane.b32.xlu0 %v761, 64
  %v849 = vpop.permute.xlu0 %848
  %852 = vrot.lane.b32.xlu0 %v840, 96
  %v853 = vpop.permute.xlu0 %852
  %v855 = vsel %vm532, %v603, %v845
  %vm856 = vcmask 523264
  %v857 = vsel %vm856, %v855, %v849
  %vm858 = vcmask 785408
  %v859 = vsel %vm858, %v857, %v853
  %v860 = vld [vmem:[%s8] sm:$0x1]
  %v862 = vlaneseq
  %v863 = vshrl.u32 %v862, 7
  %v864 = vsub.s32 0, %v863
  %v865 = vrot.slane %v860, %v864
  %v867 = vadd.f32 %v859, %v865
  %868 = vst [vmem:[%s10] sm:$0x3] %v867
  // Predicated region
  $region38: #{m_block_forward.4} parent=0 // pred_check
    _
  $region39: #{m_block_forward.4} parent=0 // pred_check_branch
    %870 = sbr.rel (0) target = $region41
  $region40: #{m_block_forward.4} parent=0 // pred_region
    _
  $region41: #{m_block_forward.4} parent=0 // pred_fallthru
    _
  // Predicated region
  $region42: #{m_block_forward.4} parent=0 // pred_check
    _
  $region43: #{m_block_forward.4} parent=0 // pred_check_branch
    %872 = sbr.rel (0) target = $region45
  $region44: #{m_block_forward.4} parent=0 // pred_region
    _
  $region45: #{m_block_forward.4} parent=0 // pred_fallthru
    _
  // Predicated region
  $region46: #{m_block_forward.4} parent=0 // pred_check
    _
  $region47: #{m_block_forward.4} parent=0 // pred_check_branch
    %874 = sbr.rel (0) target = $region49
  $region48: #{m_block_forward.4} parent=0 // pred_region
    _
  $region49: #{m_block_forward.4} parent=0 // pred_fallthru
    _
  // Predicated region
  $region50: #{m_block_forward.4} parent=0 // pred_check
    _
  $region51: #{m_block_forward.4} parent=0 // pred_check_branch
    %876 = sbr.rel (0) target = $region53
  $region52: #{m_block_forward.4} parent=0 // pred_region
    _
  $region53: #{m_block_forward.4} parent=0 // pred_fallthru
    _

// kernel: m_block_forward.6
$region0: #{m_block_forward.6}
  #allocation0 [shape = 'u32[]', space=smem, size = 0x4, offset = 0x4, fixed_abs, tag = 'smem constant byte address 0x4 - core index']
  #allocation1 [shape = 'u32[144,128]{1,0:T(1,128)}', space=vmem, size = 0x12000, scoped, tag = 'internal scratch']
  %s0 = inlined_call_operand.vmem [shape: bf16[2,8,640], index: 0, kind: input, shape index: {}]
  %s1 = inlined_call_operand.vmem [shape: bf16[32,72], index: 1, kind: input, shape index: {}]
  %s2 = inlined_call_operand.vmem [shape: f32[1,1,384], index: 2, kind: input, shape index: {}]
  %s3 = inlined_call_operand.vmem [shape: f32[2,32,384], index: 3, kind: output, shape index: {0}]
  %s4 = inlined_call_operand.vmem [shape: f32[2,32,2], index: 4, kind: output, shape index: {1}]
  %5 = xla_tuple %s3, %s4
  %s6 = sld [smem:[#allocation0]]
  $region53: #{m_block_forward.6} parent=0
    _
  %s8 = ssub.s32 1, %s6
  %s9 = scalar_select 0, %s8, %s6
  loop: start=0, step=1, limit=4
  $region2: #{m_block_forward.6} parent=0 // loop_pre_header
    _
  $region3: #{m_block_forward.6} parent=0 // loop_header
    %s11 = sphi 0, %s15
    %p12 = scmp.ge.s32.totalorder %s11, 4
    %s21 = sphi 0, %s23
    %s24 = sphi 0, %s21
    %s25 = sphi 0, %s24
    %s41 = sphi 0, %s25
    %s45 = sphi 0, %s45
    %s47 = sphi 0, %s45
    %s48 = sphi 0, %s47
    %s62 = sphi 0, %s48
    %s66 = sphi 0, %s66
    %s68 = sphi 0, %s66
    %s69 = sphi 0, %s68
    %s83 = sphi 0, %s69
    %s89 = sphi 0, %s91
    %s92 = sphi 0, %s89
    %s93 = sphi 0, %s92
    %s109 = sphi 0, %s93
    %s115 = sphi 0, %s117
    %s118 = sphi 0, %s115
    %s119 = sphi 0, %s118
    %s135 = sphi 0, %s119
  $region4: #{m_block_forward.6} parent=0 // loop_header_branch
    %14 = sbr.rel (%p12) target = $region8
  $region5: #{m_block_forward.6} parent=0 // loop_body
    %s16 = ssub.s32 %s11, 1
    %s17 = ssub.s32 %s11, 2
    %s18 = sadd.s32 %s11, 1
    %s19 = ssub.s32 %s11, %s18
    %p20 = scmp.eq.s32.totalorder %s19, 0
    %s22 = sadd.s32 %s21, 1
    %s23 = scalar_select %p20, %s21, %s22
    %p26 = pneg %p20
    %p27 = scmp.eq.s32.totalorder %s11, 1
    %p28 = por %p26, %p27
    %p29 = scmp.ne.s32.totalorder %s21, %s24
    %p30 = scmp.eq.s32.totalorder %s11, 0
    %p31 = por %p29, %p30
    %p32 = scmp.ne.s32.totalorder %s21, %s24
    %p33 = scmp.eq.s32.totalorder %s16, 1
    %p34 = por %p32, %p33
    %p35 = scmp.ne.s32.totalorder %s24, %s25
    %p36 = scmp.eq.s32.totalorder %s16, 0
    %p37 = por %p35, %p36
    %p38 = scmp.ne.s32.totalorder %s24, %s25
    %p39 = scmp.eq.s32.totalorder %s17, 1
    %p40 = por %p38, %p39
    %p42 = scmp.ne.s32.totalorder %s25, %s41
    %p43 = scmp.eq.s32.totalorder %s17, 0
    %p44 = por %p42, %p43
    %s46 = sadd.s32 %s45, 1
    %p49 = scmp.eq.s32.totalorder %s11, 1
    %p50 = scmp.ne.s32.totalorder %s45, %s47
    %p51 = scmp.eq.s32.totalorder %s11, 0
    %p52 = por %p50, %p51
    %p53 = scmp.ne.s32.totalorder %s45, %s47
    %p54 = scmp.eq.s32.totalorder %s16, 1
    %p55 = por %p53, %p54
    %p56 = scmp.ne.s32.totalorder %s47, %s48
    %p57 = scmp.eq.s32.totalorder %s16, 0
    %p58 = por %p56, %p57
    %p59 = scmp.ne.s32.totalorder %s47, %s48
    %p60 = scmp.eq.s32.totalorder %s17, 1
    %p61 = por %p59, %p60
    %p63 = scmp.ne.s32.totalorder %s48, %s62
    %p64 = scmp.eq.s32.totalorder %s17, 0
    %p65 = por %p63, %p64
    %s67 = sadd.s32 %s66, 1
    %p70 = scmp.eq.s32.totalorder %s11, 1
    %p71 = scmp.ne.s32.totalorder %s66, %s68
    %p72 = scmp.eq.s32.totalorder %s11, 0
    %p73 = por %p71, %p72
    %p74 = scmp.ne.s32.totalorder %s66, %s68
    %p75 = scmp.eq.s32.totalorder %s16, 1
    %p76 = por %p74, %p75
    %p77 = scmp.ne.s32.totalorder %s68, %s69
    %p78 = scmp.eq.s32.totalorder %s16, 0
    %p79 = por %p77, %p78
    %p80 = scmp.ne.s32.totalorder %s68, %s69
    %p81 = scmp.eq.s32.totalorder %s17, 1
    %p82 = por %p80, %p81
    %p84 = scmp.ne.s32.totalorder %s69, %s83
    %p85 = scmp.eq.s32.totalorder %s17, 0
    %p86 = por %p84, %p85
    %s87 = ssub.s32 %s11, %s18
    %p88 = scmp.eq.s32.totalorder %s87, 0
    %s90 = sadd.s32 %s89, 1
    %s91 = scalar_select %p88, %s89, %s90
    %p94 = pneg %p88
    %p95 = scmp.eq.s32.totalorder %s11, 1
    %p96 = por %p94, %p95
    %p97 = scmp.ne.s32.totalorder %s89, %s92
    %p98 = scmp.eq.s32.totalorder %s11, 0
    %p99 = por %p97, %p98
    %p100 = scmp.ne.s32.totalorder %s89, %s92
    %p101 = scmp.eq.s32.totalorder %s16, 1
    %p102 = por %p100, %p101
    %p103 = scmp.ne.s32.totalorder %s92, %s93
    %p104 = scmp.eq.s32.totalorder %s16, 0
    %p105 = por %p103, %p104
    %p106 = scmp.ne.s32.totalorder %s92, %s93
    %p107 = scmp.eq.s32.totalorder %s17, 1
    %p108 = por %p106, %p107
    %p110 = scmp.ne.s32.totalorder %s93, %s109
    %p111 = scmp.eq.s32.totalorder %s17, 0
    %p112 = por %p110, %p111
    %s113 = ssub.s32 %s11, %s18
    %p114 = scmp.eq.s32.totalorder %s113, 0
    %s116 = sadd.s32 %s115, 1
    %s117 = scalar_select %p114, %s115, %s116
    %p120 = pneg %p114
    %p121 = scmp.eq.s32.totalorder %s11, 1
    %p122 = por %p120, %p121
    %p123 = scmp.ne.s32.totalorder %s115, %s118
    %p124 = scmp.eq.s32.totalorder %s11, 0
    %p125 = por %p123, %p124
    %p126 = scmp.ne.s32.totalorder %s115, %s118
    %p127 = scmp.eq.s32.totalorder %s16, 1
    %p128 = por %p126, %p127
    %p129 = scmp.ne.s32.totalorder %s118, %s119
    %p130 = scmp.eq.s32.totalorder %s16, 0
    %p131 = por %p129, %p130
    %p132 = scmp.ne.s32.totalorder %s118, %s119
    %p133 = scmp.eq.s32.totalorder %s17, 1
    %p134 = por %p132, %p133
    %p136 = scmp.ne.s32.totalorder %s119, %s135
    %p137 = scmp.eq.s32.totalorder %s17, 0
    %p138 = por %p136, %p137
    %p139 = scmp.le.s32.totalorder 1, %s11
    %p140 = scmp.lt.s32.totalorder %s11, 3
    %p141 = pnand %p139, %p140
    %p142 = pneg %p141
    // Predicated region
    $region9: #{m_block_forward.6} parent=5 // pred_check
      _
    $region10: #{m_block_forward.6} parent=5 // pred_check_branch
      %144 = sbr.rel (%p141) target = $region12
    $region11: #{m_block_forward.6} parent=5 // pred_region
      %s145 = ssub.s32 %s11, 1
      // Predicated region
      $region13: #{m_block_forward.6} parent=11 // pred_check
        %p146 = pneg %p58
      $region14: #{m_block_forward.6} parent=11 // pred_check_branch
        %148 = sbr.rel (%p146) target = $region16
      $region15: #{m_block_forward.6} parent=11 // pred_region
        _
      $region16: #{m_block_forward.6} parent=11 // pred_fallthru
        _
      // Predicated region
      $region17: #{m_block_forward.6} parent=11 // pred_check
        %p149 = pneg %p79
      $region18: #{m_block_forward.6} parent=11 // pred_check_branch
        %151 = sbr.rel (%p149) target = $region20
      $region19: #{m_block_forward.6} parent=11 // pred_region
        _
      $region20: #{m_block_forward.6} parent=11 // pred_fallthru
        _
    $region12: #{m_block_forward.6} parent=5 // pred_fallthru
      _
    %p152 = scmp.lt.s32.totalorder %s11, 2
    // Predicated region
    $region21: #{m_block_forward.6} parent=5 // pred_check
      %p153 = pneg %p152
    $region22: #{m_block_forward.6} parent=5 // pred_check_branch
      %155 = sbr.rel (%p153) target = $region24
    $region23: #{m_block_forward.6} parent=5 // pred_region
      // Predicated region
      $region25: #{m_block_forward.6} parent=23 // pred_check
        %p156 = pneg %p31
      $region26: #{m_block_forward.6} parent=23 // pred_check_branch
        %158 = sbr.rel (%p156) target = $region28
      $region27: #{m_block_forward.6} parent=23 // pred_region
        %p159 = scmp.lt.s32.totalorder %s11, 1
        %s160 = scalar_select %p159, %s11, 1
        %s161 = smul.addr %s160, 5
        %s162 = smul.addr %s161, 4
        %s163 = scalar_lea.vmem %s0, %s162
      $region28: #{m_block_forward.6} parent=23 // pred_fallthru
        _
    $region24: #{m_block_forward.6} parent=5 // pred_fallthru
      _
    %p164 = scmp.le.s32.totalorder 1, %s11
    %p165 = scmp.lt.s32.totalorder %s11, 3
    %p166 = pnand %p164, %p165
    %p167 = pneg %p166
    // Predicated region
    $region29: #{m_block_forward.6} parent=5 // pred_check
      _
    $region30: #{m_block_forward.6} parent=5 // pred_check_branch
      %169 = sbr.rel (%p166) target = $region32
    $region31: #{m_block_forward.6} parent=5 // pred_region
      %s170 = ssub.s32 %s11, 1
      %p171 = scmp.lt.s32.totalorder %s16, 1
      %s172 = scalar_select %p171, %s16, 1
      %s173 = smul.addr %s172, 5
      %s174 = smul.addr %s173, 4
      %s175 = scalar_lea.vmem %s0, %s174
      %p176 = pneg %p37
      %p177 = pneg %p34
      %p178 = pneg %p58
      %p179 = pneg %p55
      %p180 = pneg %p79
      %p181 = pneg %p76
      %p182 = pneg %p105
      %p183 = pneg %p102
      %p184 = scmp.lt.s32.totalorder %s16, 1
      %s185 = scalar_select %p184, %s16, 1
      %s186 = smul.addr %s185, 12
      %s187 = smul.addr %s186, 8
      %s188 = scalar_lea.vmem %s3, %s187
      %p189 = pneg %p131
      %p190 = pneg %p128
      %p191 = scmp.lt.s32.totalorder %s16, 1
      %s192 = scalar_select %p191, %s16, 1
      %s193 = smul.addr %s192, 4
      %s194 = smul.addr %s193, 8
      %s195 = scalar_lea.vmem %s4, %s194
      %p196 = scmp.lt.s32.totalorder %s16, 1
      %s197 = scalar_select %p196, %s16, 1
      %s198 = smul.addr %s197, 5
      %s199 = smul.addr %s198, 4
      %s200 = scalar_lea.vmem %s0, %s199
      %p201 = scmp.lt.s32.totalorder %s16, 1
      %s202 = scalar_select %p201, %s16, 1
      %s203 = smul.addr %s202, 12
      %s204 = smul.addr %s203, 8
      %s205 = scalar_lea.vmem %s3, %s204
      %p206 = scmp.lt.s32.totalorder %s16, 1
      %s207 = scalar_select %p206, %s16, 1
      %s208 = smul.addr %s207, 4
      %s209 = smul.addr %s208, 8
      %s210 = scalar_lea.vmem %s4, %s209
      %v212 = vld [vmem:[%s200] sm:$0xff]
      %v213 = vld [vmem:[%s200 + $0x8] sm:$0xff]
      %v214 = vld [vmem:[%s200 + $0x10] sm:$0xf]
      %v215 = vunpack.c.l.bf16 %v212
      %v216 = vunpack.c.h.bf16 %v212
      %v217 = vunpack.c.l.bf16 %v213
      %v218 = vunpack.c.h.bf16 %v213
      %v219 = vunpack.c.l.bf16 %v214
      %224 = vrot.lane.b32.xlu0 %v215, 127
      %v225 = vpop.permute.xlu0 %224
      %226 = vrot.lane.b32.xlu0 %v216, 127
      %v227 = vpop.permute.xlu0 %226
      %228 = vrot.lane.b32.xlu0 %v217, 127
      %v229 = vpop.permute.xlu0 %228
      %230 = vrot.lane.b32.xlu0 %v218, 127
      %v231 = vpop.permute.xlu0 %230
      %vm232 = vcmask 1039360
      %v233 = vsel %vm232, %v225, %v227
      %v234 = vsel %vm232, %v227, %v229
      %v235 = vsel %vm232, %v229, %v231
      %240 = vrot.lane.b32.xlu0 %v215, 126
      %v241 = vpop.permute.xlu0 %240
      %242 = vrot.lane.b32.xlu0 %v216, 126
      %v243 = vpop.permute.xlu0 %242
      %244 = vrot.lane.b32.xlu0 %v217, 126
      %v245 = vpop.permute.xlu0 %244
      %246 = vrot.lane.b32.xlu0 %v218, 126
      %v247 = vpop.permute.xlu0 %246
      %vm248 = vcmask 1031168
      %v249 = vsel %vm248, %v241, %v243
      %v250 = vsel %vm248, %v243, %v245
      %v251 = vsel %vm248, %v245, %v247
      %256 = vrot.lane.b32.xlu0 %v215, 110
      %v257 = vpop.permute.xlu0 %256
      %258 = vrot.lane.b32.xlu0 %v216, 110
      %v259 = vpop.permute.xlu0 %258
      %260 = vrot.lane.b32.xlu0 %v217, 110
      %v261 = vpop.permute.xlu0 %260
      %262 = vrot.lane.b32.xlu0 %v218, 110
      %v263 = vpop.permute.xlu0 %262
      %vm264 = vcmask 900096
      %v265 = vsel %vm264, %v257, %v259
      %v266 = vsel %vm264, %v259, %v261
      %v267 = vsel %vm264, %v261, %v263
      %272 = vrot.lane.b32.xlu0 %v216, 109
      %v273 = vpop.permute.xlu0 %272
      %274 = vrot.lane.b32.xlu0 %v217, 109
      %v275 = vpop.permute.xlu0 %274
      %276 = vrot.lane.b32.xlu0 %v218, 109
      %v277 = vpop.permute.xlu0 %276
      %vm278 = vcmask 891904
      %v279 = vsel %vm278, %v273, %v275
      %v280 = vsel %vm278, %v275, %v277
      %286 = vrot.lane.b32.xlu0 %v216, 108
      %v287 = vpop.permute.xlu0 %286
      %288 = vrot.lane.b32.xlu0 %v217, 108
      %v289 = vpop.permute.xlu0 %288
      %290 = vrot.lane.b32.xlu0 %v218, 108
      %v291 = vpop.permute.xlu0 %290
      %292 = vrot.lane.b32.xlu0 %v219, 108
      %v293 = vpop.permute.xlu0 %292
      %vm294 = vcmask 883712
      %v295 = vsel %vm294, %v287, %v289
      %v296 = vsel %vm294, %v289, %v291
      %v297 = vsel %vm294, %v291, %v293
      %302 = vrot.lane.b32.xlu0 %v216, 92
      %v303 = vpop.permute.xlu0 %302
      %304 = vrot.lane.b32.xlu0 %v217, 92
      %v305 = vpop.permute.xlu0 %304
      %306 = vrot.lane.b32.xlu0 %v218, 92
      %v307 = vpop.permute.xlu0 %306
      %308 = vrot.lane.b32.xlu0 %v219, 92
      %v309 = vpop.permute.xlu0 %308
      %vm310 = vcmask 752640
      %v311 = vsel %vm310, %v303, %v305
      %v312 = vsel %vm310, %v305, %v307
      %v313 = vsel %vm310, %v307, %v309
      %318 = vrot.lane.b32.xlu0 %v216, 91
      %v319 = vpop.permute.xlu0 %318
      %320 = vrot.lane.b32.xlu0 %v217, 91
      %v321 = vpop.permute.xlu0 %320
      %322 = vrot.lane.b32.xlu0 %v218, 91
      %v323 = vpop.permute.xlu0 %322
      %324 = vrot.lane.b32.xlu0 %v219, 91
      %v325 = vpop.permute.xlu0 %324
      %vm326 = vcmask 744448
      %v327 = vsel %vm326, %v319, %v321
      %v328 = vsel %vm326, %v321, %v323
      %v329 = vsel %vm326, %v323, %v325
      %334 = vrot.lane.b32.xlu0 %v216, 90
      %v335 = vpop.permute.xlu0 %334
      %336 = vrot.lane.b32.xlu0 %v217, 90
      %v337 = vpop.permute.xlu0 %336
      %338 = vrot.lane.b32.xlu0 %v218, 90
      %v339 = vpop.permute.xlu0 %338
      %340 = vrot.lane.b32.xlu0 %v219, 90
      %v341 = vpop.permute.xlu0 %340
      %vm342 = vcmask 736256
      %v343 = vsel %vm342, %v335, %v337
      %v344 = vsel %vm342, %v337, %v339
      %v345 = vsel %vm342, %v339, %v341
      %v350 = vpack.c.bf16 %v233, %v215
      %v351 = vpack.c.bf16 %v234, %v216
      %v352 = vpack.c.bf16 %v235, %v217
      %v353 = vpack.c.bf16 %v231, %v218
      %v354 = vpack.c.bf16 %v265, %v249
      %v355 = vpack.c.bf16 %v266, %v250
      %v356 = vpack.c.bf16 %v267, %v251
      %v357 = vpack.c.bf16 %v263, %v247
      %v358 = vpack.c.bf16 %v287, %v273
      %v359 = vpack.c.bf16 %v295, %v279
      %v360 = vpack.c.bf16 %v296, %v280
      %v361 = vpack.c.bf16 %v297, %v277
      %v362 = vpack.c.bf16 %v319, %v303
      %v363 = vpack.c.bf16 %v327, %v311
      %v364 = vpack.c.bf16 %v328, %v312
      %v365 = vpack.c.bf16 %v329, %v313
      %v366 = vpack.c.bf16 %v335, %v335
      %v367 = vpack.c.bf16 %v343, %v343
      %v368 = vpack.c.bf16 %v344, %v344
      %v369 = vpack.c.bf16 %v345, %v345
      %v370 = vld [vmem:[%s1] sm:$0xf]
      %v371 = vld [vmem:[%s1 + $0x4] sm:$0xf]
      %v372 = vld [vmem:[%s1 + $0x8] sm:$0xf]
      %v373 = vld [vmem:[%s1 + $0xc] sm:$0xf]
      %v378 = vunpack.c.l.b16 %v370
      %v379 = vunpack.c.l.b16 %v371
      %v380 = vunpack.c.l.b16 %v372
      %v381 = vunpack.c.l.b16 %v373
      %v382 = vpack.c.b16 %v379, %v378
      %v383 = vpack.c.b16 %v381, %v380
      %404 = vrot.lane.b32.xlu0 %v350, 19
      %v405 = vpop.permute.xlu0 %404
      %406 = vrot.lane.b32.xlu0 %v351, 19
      %v407 = vpop.permute.xlu0 %406
      %408 = vrot.lane.b32.xlu0 %v352, 19
      %v409 = vpop.permute.xlu0 %408
      %410 = vrot.lane.b32.xlu0 %v353, 19
      %v411 = vpop.permute.xlu0 %410
      %412 = vrot.lane.b32.xlu0 %v354, 19
      %v413 = vpop.permute.xlu0 %412
      %414 = vrot.lane.b32.xlu0 %v355, 19
      %v415 = vpop.permute.xlu0 %414
      %416 = vrot.lane.b32.xlu0 %v356, 19
      %v417 = vpop.permute.xlu0 %416
      %418 = vrot.lane.b32.xlu0 %v357, 19
      %v419 = vpop.permute.xlu0 %418
      %420 = vrot.lane.b32.xlu0 %v358, 19
      %v421 = vpop.permute.xlu0 %420
      %422 = vrot.lane.b32.xlu0 %v359, 19
      %v423 = vpop.permute.xlu0 %422
      %424 = vrot.lane.b32.xlu0 %v360, 19
      %v425 = vpop.permute.xlu0 %424
      %426 = vrot.lane.b32.xlu0 %v361, 19
      %v427 = vpop.permute.xlu0 %426
      %428 = vrot.lane.b32.xlu0 %v362, 19
      %v429 = vpop.permute.xlu0 %428
      %430 = vrot.lane.b32.xlu0 %v363, 19
      %v431 = vpop.permute.xlu0 %430
      %432 = vrot.lane.b32.xlu0 %v364, 19
      %v433 = vpop.permute.xlu0 %432
      %434 = vrot.lane.b32.xlu0 %v365, 19
      %v435 = vpop.permute.xlu0 %434
      %436 = vrot.lane.b32.xlu0 %v366, 19
      %v437 = vpop.permute.xlu0 %436
      %438 = vrot.lane.b32.xlu0 %v367, 19
      %v439 = vpop.permute.xlu0 %438
      %440 = vrot.lane.b32.xlu0 %v368, 19
      %v441 = vpop.permute.xlu0 %440
      %442 = vrot.lane.b32.xlu0 %v369, 19
      %v443 = vpop.permute.xlu0 %442
      %vm444 = vcmask 154624
      %v445 = vsel %vm444, %v405, %v407
      %v446 = vsel %vm444, %v407, %v409
      %v447 = vsel %vm444, %v409, %v411
      %v448 = vsel %vm444, %v413, %v415
      %v449 = vsel %vm444, %v415, %v417
      %v450 = vsel %vm444, %v417, %v419
      %v451 = vsel %vm444, %v421, %v423
      %v452 = vsel %vm444, %v423, %v425
      %v453 = vsel %vm444, %v425, %v427
      %v454 = vsel %vm444, %v429, %v431
      %v455 = vsel %vm444, %v431, %v433
      %v456 = vsel %vm444, %v433, %v435
      %v457 = vsel %vm444, %v437, %v439
      %v458 = vsel %vm444, %v439, %v441
      %v459 = vsel %vm444, %v441, %v443
      %vm472 = vcmask 588800
      %v474 = vsel %vm472, %v382, 0
      %v477 = vsel %vm472, %v383, 0
      %vm479 = vcmask 1043456
      %v481 = vsel %vm479, %v457, 0
      %v484 = vsel %vm479, %v458, 0
      %v487 = vsel %vm479, %v459, 0
      %489 = vmatprep.subr.bf16.mxu0 %v446
      %490 = vmatpush1.bf16.msra.mxu0 %v445
      %491 = vmatprep.subr.bf16.mxu0 %v449
      %492 = vmatpush1.bf16.msra.mxu0 %v448
      %493 = vmatprep.subr.bf16.mxu0 %v452
      %494 = vmatpush1.bf16.msra.mxu0 %v451
      %495 = vmatprep.subr.bf16.mxu0 %v455
      %496 = vmatpush1.bf16.msra.mxu0 %v454
      %497 = vmatprep.subr.bf16.mxu0 %v484
      %498 = vmatpush1.bf16.msra.mxu0 %v481
      %499 = vmatprep.subr.bf16.mxu0 0
      %500 = vmatpush1.bf16.msra.mxu0 0
      %501 = vmatprep.subr.bf16.mxu0 0
      %502 = vmatpush1.bf16.msra.mxu0 0
      %503 = vmatprep.subr.bf16.mxu0 0
      %504 = vmatpush1.bf16.msra.mxu0 0
      %505 = vmatprep.subr.bf16.mxu0 0
      %506 = vmatpush1.bf16.msra.mxu0 0
      %507 = vmatprep.subr.bf16.mxu0 0
      %508 = vmatpush1.bf16.msra.mxu0 0
      %509 = vmatprep.subr.bf16.mxu0 0
      %510 = vmatpush1.bf16.msra.mxu0 0
      %511 = vmatprep.subr.bf16.mxu0 0
      %512 = vmatpush1.bf16.msra.mxu0 0
      %513 = vmatprep.subr.bf16.mxu0 0
      %514 = vmatpush1.bf16.msra.mxu0 0
      %515 = vmatprep.subr.bf16.mxu0 0
      %516 = vmatpush1.bf16.msra.mxu0 0
      %517 = vmatprep.subr.bf16.mxu0 0
      %518 = vmatpush1.bf16.msra.mxu0 0
      %519 = vmatprep.subr.bf16.mxu0 0
      %520 = vmatpush1.bf16.msra.mxu0 0
      %521 = vmatprep.mubr.bf16.mxu0 0
      %522 = vmatmul.mubr.bf16.gmra.mrb[0].mxu0 %v474
      %v523 = vpop.f32.mrb[0].mxu0
      %v524 = vadd.f32 0.0, %v523
      %v525 = vpop.f32.mrb[0].mxu0
      %v526 = vadd.f32 0.0, %v525
      %v527 = vpop.f32.mrb[0].mxu0
      %v528 = vadd.f32 0.0, %v527
      %v529 = vpop.f32.mrb[0].mxu0
      %v530 = vadd.f32 0.0, %v529
      %531 = vmatprep.mubr.bf16.mxu0 0
      %532 = vmatmul.mubr.bf16.gmra.mrb[0].mxu0 %v477
      %v533 = vpop.f32.mrb[0].mxu0
      %v534 = vadd.f32 0.0, %v533
      %v535 = vpop.f32.mrb[0].mxu0
      %v536 = vadd.f32 0.0, %v535
      %v537 = vpop.f32.mrb[0].mxu0
      %v538 = vadd.f32 0.0, %v537
      %v539 = vpop.f32.mrb[0].mxu0
      %v540 = vadd.f32 0.0, %v539
      %541 = vdwg.mxu0
      %542 = vmatprep.subr.bf16.mxu0 0
      %543 = vmatpush1.bf16.msra.mxu0 %v447
      %544 = vmatprep.subr.bf16.mxu0 0
      %545 = vmatpush1.bf16.msra.mxu0 %v450
      %546 = vmatprep.subr.bf16.mxu0 0
      %547 = vmatpush1.bf16.msra.mxu0 %v453
      %548 = vmatprep.subr.bf16.mxu0 0
      %549 = vmatpush1.bf16.msra.mxu0 %v456
      %550 = vmatprep.subr.bf16.mxu0 0
      %551 = vmatpush1.bf16.msra.mxu0 %v487
      %552 = vmatprep.subr.bf16.mxu0 0
      %553 = vmatpush1.bf16.msra.mxu0 0
      %554 = vmatprep.subr.bf16.mxu0 0
      %555 = vmatpush1.bf16.msra.mxu0 0
      %556 = vmatprep.subr.bf16.mxu0 0
      %557 = vmatpush1.bf16.msra.mxu0 0
      %558 = vmatprep.subr.bf16.mxu0 0
      %559 = vmatpush1.bf16.msra.mxu0 0
      %560 = vmatprep.subr.bf16.mxu0 0
      %561 = vmatpush1.bf16.msra.mxu0 0
      %562 = vmatprep.subr.bf16.mxu0 0
      %563 = vmatpush1.bf16.msra.mxu0 0
      %564 = vmatprep.subr.bf16.mxu0 0
      %565 = vmatpush1.bf16.msra.mxu0 0
      %566 = vmatprep.subr.bf16.mxu0 0
      %567 = vmatpush1.bf16.msra.mxu0 0
      %568 = vmatprep.subr.bf16.mxu0 0
      %569 = vmatpush1.bf16.msra.mxu0 0
      %570 = vmatprep.subr.bf16.mxu0 0
      %571 = vmatpush1.bf16.msra.mxu0 0
      %572 = vmatprep.subr.bf16.mxu0 0
      %573 = vmatpush1.bf16.msra.mxu0 0
      %574 = vmatprep.mubr.bf16.mxu0 0
      %575 = vmatmul.mubr.bf16.gmra.mrb[0].mxu0 %v474
      %v576 = vpop.f32.mrb[0].mxu0
      %v577 = vadd.f32 0.0, %v576
      %v578 = vpop.f32.mrb[0].mxu0
      %v579 = vpop.f32.mrb[0].mxu0
      %v580 = vadd.f32 0.0, %v579
      %v581 = vpop.f32.mrb[0].mxu0
      %582 = vmatprep.mubr.bf16.mxu0 0
      %583 = vmatmul.mubr.bf16.gmra.mrb[0].mxu0 %v477
      %v584 = vpop.f32.mrb[0].mxu0
      %v585 = vadd.f32 0.0, %v584
      %v586 = vpop.f32.mrb[0].mxu0
      %v587 = vpop.f32.mrb[0].mxu0
      %v588 = vadd.f32 0.0, %v587
      %v589 = vpop.f32.mrb[0].mxu0
      %590 = vdwg.mxu0
      %591 = vst [vmem:[%s205] sm:$0xff] %v524
      %592 = vst [vmem:[%s205 + $0x8] sm:$0xff] %v526
      %593 = vst [vmem:[%s205 + $0x10] sm:$0xff] %v577
      %594 = vst [vmem:[%s205 + $0x18] sm:$0xff] %v528
      %595 = vst [vmem:[%s205 + $0x20] sm:$0xff] %v530
      %596 = vst [vmem:[%s205 + $0x28] sm:$0xff] %v580
      %597 = vst [vmem:[%s205 + $0x30] sm:$0xff] %v534
      %598 = vst [vmem:[%s205 + $0x38] sm:$0xff] %v536
      %599 = vst [vmem:[%s205 + $0x40] sm:$0xff] %v585
      %600 = vst [vmem:[%s205 + $0x48] sm:$0xff] %v538
      %601 = vst [vmem:[%s205 + $0x50] sm:$0xff] %v540
      %602 = vst [vmem:[%s205 + $0x58] sm:$0xff] %v588
      %v603 = vld [vmem:[%s2] sm:$0x7]
      %v605 = vlaneseq
      %v606 = vshrl.u32 %v605, 7
      %v607 = vsub.s32 0, %v606
      %v608 = vrot.slane %v603, %v607
      %v609 = vlaneseq
      %v610 = vshrl.u32 %v609, 7
      %v611 = vsub.s32 1, %v610
      %v612 = vrot.slane %v603, %v611
      %v613 = vlaneseq
      %v614 = vshrl.u32 %v613, 7
      %v615 = vsub.s32 2, %v614
      %v616 = vrot.slane %v603, %v615
      %v620 = vmul.f32 %v524, %v608
      %v621 = vmul.f32 %v526, %v612
      %v622 = vmul.f32 %v577, %v616
      %v623 = vmul.f32 %v528, %v608
      %v624 = vmul.f32 %v530, %v612
      %v625 = vmul.f32 %v580, %v616
      %v626 = vmul.f32 %v534, %v608
      %v627 = vmul.f32 %v536, %v612
      %v628 = vmul.f32 %v585, %v616
      %v629 = vmul.f32 %v538, %v608
      %v630 = vmul.f32 %v540, %v612
      %v631 = vmul.f32 %v588, %v616
      %v632 = vadd.f32 %v620, %v621
      %v633 = vadd.f32 %v632, %v622
      %634 = vadd.xlane.f32.xlu0 %v633
      %v635 = vpop.xlane.xlu0 %634
      %v636 = vadd.f32 %v623, %v624
      %v637 = vadd.f32 %v636, %v625
      %638 = vadd.xlane.f32.xlu0 %v637
      %v639 = vpop.xlane.xlu0 %638
      %v640 = vadd.f32 %v626, %v627
      %v641 = vadd.f32 %v640, %v628
      %642 = vadd.xlane.f32.xlu0 %v641
      %v643 = vpop.xlane.xlu0 %642
      %v644 = vadd.f32 %v629, %v630
      %v645 = vadd.f32 %v644, %v631
      %646 = vadd.xlane.f32.xlu0 %v645
      %v647 = vpop.xlane.xlu0 %646
      %v648 = vmul.f32 %v620, %v524
      %v649 = vmul.f32 %v621, %v526
      %v650 = vmul.f32 %v622, %v577
      %v651 = vmul.f32 %v623, %v528
      %v652 = vmul.f32 %v624, %v530
      %v653 = vmul.f32 %v625, %v580
      %v654 = vmul.f32 %v626, %v534
      %v655 = vmul.f32 %v627, %v536
      %v656 = vmul.f32 %v628, %v585
      %v657 = vmul.f32 %v629, %v538
      %v658 = vmul.f32 %v630, %v540
      %v659 = vmul.f32 %v631, %v588
      %v660 = vadd.f32 %v648, %v649
      %v661 = vadd.f32 %v660, %v650
      %662 = vadd.xlane.f32.xlu0 %v661
      %v663 = vpop.xlane.xlu0 %662
      %v664 = vadd.f32 %v651, %v652
      %v665 = vadd.f32 %v664, %v653
      %666 = vadd.xlane.f32.xlu0 %v665
      %v667 = vpop.xlane.xlu0 %666
      %v668 = vadd.f32 %v654, %v655
      %v669 = vadd.f32 %v668, %v656
      %670 = vadd.xlane.f32.xlu0 %v669
      %v671 = vpop.xlane.xlu0 %670
      %v672 = vadd.f32 %v657, %v658
      %v673 = vadd.f32 %v672, %v659
      %674 = vadd.xlane.f32.xlu0 %v673
      %v675 = vpop.xlane.xlu0 %674
      %vm676 = vcmask 7168
      %v677 = vsel %vm676, %v635, %v663
      %v678 = vsel %vm676, %v639, %v667
      %v679 = vsel %vm676, %v643, %v671
      %v680 = vsel %vm676, %v647, %v675
      %vm681 = vcmask 15360
      %682 = vst.msk [vmem:[%s210] sm:$0xff] %vm681, %v677
      %683 = vst.msk [vmem:[%s210 + $0x8] sm:$0xff] %vm681, %v678
      %684 = vst.msk [vmem:[%s210 + $0x10] sm:$0xff] %vm681, %v679
      %685 = vst.msk [vmem:[%s210 + $0x18] sm:$0xff] %vm681, %v680
      %p686 = scmp.lt.s32.totalorder %s16, 1
      %s687 = scalar_select %p686, %s16, 1
      %s688 = smul.addr %s687, 12
      %s689 = smul.addr %s688, 8
      %s690 = scalar_lea.vmem %s3, %s689
      %p691 = scmp.lt.s32.totalorder %s16, 1
      %s692 = scalar_select %p691, %s16, 1
      %s693 = smul.addr %s692, 4
      %s694 = smul.addr %s693, 8
      %s695 = scalar_lea.vmem %s4, %s694
      // Predicated region
      $region33: #{m_block_forward.6} parent=31 // pred_check
        %p696 = pneg %p102
      $region34: #{m_block_forward.6} parent=31 // pred_check_branch
        %698 = sbr.rel (%p696) target = $region36
      $region35: #{m_block_forward.6} parent=31 // pred_region
        _
      $region36: #{m_block_forward.6} parent=31 // pred_fallthru
        _
      // Predicated region
      $region37: #{m_block_forward.6} parent=31 // pred_check
        %p699 = pneg %p128
      $region38: #{m_block_forward.6} parent=31 // pred_check_branch
        %701 = sbr.rel (%p699) target = $region40
      $region39: #{m_block_forward.6} parent=31 // pred_region
        _
      $region40: #{m_block_forward.6} parent=31 // pred_fallthru
        _
    $region32: #{m_block_forward.6} parent=5 // pred_fallthru
      _
    %p702 = scmp.le.s32.totalorder 2, %s11
    // Predicated region
    $region41: #{m_block_forward.6} parent=5 // pred_check
      %p703 = pneg %p702
    $region42: #{m_block_forward.6} parent=5 // pred_check_branch
      %705 = sbr.rel (%p703) target = $region44
    $region43: #{m_block_forward.6} parent=5 // pred_region
      %s706 = ssub.s32 %s11, 2
      // Predicated region
      $region45: #{m_block_forward.6} parent=43 // pred_check
        %p707 = pneg %p108
      $region46: #{m_block_forward.6} parent=43 // pred_check_branch
        %709 = sbr.rel (%p707) target = $region48
      $region47: #{m_block_forward.6} parent=43 // pred_region
        %p710 = scmp.lt.s32.totalorder %s17, 1
        %s711 = scalar_select %p710, %s17, 1
        %s712 = smul.addr %s711, 12
        %s713 = smul.addr %s712, 8
        %s714 = scalar_lea.vmem %s3, %s713
      $region48: #{m_block_forward.6} parent=43 // pred_fallthru
        _
      // Predicated region
      $region49: #{m_block_forward.6} parent=43 // pred_check
        %p715 = pneg %p134
      $region50: #{m_block_forward.6} parent=43 // pred_check_branch
        %717 = sbr.rel (%p715) target = $region52
      $region51: #{m_block_forward.6} parent=43 // pred_region
        %p718 = scmp.lt.s32.totalorder %s17, 1
        %s719 = scalar_select %p718, %s17, 1
        %s720 = smul.addr %s719, 4
        %s721 = smul.addr %s720, 8
        %s722 = scalar_lea.vmem %s4, %s721
      $region52: #{m_block_forward.6} parent=43 // pred_fallthru
        _
    $region44: #{m_block_forward.6} parent=5 // pred_fallthru
      _
  $region6: #{m_block_forward.6} parent=0 // loop_footer
    %s15 = sadd.s32 1, %s11
  $region7: #{m_block_forward.6} parent=0 // loop_footer_branch
    %10 = sbr.rel target = $region3
  $region8: #{m_block_forward.6} parent=0 // loop_exit
    _

// kernel: m_block_forward.7
$region0: #{m_block_forward.7}
  #allocation0 [shape = 'u32[]', space=smem, size = 0x4, offset = 0x4, fixed_abs, tag = 'smem constant byte address 0x4 - core index']
  #allocation1 [shape = 'u32[144,128]{1,0:T(1,128)}', space=vmem, size = 0x12000, scoped, tag = 'internal scratch']
  %s0 = inlined_call_operand.vmem [shape: f32[2,32,384], index: 0, kind: input, shape index: {}]
  %s1 = inlined_call_operand.vmem [shape: bf16[2,8,384], index: 1, kind: input, shape index: {}]
  %s2 = inlined_call_operand.vmem [shape: bf16[32,8], index: 2, kind: input, shape index: {}]
  %s3 = inlined_call_operand.vmem [shape: f32[32,6], index: 3, kind: input, shape index: {}]
  %s4 = inlined_call_operand.vmem [shape: f32[2,32,4], index: 4, kind: input, shape index: {}]
  %s5 = inlined_call_operand.vmem [shape: f32[1,1,384], index: 5, kind: input, shape index: {}]
  %s6 = inlined_call_operand.vmem [shape: f32[2,32,384], index: 6, kind: output, shape index: {}]
  %s7 = sld [smem:[#allocation0]]
  $region57: #{m_block_forward.7} parent=0
    _
  %s9 = ssub.s32 1, %s7
  %s10 = scalar_select 0, %s9, %s7
  loop: start=0, step=1, limit=4
  $region2: #{m_block_forward.7} parent=0 // loop_pre_header
    _
  $region3: #{m_block_forward.7} parent=0 // loop_header
    %s12 = sphi 0, %s16
    %p13 = scmp.ge.s32.totalorder %s12, 4
    %s22 = sphi 0, %s24
    %s25 = sphi 0, %s22
    %s26 = sphi 0, %s25
    %s42 = sphi 0, %s26
    %s48 = sphi 0, %s50
    %s51 = sphi 0, %s48
    %s52 = sphi 0, %s51
    %s68 = sphi 0, %s52
    %s72 = sphi 0, %s72
    %s74 = sphi 0, %s72
    %s75 = sphi 0, %s74
    %s89 = sphi 0, %s75
    %s93 = sphi 0, %s93
    %s95 = sphi 0, %s93
    %s96 = sphi 0, %s95
    %s110 = sphi 0, %s96
    %s116 = sphi 0, %s118
    %s119 = sphi 0, %s116
    %s120 = sphi 0, %s119
    %s136 = sphi 0, %s120
    %s140 = sphi 0, %s140
    %s142 = sphi 0, %s140
    %s143 = sphi 0, %s142
    %s157 = sphi 0, %s143
    %s163 = sphi 0, %s165
    %s166 = sphi 0, %s163
    %s167 = sphi 0, %s166
    %s183 = sphi 0, %s167
  $region4: #{m_block_forward.7} parent=0 // loop_header_branch
    %15 = sbr.rel (%p13) target = $region8
  $region5: #{m_block_forward.7} parent=0 // loop_body
    %s17 = ssub.s32 %s12, 1
    %s18 = ssub.s32 %s12, 2
    %s19 = sadd.s32 %s12, 1
    %s20 = ssub.s32 %s12, %s19
    %p21 = scmp.eq.s32.totalorder %s20, 0
    %s23 = sadd.s32 %s22, 1
    %s24 = scalar_select %p21, %s22, %s23
    %p27 = pneg %p21
    %p28 = scmp.eq.s32.totalorder %s12, 1
    %p29 = por %p27, %p28
    %p30 = scmp.ne.s32.totalorder %s22, %s25
    %p31 = scmp.eq.s32.totalorder %s12, 0
    %p32 = por %p30, %p31
    %p33 = scmp.ne.s32.totalorder %s22, %s25
    %p34 = scmp.eq.s32.totalorder %s17, 1
    %p35 = por %p33, %p34
    %p36 = scmp.ne.s32.totalorder %s25, %s26
    %p37 = scmp.eq.s32.totalorder %s17, 0
    %p38 = por %p36, %p37
    %p39 = scmp.ne.s32.totalorder %s25, %s26
    %p40 = scmp.eq.s32.totalorder %s18, 1
    %p41 = por %p39, %p40
    %p43 = scmp.ne.s32.totalorder %s26, %s42
    %p44 = scmp.eq.s32.totalorder %s18, 0
    %p45 = por %p43, %p44
    %s46 = ssub.s32 %s12, %s19
    %p47 = scmp.eq.s32.totalorder %s46, 0
    %s49 = sadd.s32 %s48, 1
    %s50 = scalar_select %p47, %s48, %s49
    %p53 = pneg %p47
    %p54 = scmp.eq.s32.totalorder %s12, 1
    %p55 = por %p53, %p54
    %p56 = scmp.ne.s32.totalorder %s48, %s51
    %p57 = scmp.eq.s32.totalorder %s12, 0
    %p58 = por %p56, %p57
    %p59 = scmp.ne.s32.totalorder %s48, %s51
    %p60 = scmp.eq.s32.totalorder %s17, 1
    %p61 = por %p59, %p60
    %p62 = scmp.ne.s32.totalorder %s51, %s52
    %p63 = scmp.eq.s32.totalorder %s17, 0
    %p64 = por %p62, %p63
    %p65 = scmp.ne.s32.totalorder %s51, %s52
    %p66 = scmp.eq.s32.totalorder %s18, 1
    %p67 = por %p65, %p66
    %p69 = scmp.ne.s32.totalorder %s52, %s68
    %p70 = scmp.eq.s32.totalorder %s18, 0
    %p71 = por %p69, %p70
    %s73 = sadd.s32 %s72, 1
    %p76 = scmp.eq.s32.totalorder %s12, 1
    %p77 = scmp.ne.s32.totalorder %s72, %s74
    %p78 = scmp.eq.s32.totalorder %s12, 0
    %p79 = por %p77, %p78
    %p80 = scmp.ne.s32.totalorder %s72, %s74
    %p81 = scmp.eq.s32.totalorder %s17, 1
    %p82 = por %p80, %p81
    %p83 = scmp.ne.s32.totalorder %s74, %s75
    %p84 = scmp.eq.s32.totalorder %s17, 0
    %p85 = por %p83, %p84
    %p86 = scmp.ne.s32.totalorder %s74, %s75
    %p87 = scmp.eq.s32.totalorder %s18, 1
    %p88 = por %p86, %p87
    %p90 = scmp.ne.s32.totalorder %s75, %s89
    %p91 = scmp.eq.s32.totalorder %s18, 0
    %p92 = por %p90, %p91
    %s94 = sadd.s32 %s93, 1
    %p97 = scmp.eq.s32.totalorder %s12, 1
    %p98 = scmp.ne.s32.totalorder %s93, %s95
    %p99 = scmp.eq.s32.totalorder %s12, 0
    %p100 = por %p98, %p99
    %p101 = scmp.ne.s32.totalorder %s93, %s95
    %p102 = scmp.eq.s32.totalorder %s17, 1
    %p103 = por %p101, %p102
    %p104 = scmp.ne.s32.totalorder %s95, %s96
    %p105 = scmp.eq.s32.totalorder %s17, 0
    %p106 = por %p104, %p105
    %p107 = scmp.ne.s32.totalorder %s95, %s96
    %p108 = scmp.eq.s32.totalorder %s18, 1
    %p109 = por %p107, %p108
    %p111 = scmp.ne.s32.totalorder %s96, %s110
    %p112 = scmp.eq.s32.totalorder %s18, 0
    %p113 = por %p111, %p112
    %s114 = ssub.s32 %s12, %s19
    %p115 = scmp.eq.s32.totalorder %s114, 0
    %s117 = sadd.s32 %s116, 1
    %s118 = scalar_select %p115, %s116, %s117
    %p121 = pneg %p115
    %p122 = scmp.eq.s32.totalorder %s12, 1
    %p123 = por %p121, %p122
    %p124 = scmp.ne.s32.totalorder %s116, %s119
    %p125 = scmp.eq.s32.totalorder %s12, 0
    %p126 = por %p124, %p125
    %p127 = scmp.ne.s32.totalorder %s116, %s119
    %p128 = scmp.eq.s32.totalorder %s17, 1
    %p129 = por %p127, %p128
    %p130 = scmp.ne.s32.totalorder %s119, %s120
    %p131 = scmp.eq.s32.totalorder %s17, 0
    %p132 = por %p130, %p131
    %p133 = scmp.ne.s32.totalorder %s119, %s120
    %p134 = scmp.eq.s32.totalorder %s18, 1
    %p135 = por %p133, %p134
    %p137 = scmp.ne.s32.totalorder %s120, %s136
    %p138 = scmp.eq.s32.totalorder %s18, 0
    %p139 = por %p137, %p138
    %s141 = sadd.s32 %s140, 1
    %p144 = scmp.eq.s32.totalorder %s12, 1
    %p145 = scmp.ne.s32.totalorder %s140, %s142
    %p146 = scmp.eq.s32.totalorder %s12, 0
    %p147 = por %p145, %p146
    %p148 = scmp.ne.s32.totalorder %s140, %s142
    %p149 = scmp.eq.s32.totalorder %s17, 1
    %p150 = por %p148, %p149
    %p151 = scmp.ne.s32.totalorder %s142, %s143
    %p152 = scmp.eq.s32.totalorder %s17, 0
    %p153 = por %p151, %p152
    %p154 = scmp.ne.s32.totalorder %s142, %s143
    %p155 = scmp.eq.s32.totalorder %s18, 1
    %p156 = por %p154, %p155
    %p158 = scmp.ne.s32.totalorder %s143, %s157
    %p159 = scmp.eq.s32.totalorder %s18, 0
    %p160 = por %p158, %p159
    %s161 = ssub.s32 %s12, %s19
    %p162 = scmp.eq.s32.totalorder %s161, 0
    %s164 = sadd.s32 %s163, 1
    %s165 = scalar_select %p162, %s163, %s164
    %p168 = pneg %p162
    %p169 = scmp.eq.s32.totalorder %s12, 1
    %p170 = por %p168, %p169
    %p171 = scmp.ne.s32.totalorder %s163, %s166
    %p172 = scmp.eq.s32.totalorder %s12, 0
    %p173 = por %p171, %p172
    %p174 = scmp.ne.s32.totalorder %s163, %s166
    %p175 = scmp.eq.s32.totalorder %s17, 1
    %p176 = por %p174, %p175
    %p177 = scmp.ne.s32.totalorder %s166, %s167
    %p178 = scmp.eq.s32.totalorder %s17, 0
    %p179 = por %p177, %p178
    %p180 = scmp.ne.s32.totalorder %s166, %s167
    %p181 = scmp.eq.s32.totalorder %s18, 1
    %p182 = por %p180, %p181
    %p184 = scmp.ne.s32.totalorder %s167, %s183
    %p185 = scmp.eq.s32.totalorder %s18, 0
    %p186 = por %p184, %p185
    %p187 = scmp.le.s32.totalorder 1, %s12
    %p188 = scmp.lt.s32.totalorder %s12, 3
    %p189 = pnand %p187, %p188
    %p190 = pneg %p189
    // Predicated region
    $region9: #{m_block_forward.7} parent=5 // pred_check
      _
    $region10: #{m_block_forward.7} parent=5 // pred_check_branch
      %192 = sbr.rel (%p189) target = $region12
    $region11: #{m_block_forward.7} parent=5 // pred_region
      %s193 = ssub.s32 %s12, 1
      // Predicated region
      $region13: #{m_block_forward.7} parent=11 // pred_check
        %p194 = pneg %p85
      $region14: #{m_block_forward.7} parent=11 // pred_check_branch
        %196 = sbr.rel (%p194) target = $region16
      $region15: #{m_block_forward.7} parent=11 // pred_region
        _
      $region16: #{m_block_forward.7} parent=11 // pred_fallthru
        _
      // Predicated region
      $region17: #{m_block_forward.7} parent=11 // pred_check
        %p197 = pneg %p106
      $region18: #{m_block_forward.7} parent=11 // pred_check_branch
        %199 = sbr.rel (%p197) target = $region20
      $region19: #{m_block_forward.7} parent=11 // pred_region
        _
      $region20: #{m_block_forward.7} parent=11 // pred_fallthru
        _
      // Predicated region
      $region21: #{m_block_forward.7} parent=11 // pred_check
        %p200 = pneg %p153
      $region22: #{m_block_forward.7} parent=11 // pred_check_branch
        %202 = sbr.rel (%p200) target = $region24
      $region23: #{m_block_forward.7} parent=11 // pred_region
        _
      $region24: #{m_block_forward.7} parent=11 // pred_fallthru
        _
    $region12: #{m_block_forward.7} parent=5 // pred_fallthru
      _
    %p203 = scmp.lt.s32.totalorder %s12, 2
    // Predicated region
    $region25: #{m_block_forward.7} parent=5 // pred_check
      %p204 = pneg %p203
    $region26: #{m_block_forward.7} parent=5 // pred_check_branch
      %206 = sbr.rel (%p204) target = $region28
    $region27: #{m_block_forward.7} parent=5 // pred_region
      // Predicated region
      $region29: #{m_block_forward.7} parent=27 // pred_check
        %p207 = pneg %p32
      $region30: #{m_block_forward.7} parent=27 // pred_check_branch
        %209 = sbr.rel (%p207) target = $region32
      $region31: #{m_block_forward.7} parent=27 // pred_region
        %p210 = scmp.lt.s32.totalorder %s12, 1
        %s211 = scalar_select %p210, %s12, 1
        %s212 = smul.addr %s211, 12
        %s213 = smul.addr %s212, 8
        %s214 = scalar_lea.vmem %s0, %s213
      $region32: #{m_block_forward.7} parent=27 // pred_fallthru
        _
      // Predicated region
      $region33: #{m_block_forward.7} parent=27 // pred_check
        %p215 = pneg %p58
      $region34: #{m_block_forward.7} parent=27 // pred_check_branch
        %217 = sbr.rel (%p215) target = $region36
      $region35: #{m_block_forward.7} parent=27 // pred_region
        %p218 = scmp.lt.s32.totalorder %s12, 1
        %s219 = scalar_select %p218, %s12, 1
        %s220 = smul.addr %s219, 3
        %s221 = smul.addr %s220, 4
        %s222 = scalar_lea.vmem %s1, %s221
      $region36: #{m_block_forward.7} parent=27 // pred_fallthru
        _
      // Predicated region
      $region37: #{m_block_forward.7} parent=27 // pred_check
        %p223 = pneg %p126
      $region38: #{m_block_forward.7} parent=27 // pred_check_branch
        %225 = sbr.rel (%p223) target = $region40
      $region39: #{m_block_forward.7} parent=27 // pred_region
        %p226 = scmp.lt.s32.totalorder %s12, 1
        %s227 = scalar_select %p226, %s12, 1
        %s228 = smul.addr %s227, 4
        %s229 = smul.addr %s228, 8
        %s230 = scalar_lea.vmem %s4, %s229
      $region40: #{m_block_forward.7} parent=27 // pred_fallthru
        _
    $region28: #{m_block_forward.7} parent=5 // pred_fallthru
      _
    %p231 = scmp.le.s32.totalorder 1, %s12
    %p232 = scmp.lt.s32.totalorder %s12, 3
    %p233 = pnand %p231, %p232
    %p234 = pneg %p233
    // Predicated region
    $region41: #{m_block_forward.7} parent=5 // pred_check
      _
    $region42: #{m_block_forward.7} parent=5 // pred_check_branch
      %236 = sbr.rel (%p233) target = $region44
    $region43: #{m_block_forward.7} parent=5 // pred_region
      %s237 = ssub.s32 %s12, 1
      %p238 = scmp.lt.s32.totalorder %s17, 1
      %s239 = scalar_select %p238, %s17, 1
      %s240 = smul.addr %s239, 12
      %s241 = smul.addr %s240, 8
      %s242 = scalar_lea.vmem %s0, %s241
      %p243 = pneg %p38
      %p244 = pneg %p35
      %p245 = scmp.lt.s32.totalorder %s17, 1
      %s246 = scalar_select %p245, %s17, 1
      %s247 = smul.addr %s246, 3
      %s248 = smul.addr %s247, 4
      %s249 = scalar_lea.vmem %s1, %s248
      %p250 = pneg %p64
      %p251 = pneg %p61
      %p252 = pneg %p85
      %p253 = pneg %p82
      %p254 = pneg %p106
      %p255 = pneg %p103
      %p256 = scmp.lt.s32.totalorder %s17, 1
      %s257 = scalar_select %p256, %s17, 1
      %s258 = smul.addr %s257, 4
      %s259 = smul.addr %s258, 8
      %s260 = scalar_lea.vmem %s4, %s259
      %p261 = pneg %p132
      %p262 = pneg %p129
      %p263 = pneg %p153
      %p264 = pneg %p150
      %p265 = pneg %p179
      %p266 = pneg %p176
      %p267 = scmp.lt.s32.totalorder %s17, 1
      %s268 = scalar_select %p267, %s17, 1
      %s269 = smul.addr %s268, 12
      %s270 = smul.addr %s269, 8
      %s271 = scalar_lea.vmem %s6, %s270
      %p272 = scmp.lt.s32.totalorder %s17, 1
      %s273 = scalar_select %p272, %s17, 1
      %s274 = smul.addr %s273, 12
      %s275 = smul.addr %s274, 8
      %s276 = scalar_lea.vmem %s0, %s275
      %p277 = scmp.lt.s32.totalorder %s17, 1
      %s278 = scalar_select %p277, %s17, 1
      %s279 = smul.addr %s278, 3
      %s280 = smul.addr %s279, 4
      %s281 = scalar_lea.vmem %s1, %s280
      %p282 = scmp.lt.s32.totalorder %s17, 1
      %s283 = scalar_select %p282, %s17, 1
      %s284 = smul.addr %s283, 4
      %s285 = smul.addr %s284, 8
      %s286 = scalar_lea.vmem %s4, %s285
      %p287 = scmp.lt.s32.totalorder %s17, 1
      %s288 = scalar_select %p287, %s17, 1
      %s289 = smul.addr %s288, 12
      %s290 = smul.addr %s289, 8
      %s291 = scalar_lea.vmem %s6, %s290
      %v293 = vld [vmem:[%s276] sm:$0xff]
      %v294 = vld [vmem:[%s276 + $0x8] sm:$0xff]
      %v295 = vld [vmem:[%s276 + $0x10] sm:$0xff]
      %v296 = vld [vmem:[%s276 + $0x18] sm:$0xff]
      %v297 = vld [vmem:[%s276 + $0x20] sm:$0xff]
      %v298 = vld [vmem:[%s276 + $0x28] sm:$0xff]
      %v299 = vld [vmem:[%s276 + $0x30] sm:$0xff]
      %v300 = vld [vmem:[%s276 + $0x38] sm:$0xff]
      %v301 = vld [vmem:[%s276 + $0x40] sm:$0xff]
      %v302 = vld [vmem:[%s276 + $0x48] sm:$0xff]
      %v303 = vld [vmem:[%s276 + $0x50] sm:$0xff]
      %v304 = vld [vmem:[%s276 + $0x58] sm:$0xff]
      %v305 = vld [vmem:[%s5] sm:$0x7]
      %v306 = vld [vmem:[%s3] sm:$0xff]
      %v307 = vld [vmem:[%s3 + $0x8] sm:$0xff]
      %v308 = vld [vmem:[%s3 + $0x10] sm:$0xff]
      %v309 = vld [vmem:[%s3 + $0x18] sm:$0xff]
      %v310 = vld [vmem:[%s286] sm:$0xff]
      %v311 = vld [vmem:[%s286 + $0x8] sm:$0xff]
      %v312 = vld [vmem:[%s286 + $0x10] sm:$0xff]
      %v313 = vld [vmem:[%s286 + $0x18] sm:$0xff]
      %315 = vset.pattern.permute.xlu0 0
      %316 = vperm.xlu0 %315, %v306
      %v317 = vpop.permute.xlu0 %316
      %320 = vset.pattern.permute.xlu0 0
      %321 = vperm.xlu0 %320, %v307
      %v322 = vpop.permute.xlu0 %321
      %325 = vset.pattern.permute.xlu0 0
      %326 = vperm.xlu0 %325, %v308
      %v327 = vpop.permute.xlu0 %326
      %330 = vset.pattern.permute.xlu0 0
      %331 = vperm.xlu0 %330, %v309
      %v332 = vpop.permute.xlu0 %331
      %v334 = vmul.f32 %v317, %v293
      %v335 = vmul.f32 %v317, %v294
      %v336 = vmul.f32 %v317, %v295
      %v337 = vmul.f32 %v322, %v296
      %v338 = vmul.f32 %v322, %v297
      %v339 = vmul.f32 %v322, %v298
      %v340 = vmul.f32 %v327, %v299
      %v341 = vmul.f32 %v327, %v300
      %v342 = vmul.f32 %v327, %v301
      %v343 = vmul.f32 %v332, %v302
      %v344 = vmul.f32 %v332, %v303
      %v345 = vmul.f32 %v332, %v304
      %346 = vset.pattern.permute.xlu0 1
      %347 = vperm.xlu0 %346, %v306
      %v348 = vpop.permute.xlu0 %347
      %350 = vset.pattern.permute.xlu0 1
      %351 = vperm.xlu0 %350, %v307
      %v352 = vpop.permute.xlu0 %351
      %354 = vset.pattern.permute.xlu0 1
      %355 = vperm.xlu0 %354, %v308
      %v356 = vpop.permute.xlu0 %355
      %358 = vset.pattern.permute.xlu0 1
      %359 = vperm.xlu0 %358, %v309
      %v360 = vpop.permute.xlu0 %359
      %v362 = vadd.f32 %v334, %v348
      %v363 = vadd.f32 %v335, %v348
      %v364 = vadd.f32 %v336, %v348
      %v365 = vadd.f32 %v337, %v352
      %v366 = vadd.f32 %v338, %v352
      %v367 = vadd.f32 %v339, %v352
      %v368 = vadd.f32 %v340, %v356
      %v369 = vadd.f32 %v341, %v356
      %v370 = vadd.f32 %v342, %v356
      %v371 = vadd.f32 %v343, %v360
      %v372 = vadd.f32 %v344, %v360
      %v373 = vadd.f32 %v345, %v360
      %v374 = vmul.f32 %v362, 0.2
      %v375 = vmul.f32 %v363, 0.2
      %v376 = vmul.f32 %v364, 0.2
      %v377 = vmul.f32 %v365, 0.2
      %v378 = vmul.f32 %v366, 0.2
      %v379 = vmul.f32 %v367, 0.2
      %v380 = vmul.f32 %v368, 0.2
      %v381 = vmul.f32 %v369, 0.2
      %v382 = vmul.f32 %v370, 0.2
      %v383 = vmul.f32 %v371, 0.2
      %v384 = vmul.f32 %v372, 0.2
      %v385 = vmul.f32 %v373, 0.2
      %v386 = vmax.f32 %v362, %v374
      %v387 = vmax.f32 %v363, %v375
      %v388 = vmax.f32 %v364, %v376
      %v389 = vmax.f32 %v365, %v377
      %v390 = vmax.f32 %v366, %v378
      %v391 = vmax.f32 %v367, %v379
      %v392 = vmax.f32 %v368, %v380
      %v393 = vmax.f32 %v369, %v381
      %v394 = vmax.f32 %v370, %v382
      %v395 = vmax.f32 %v371, %v383
      %v396 = vmax.f32 %v372, %v384
      %v397 = vmax.f32 %v373, %v385
      %v399 = vlaneseq
      %v400 = vshrl.u32 %v399, 7
      %v401 = vsub.s32 0, %v400
      %v402 = vrot.slane %v305, %v401
      %v403 = vlaneseq
      %v404 = vshrl.u32 %v403, 7
      %v405 = vsub.s32 1, %v404
      %v406 = vrot.slane %v305, %v405
      %v407 = vlaneseq
      %v408 = vshrl.u32 %v407, 7
      %v409 = vsub.s32 2, %v408
      %v410 = vrot.slane %v305, %v409
      %v414 = vmul.f32 %v386, %v402
      %v415 = vmul.f32 %v387, %v406
      %v416 = vmul.f32 %v388, %v410
      %v417 = vmul.f32 %v389, %v402
      %v418 = vmul.f32 %v390, %v406
      %v419 = vmul.f32 %v391, %v410
      %v420 = vmul.f32 %v392, %v402
      %v421 = vmul.f32 %v393, %v406
      %v422 = vmul.f32 %v394, %v410
      %v423 = vmul.f32 %v395, %v402
      %v424 = vmul.f32 %v396, %v406
      %v425 = vmul.f32 %v397, %v410
      %v426 = vadd.f32 %v414, %v415
      %v427 = vadd.f32 %v426, %v416
      %428 = vadd.xlane.f32.xlu0 %v427
      %v429 = vpop.xlane.xlu0 %428
      %v430 = vadd.f32 %v417, %v418
      %v431 = vadd.f32 %v430, %v419
      %432 = vadd.xlane.f32.xlu0 %v431
      %v433 = vpop.xlane.xlu0 %432
      %v434 = vadd.f32 %v420, %v421
      %v435 = vadd.f32 %v434, %v422
      %436 = vadd.xlane.f32.xlu0 %v435
      %v437 = vpop.xlane.xlu0 %436
      %v438 = vadd.f32 %v423, %v424
      %v439 = vadd.f32 %v438, %v425
      %440 = vadd.xlane.f32.xlu0 %v439
      %v441 = vpop.xlane.xlu0 %440
      %v442 = vmul.f32 %v429, 0.00390625
      %v443 = vmul.f32 %v433, 0.00390625
      %v444 = vmul.f32 %v437, 0.00390625
      %v445 = vmul.f32 %v441, 0.00390625
      %v446 = vmul.f32 %v414, %v386
      %v447 = vmul.f32 %v415, %v387
      %v448 = vmul.f32 %v416, %v388
      %v449 = vmul.f32 %v417, %v389
      %v450 = vmul.f32 %v418, %v390
      %v451 = vmul.f32 %v419, %v391
      %v452 = vmul.f32 %v420, %v392
      %v453 = vmul.f32 %v421, %v393
      %v454 = vmul.f32 %v422, %v394
      %v455 = vmul.f32 %v423, %v395
      %v456 = vmul.f32 %v424, %v396
      %v457 = vmul.f32 %v425, %v397
      %v458 = vadd.f32 %v446, %v447
      %v459 = vadd.f32 %v458, %v448
      %460 = vadd.xlane.f32.xlu0 %v459
      %v461 = vpop.xlane.xlu0 %460
      %v462 = vadd.f32 %v449, %v450
      %v463 = vadd.f32 %v462, %v451
      %464 = vadd.xlane.f32.xlu0 %v463
      %v465 = vpop.xlane.xlu0 %464
      %v466 = vadd.f32 %v452, %v453
      %v467 = vadd.f32 %v466, %v454
      %468 = vadd.xlane.f32.xlu0 %v467
      %v469 = vpop.xlane.xlu0 %468
      %v470 = vadd.f32 %v455, %v456
      %v471 = vadd.f32 %v470, %v457
      %472 = vadd.xlane.f32.xlu0 %v471
      %v473 = vpop.xlane.xlu0 %472
      %v474 = vmul.f32 %v461, 0.00390625
      %v475 = vmul.f32 %v465, 0.00390625
      %v476 = vmul.f32 %v469, 0.00390625
      %v477 = vmul.f32 %v473, 0.00390625
      %v478 = vmul.f32 %v442, %v442
      %v479 = vmul.f32 %v443, %v443
      %v480 = vmul.f32 %v444, %v444
      %v481 = vmul.f32 %v445, %v445
      %v482 = vsub.f32 %v474, %v478
      %v483 = vsub.f32 %v475, %v479
      %v484 = vsub.f32 %v476, %v480
      %v485 = vsub.f32 %v477, %v481
      %v486 = vmax.f32 %v482, 0.0
      %v487 = vmax.f32 %v483, 0.0
      %v488 = vmax.f32 %v484, 0.0
      %v489 = vmax.f32 %v485, 0.0
      %v490 = vsub.f32 %v386, %v442
      %v491 = vsub.f32 %v387, %v442
      %v492 = vsub.f32 %v388, %v442
      %v493 = vsub.f32 %v389, %v443
      %v494 = vsub.f32 %v390, %v443
      %v495 = vsub.f32 %v391, %v443
      %v496 = vsub.f32 %v392, %v444
      %v497 = vsub.f32 %v393, %v444
      %v498 = vsub.f32 %v394, %v444
      %v499 = vsub.f32 %v395, %v445
      %v500 = vsub.f32 %v396, %v445
      %v501 = vsub.f32 %v397, %v445
      %v502 = vadd.f32 %v486, 1e-05
      %v503 = vadd.f32 %v487, 1e-05
      %v504 = vadd.f32 %v488, 1e-05
      %v505 = vadd.f32 %v489, 1e-05
      %v506 = vrsqrt.pop %v502
      %v507 = vrsqrt.pop %v503
      %v508 = vrsqrt.pop %v504
      %v509 = vrsqrt.pop %v505
      %v510 = vmul.f32 %v490, %v506
      %v511 = vmul.f32 %v491, %v506
      %v512 = vmul.f32 %v492, %v506
      %v513 = vmul.f32 %v493, %v507
      %v514 = vmul.f32 %v494, %v507
      %v515 = vmul.f32 %v495, %v507
      %v516 = vmul.f32 %v496, %v508
      %v517 = vmul.f32 %v497, %v508
      %v518 = vmul.f32 %v498, %v508
      %v519 = vmul.f32 %v499, %v509
      %v520 = vmul.f32 %v500, %v509
      %v521 = vmul.f32 %v501, %v509
      %522 = vset.pattern.permute.xlu0 2
      %523 = vperm.xlu0 %522, %v306
      %v524 = vpop.permute.xlu0 %523
      %526 = vset.pattern.permute.xlu0 2
      %527 = vperm.xlu0 %526, %v307
      %v528 = vpop.permute.xlu0 %527
      %530 = vset.pattern.permute.xlu0 2
      %531 = vperm.xlu0 %530, %v308
      %v532 = vpop.permute.xlu0 %531
      %534 = vset.pattern.permute.xlu0 2
      %535 = vperm.xlu0 %534, %v309
      %v536 = vpop.permute.xlu0 %535
      %v538 = vmul.f32 %v524, %v510
      %v539 = vmul.f32 %v524, %v511
      %v540 = vmul.f32 %v524, %v512
      %v541 = vmul.f32 %v528, %v513
      %v542 = vmul.f32 %v528, %v514
      %v543 = vmul.f32 %v528, %v515
      %v544 = vmul.f32 %v532, %v516
      %v545 = vmul.f32 %v532, %v517
      %v546 = vmul.f32 %v532, %v518
      %v547 = vmul.f32 %v536, %v519
      %v548 = vmul.f32 %v536, %v520
      %v549 = vmul.f32 %v536, %v521
      %v550 = vmul.f32 %v306, %v442
      %v551 = vmul.f32 %v307, %v443
      %v552 = vmul.f32 %v308, %v444
      %v553 = vmul.f32 %v309, %v445
      %554 = vrot.lane.b32.xlu0 %v306, 127
      %v555 = vpop.permute.xlu0 %554
      %556 = vrot.lane.b32.xlu0 %v307, 127
      %v557 = vpop.permute.xlu0 %556
      %558 = vrot.lane.b32.xlu0 %v308, 127
      %v559 = vpop.permute.xlu0 %558
      %560 = vrot.lane.b32.xlu0 %v309, 127
      %v561 = vpop.permute.xlu0 %560
      %v566 = vadd.f32 %v550, %v555
      %v567 = vadd.f32 %v551, %v557
      %v568 = vadd.f32 %v552, %v559
      %v569 = vadd.f32 %v553, %v561
      %571 = vset.pattern.permute.xlu0 3
      %572 = vperm.xlu0 %571, %v566
      %v573 = vpop.permute.xlu0 %572
      %576 = vset.pattern.permute.xlu0 3
      %577 = vperm.xlu0 %576, %v567
      %v578 = vpop.permute.xlu0 %577
      %581 = vset.pattern.permute.xlu0 3
      %582 = vperm.xlu0 %581, %v568
      %v583 = vpop.permute.xlu0 %582
      %586 = vset.pattern.permute.xlu0 3
      %587 = vperm.xlu0 %586, %v569
      %v588 = vpop.permute.xlu0 %587
      %v590 = vadd.f32 %v538, %v573
      %v591 = vadd.f32 %v539, %v573
      %v592 = vadd.f32 %v540, %v573
      %v593 = vadd.f32 %v541, %v578
      %v594 = vadd.f32 %v542, %v578
      %v595 = vadd.f32 %v543, %v578
      %v596 = vadd.f32 %v544, %v583
      %v597 = vadd.f32 %v545, %v583
      %v598 = vadd.f32 %v546, %v583
      %v599 = vadd.f32 %v547, %v588
      %v600 = vadd.f32 %v548, %v588
      %v601 = vadd.f32 %v549, %v588
      %v602 = vxor.u32 %v590, 2147483648
      %v603 = vxor.u32 %v591, 2147483648
      %v604 = vxor.u32 %v592, 2147483648
      %v605 = vxor.u32 %v593, 2147483648
      %v606 = vxor.u32 %v594, 2147483648
      %v607 = vxor.u32 %v595, 2147483648
      %v608 = vxor.u32 %v596, 2147483648
      %v609 = vxor.u32 %v597, 2147483648
      %v610 = vxor.u32 %v598, 2147483648
      %v611 = vxor.u32 %v599, 2147483648
      %v612 = vxor.u32 %v600, 2147483648
      %v613 = vxor.u32 %v601, 2147483648
      %v614 = vmul.f32 %v602, 1.442695
      %v615 = vpow.pop %v614
      %v616 = vmul.f32 %v603, 1.442695
      %v617 = vpow.pop %v616
      %v618 = vmul.f32 %v604, 1.442695
      %v619 = vpow.pop %v618
      %v620 = vmul.f32 %v605, 1.442695
      %v621 = vpow.pop %v620
      %v622 = vmul.f32 %v606, 1.442695
      %v623 = vpow.pop %v622
      %v624 = vmul.f32 %v607, 1.442695
      %v625 = vpow.pop %v624
      %v626 = vmul.f32 %v608, 1.442695
      %v627 = vpow.pop %v626
      %v628 = vmul.f32 %v609, 1.442695
      %v629 = vpow.pop %v628
      %v630 = vmul.f32 %v610, 1.442695
      %v631 = vpow.pop %v630
      %v632 = vmul.f32 %v611, 1.442695
      %v633 = vpow.pop %v632
      %v634 = vmul.f32 %v612, 1.442695
      %v635 = vpow.pop %v634
      %v636 = vmul.f32 %v613, 1.442695
      %v637 = vpow.pop %v636
      %v638 = vadd.f32 %v615, 1.0
      %v639 = vadd.f32 %v617, 1.0
      %v640 = vadd.f32 %v619, 1.0
      %v641 = vadd.f32 %v621, 1.0
      %v642 = vadd.f32 %v623, 1.0
      %v643 = vadd.f32 %v625, 1.0
      %v644 = vadd.f32 %v627, 1.0
      %v645 = vadd.f32 %v629, 1.0
      %v646 = vadd.f32 %v631, 1.0
      %v647 = vadd.f32 %v633, 1.0
      %v648 = vadd.f32 %v635, 1.0
      %v649 = vadd.f32 %v637, 1.0
      %v650 = vrcp.pop %v638
      %v651 = vmul.f32 1.0, %v650
      %v652 = vrcp.pop %v639
      %v653 = vmul.f32 1.0, %v652
      %v654 = vrcp.pop %v640
      %v655 = vmul.f32 1.0, %v654
      %v656 = vrcp.pop %v641
      %v657 = vmul.f32 1.0, %v656
      %v658 = vrcp.pop %v642
      %v659 = vmul.f32 1.0, %v658
      %v660 = vrcp.pop %v643
      %v661 = vmul.f32 1.0, %v660
      %v662 = vrcp.pop %v644
      %v663 = vmul.f32 1.0, %v662
      %v664 = vrcp.pop %v645
      %v665 = vmul.f32 1.0, %v664
      %v666 = vrcp.pop %v646
      %v667 = vmul.f32 1.0, %v666
      %v668 = vrcp.pop %v647
      %v669 = vmul.f32 1.0, %v668
      %v670 = vrcp.pop %v648
      %v671 = vmul.f32 1.0, %v670
      %v672 = vrcp.pop %v649
      %v673 = vmul.f32 1.0, %v672
      %v674 = vmul.f32 %v386, %v651
      %v675 = vmul.f32 %v387, %v653
      %v676 = vmul.f32 %v388, %v655
      %v677 = vmul.f32 %v389, %v657
      %v678 = vmul.f32 %v390, %v659
      %v679 = vmul.f32 %v391, %v661
      %v680 = vmul.f32 %v392, %v663
      %v681 = vmul.f32 %v393, %v665
      %v682 = vmul.f32 %v394, %v667
      %v683 = vmul.f32 %v395, %v669
      %v684 = vmul.f32 %v396, %v671
      %v685 = vmul.f32 %v397, %v673
      %687 = vset.pattern.permute.xlu0 0
      %688 = vperm.xlu0 %687, %v310
      %v689 = vpop.permute.xlu0 %688
      %692 = vset.pattern.permute.xlu0 0
      %693 = vperm.xlu0 %692, %v311
      %v694 = vpop.permute.xlu0 %693
      %697 = vset.pattern.permute.xlu0 0
      %698 = vperm.xlu0 %697, %v312
      %v699 = vpop.permute.xlu0 %698
      %702 = vset.pattern.permute.xlu0 0
      %703 = vperm.xlu0 %702, %v313
      %v704 = vpop.permute.xlu0 %703
      %v706 = vmul.f32 %v689, %v674
      %v707 = vmul.f32 %v689, %v675
      %v708 = vmul.f32 %v689, %v676
      %v709 = vmul.f32 %v694, %v677
      %v710 = vmul.f32 %v694, %v678
      %v711 = vmul.f32 %v694, %v679
      %v712 = vmul.f32 %v699, %v680
      %v713 = vmul.f32 %v699, %v681
      %v714 = vmul.f32 %v699, %v682
      %v715 = vmul.f32 %v704, %v683
      %v716 = vmul.f32 %v704, %v684
      %v717 = vmul.f32 %v704, %v685
      %718 = vset.pattern.permute.xlu0 1
      %719 = vperm.xlu0 %718, %v310
      %v720 = vpop.permute.xlu0 %719
      %722 = vset.pattern.permute.xlu0 1
      %723 = vperm.xlu0 %722, %v311
      %v724 = vpop.permute.xlu0 %723
      %726 = vset.pattern.permute.xlu0 1
      %727 = vperm.xlu0 %726, %v312
      %v728 = vpop.permute.xlu0 %727
      %730 = vset.pattern.permute.xlu0 1
      %731 = vperm.xlu0 %730, %v313
      %v732 = vpop.permute.xlu0 %731
      %v734 = vadd.f32 %v706, %v720
      %v735 = vadd.f32 %v707, %v720
      %v736 = vadd.f32 %v708, %v720
      %v737 = vadd.f32 %v709, %v724
      %v738 = vadd.f32 %v710, %v724
      %v739 = vadd.f32 %v711, %v724
      %v740 = vadd.f32 %v712, %v728
      %v741 = vadd.f32 %v713, %v728
      %v742 = vadd.f32 %v714, %v728
      %v743 = vadd.f32 %v715, %v732
      %v744 = vadd.f32 %v716, %v732
      %v745 = vadd.f32 %v717, %v732
      %v746 = vmul.f32 %v734, 0.2
      %v747 = vmul.f32 %v735, 0.2
      %v748 = vmul.f32 %v736, 0.2
      %v749 = vmul.f32 %v737, 0.2
      %v750 = vmul.f32 %v738, 0.2
      %v751 = vmul.f32 %v739, 0.2
      %v752 = vmul.f32 %v740, 0.2
      %v753 = vmul.f32 %v741, 0.2
      %v754 = vmul.f32 %v742, 0.2
      %v755 = vmul.f32 %v743, 0.2
      %v756 = vmul.f32 %v744, 0.2
      %v757 = vmul.f32 %v745, 0.2
      %v758 = vmax.f32 %v734, %v746
      %v759 = vmax.f32 %v735, %v747
      %v760 = vmax.f32 %v736, %v748
      %v761 = vmax.f32 %v737, %v749
      %v762 = vmax.f32 %v738, %v750
      %v763 = vmax.f32 %v739, %v751
      %v764 = vmax.f32 %v740, %v752
      %v765 = vmax.f32 %v741, %v753
      %v766 = vmax.f32 %v742, %v754
      %v767 = vmax.f32 %v743, %v755
      %v768 = vmax.f32 %v744, %v756
      %v769 = vmax.f32 %v745, %v757
      %770 = vset.pattern.permute.xlu0 2
      %771 = vperm.xlu0 %770, %v310
      %v772 = vpop.permute.xlu0 %771
      %774 = vset.pattern.permute.xlu0 2
      %775 = vperm.xlu0 %774, %v311
      %v776 = vpop.permute.xlu0 %775
      %778 = vset.pattern.permute.xlu0 2
      %779 = vperm.xlu0 %778, %v312
      %v780 = vpop.permute.xlu0 %779
      %782 = vset.pattern.permute.xlu0 2
      %783 = vperm.xlu0 %782, %v313
      %v784 = vpop.permute.xlu0 %783
      %v786 = vmul.f32 %v772, %v758
      %v787 = vmul.f32 %v772, %v759
      %v788 = vmul.f32 %v772, %v760
      %v789 = vmul.f32 %v776, %v761
      %v790 = vmul.f32 %v776, %v762
      %v791 = vmul.f32 %v776, %v763
      %v792 = vmul.f32 %v780, %v764
      %v793 = vmul.f32 %v780, %v765
      %v794 = vmul.f32 %v780, %v766
      %v795 = vmul.f32 %v784, %v767
      %v796 = vmul.f32 %v784, %v768
      %v797 = vmul.f32 %v784, %v769
      %798 = vset.pattern.permute.xlu0 3
      %799 = vperm.xlu0 %798, %v310
      %v800 = vpop.permute.xlu0 %799
      %802 = vset.pattern.permute.xlu0 3
      %803 = vperm.xlu0 %802, %v311
      %v804 = vpop.permute.xlu0 %803
      %806 = vset.pattern.permute.xlu0 3
      %807 = vperm.xlu0 %806, %v312
      %v808 = vpop.permute.xlu0 %807
      %810 = vset.pattern.permute.xlu0 3
      %811 = vperm.xlu0 %810, %v313
      %v812 = vpop.permute.xlu0 %811
      %v814 = vadd.f32 %v786, %v800
      %v815 = vadd.f32 %v787, %v800
      %v816 = vadd.f32 %v788, %v800
      %v817 = vadd.f32 %v789, %v804
      %v818 = vadd.f32 %v790, %v804
      %v819 = vadd.f32 %v791, %v804
      %v820 = vadd.f32 %v792, %v808
      %v821 = vadd.f32 %v793, %v808
      %v822 = vadd.f32 %v794, %v808
      %v823 = vadd.f32 %v795, %v812
      %v824 = vadd.f32 %v796, %v812
      %v825 = vadd.f32 %v797, %v812
      %v826 = vmul.f32 %v814, 0.2
      %v827 = vmul.f32 %v815, 0.2
      %v828 = vmul.f32 %v816, 0.2
      %v829 = vmul.f32 %v817, 0.2
      %v830 = vmul.f32 %v818, 0.2
      %v831 = vmul.f32 %v819, 0.2
      %v832 = vmul.f32 %v820, 0.2
      %v833 = vmul.f32 %v821, 0.2
      %v834 = vmul.f32 %v822, 0.2
      %v835 = vmul.f32 %v823, 0.2
      %v836 = vmul.f32 %v824, 0.2
      %v837 = vmul.f32 %v825, 0.2
      %v838 = vmax.f32 %v814, %v826
      %v839 = vmax.f32 %v815, %v827
      %v840 = vmax.f32 %v816, %v828
      %v841 = vmax.f32 %v817, %v829
      %v842 = vmax.f32 %v818, %v830
      %v843 = vmax.f32 %v819, %v831
      %v844 = vmax.f32 %v820, %v832
      %v845 = vmax.f32 %v821, %v833
      %v846 = vmax.f32 %v822, %v834
      %v847 = vmax.f32 %v823, %v835
      %v848 = vmax.f32 %v824, %v836
      %v849 = vmax.f32 %v825, %v837
      %v850 = vld [vmem:[%s2] sm:$0xf]
      %v851 = vld [vmem:[%s2 + $0x4] sm:$0xf]
      %v852 = vld [vmem:[%s2 + $0x8] sm:$0xf]
      %v853 = vld [vmem:[%s2 + $0xc] sm:$0xf]
      %v854 = vld [vmem:[%s281] sm:$0xff]
      %v855 = vld [vmem:[%s281 + $0x8] sm:$0xf]
      %v860 = vunpack.c.l.b16 %v850
      %v861 = vunpack.c.l.b16 %v851
      %v862 = vunpack.c.l.b16 %v852
      %v863 = vunpack.c.l.b16 %v853
      %v864 = vpack.c.b16 %v861, %v860
      %v865 = vpack.c.b16 %v863, %v862
      %v868 = vunpack.c.l.b16 %v854
      %v869 = vunpack.c.h.b16 %v854
      %v870 = vunpack.c.l.b16 %v855
      %v871 = vpack.c.b16 %v868, %v868
      %v872 = vpack.c.b16 %v869, %v869
      %v873 = vpack.c.b16 %v870, %v870
      %vm874 = vcmask 64512
      %v876 = vsel %vm874, %v864, 0
      %v879 = vsel %vm874, %v865, 0
      %vm881 = vcmask 1043456
      %v883 = vsel %vm881, %v871, 0
      %v886 = vsel %vm881, %v872, 0
      %v889 = vsel %vm881, %v873, 0
      %891 = vmatprep.subr.bf16.mxu0 %v886
      %892 = vmatpush1.bf16.msra.mxu0 %v883
      %893 = vmatprep.subr.bf16.mxu0 0
      %894 = vmatpush1.bf16.msra.mxu0 0
      %895 = vmatprep.subr.bf16.mxu0 0
      %896 = vmatpush1.bf16.msra.mxu0 0
      %897 = vmatprep.subr.bf16.mxu0 0
      %898 = vmatpush1.bf16.msra.mxu0 0
      %899 = vmatprep.subr.bf16.mxu0 0
      %900 = vmatpush1.bf16.msra.mxu0 0
      %901 = vmatprep.subr.bf16.mxu0 0
      %902 = vmatpush1.bf16.msra.mxu0 0
      %903 = vmatprep.subr.bf16.mxu0 0
      %904 = vmatpush1.bf16.msra.mxu0 0
      %905 = vmatprep.subr.bf16.mxu0 0
      %906 = vmatpush1.bf16.msra.mxu0 0
      %907 = vmatprep.subr.bf16.mxu0 0
      %908 = vmatpush1.bf16.msra.mxu0 0
      %909 = vmatprep.subr.bf16.mxu0 0
      %910 = vmatpush1.bf16.msra.mxu0 0
      %911 = vmatprep.subr.bf16.mxu0 0
      %912 = vmatpush1.bf16.msra.mxu0 0
      %913 = vmatprep.subr.bf16.mxu0 0
      %914 = vmatpush1.bf16.msra.mxu0 0
      %915 = vmatprep.subr.bf16.mxu0 0
      %916 = vmatpush1.bf16.msra.mxu0 0
      %917 = vmatprep.subr.bf16.mxu0 0
      %918 = vmatpush1.bf16.msra.mxu0 0
      %919 = vmatprep.subr.bf16.mxu0 0
      %920 = vmatpush1.bf16.msra.mxu0 0
      %921 = vmatprep.subr.bf16.mxu0 0
      %922 = vmatpush1.bf16.msra.mxu0 0
      %923 = vmatprep.mubr.bf16.mxu0 0
      %924 = vmatmul.mubr.bf16.gmra.mrb[0].mxu0 %v876
      %v925 = vpop.f32.mrb[0].mxu0
      %v926 = vadd.f32 0.0, %v925
      %v927 = vpop.f32.mrb[0].mxu0
      %v928 = vadd.f32 0.0, %v927
      %v929 = vpop.f32.mrb[0].mxu0
      %v930 = vadd.f32 0.0, %v929
      %v931 = vpop.f32.mrb[0].mxu0
      %v932 = vadd.f32 0.0, %v931
      %933 = vmatprep.mubr.bf16.mxu0 0
      %934 = vmatmul.mubr.bf16.gmra.mrb[0].mxu0 %v879
      %v935 = vpop.f32.mrb[0].mxu0
      %v936 = vadd.f32 0.0, %v935
      %v937 = vpop.f32.mrb[0].mxu0
      %v938 = vadd.f32 0.0, %v937
      %v939 = vpop.f32.mrb[0].mxu0
      %v940 = vadd.f32 0.0, %v939
      %v941 = vpop.f32.mrb[0].mxu0
      %v942 = vadd.f32 0.0, %v941
      %943 = vdwg.mxu0
      %944 = vmatprep.subr.bf16.mxu0 0
      %945 = vmatpush1.bf16.msra.mxu0 %v889
      %946 = vmatprep.subr.bf16.mxu0 0
      %947 = vmatpush1.bf16.msra.mxu0 0
      %948 = vmatprep.subr.bf16.mxu0 0
      %949 = vmatpush1.bf16.msra.mxu0 0
      %950 = vmatprep.subr.bf16.mxu0 0
      %951 = vmatpush1.bf16.msra.mxu0 0
      %952 = vmatprep.subr.bf16.mxu0 0
      %953 = vmatpush1.bf16.msra.mxu0 0
      %954 = vmatprep.subr.bf16.mxu0 0
      %955 = vmatpush1.bf16.msra.mxu0 0
      %956 = vmatprep.subr.bf16.mxu0 0
      %957 = vmatpush1.bf16.msra.mxu0 0
      %958 = vmatprep.subr.bf16.mxu0 0
      %959 = vmatpush1.bf16.msra.mxu0 0
      %960 = vmatprep.subr.bf16.mxu0 0
      %961 = vmatpush1.bf16.msra.mxu0 0
      %962 = vmatprep.subr.bf16.mxu0 0
      %963 = vmatpush1.bf16.msra.mxu0 0
      %964 = vmatprep.subr.bf16.mxu0 0
      %965 = vmatpush1.bf16.msra.mxu0 0
      %966 = vmatprep.subr.bf16.mxu0 0
      %967 = vmatpush1.bf16.msra.mxu0 0
      %968 = vmatprep.subr.bf16.mxu0 0
      %969 = vmatpush1.bf16.msra.mxu0 0
      %970 = vmatprep.subr.bf16.mxu0 0
      %971 = vmatpush1.bf16.msra.mxu0 0
      %972 = vmatprep.subr.bf16.mxu0 0
      %973 = vmatpush1.bf16.msra.mxu0 0
      %974 = vmatprep.subr.bf16.mxu0 0
      %975 = vmatpush1.bf16.msra.mxu0 0
      %976 = vmatprep.mubr.bf16.mxu0 0
      %977 = vmatmul.mubr.bf16.gmra.mrb[0].mxu0 %v876
      %v978 = vpop.f32.mrb[0].mxu0
      %v979 = vadd.f32 0.0, %v978
      %v980 = vpop.f32.mrb[0].mxu0
      %v981 = vpop.f32.mrb[0].mxu0
      %v982 = vadd.f32 0.0, %v981
      %v983 = vpop.f32.mrb[0].mxu0
      %984 = vmatprep.mubr.bf16.mxu0 0
      %985 = vmatmul.mubr.bf16.gmra.mrb[0].mxu0 %v879
      %v986 = vpop.f32.mrb[0].mxu0
      %v987 = vadd.f32 0.0, %v986
      %v988 = vpop.f32.mrb[0].mxu0
      %v989 = vpop.f32.mrb[0].mxu0
      %v990 = vadd.f32 0.0, %v989
      %v991 = vpop.f32.mrb[0].mxu0
      %992 = vdwg.mxu0
      %v993 = vadd.f32 %v838, %v926
      %v994 = vadd.f32 %v839, %v928
      %v995 = vadd.f32 %v840, %v979
      %v996 = vadd.f32 %v841, %v930
      %v997 = vadd.f32 %v842, %v932
      %v998 = vadd.f32 %v843, %v982
      %v999 = vadd.f32 %v844, %v936
      %v1000 = vadd.f32 %v845, %v938
      %v1001 = vadd.f32 %v846, %v987
      %v1002 = vadd.f32 %v847, %v940
      %v1003 = vadd.f32 %v848, %v942
      %v1004 = vadd.f32 %v849, %v990
      %1005 = vset.pattern.permute.xlu0 5
      %1006 = vperm.xlu0 %1005, %v306
      %v1007 = vpop.permute.xlu0 %1006
      %1009 = vset.pattern.permute.xlu0 5
      %1010 = vperm.xlu0 %1009, %v307
      %v1011 = vpop.permute.xlu0 %1010
      %1013 = vset.pattern.permute.xlu0 5
      %1014 = vperm.xlu0 %1013, %v308
      %v1015 = vpop.permute.xlu0 %1014
      %1017 = vset.pattern.permute.xlu0 5
      %1018 = vperm.xlu0 %1017, %v309
      %v1019 = vpop.permute.xlu0 %1018
      %v1021 = vadd.f32 %v993, %v1007
      %v1022 = vadd.f32 %v994, %v1007
      %v1023 = vadd.f32 %v995, %v1007
      %v1024 = vadd.f32 %v996, %v1011
      %v1025 = vadd.f32 %v997, %v1011
      %v1026 = vadd.f32 %v998, %v1011
      %v1027 = vadd.f32 %v999, %v1015
      %v1028 = vadd.f32 %v1000, %v1015
      %v1029 = vadd.f32 %v1001, %v1015
      %v1030 = vadd.f32 %v1002, %v1019
      %v1031 = vadd.f32 %v1003, %v1019
      %v1032 = vadd.f32 %v1004, %v1019
      %1033 = vst [vmem:[%s291] sm:$0xff] %v1021
      %1034 = vst [vmem:[%s291 + $0x8] sm:$0xff] %v1022
      %1035 = vst [vmem:[%s291 + $0x10] sm:$0xff] %v1023
      %1036 = vst [vmem:[%s291 + $0x18] sm:$0xff] %v1024
      %1037 = vst [vmem:[%s291 + $0x20] sm:$0xff] %v1025
      %1038 = vst [vmem:[%s291 + $0x28] sm:$0xff] %v1026
      %1039 = vst [vmem:[%s291 + $0x30] sm:$0xff] %v1027
      %1040 = vst [vmem:[%s291 + $0x38] sm:$0xff] %v1028
      %1041 = vst [vmem:[%s291 + $0x40] sm:$0xff] %v1029
      %1042 = vst [vmem:[%s291 + $0x48] sm:$0xff] %v1030
      %1043 = vst [vmem:[%s291 + $0x50] sm:$0xff] %v1031
      %1044 = vst [vmem:[%s291 + $0x58] sm:$0xff] %v1032
      %p1045 = scmp.lt.s32.totalorder %s17, 1
      %s1046 = scalar_select %p1045, %s17, 1
      %s1047 = smul.addr %s1046, 12
      %s1048 = smul.addr %s1047, 8
      %s1049 = scalar_lea.vmem %s6, %s1048
      // Predicated region
      $region45: #{m_block_forward.7} parent=43 // pred_check
        %p1050 = pneg %p176
      $region46: #{m_block_forward.7} parent=43 // pred_check_branch
        %1052 = sbr.rel (%p1050) target = $region48
      $region47: #{m_block_forward.7} parent=43 // pred_region
        _
      $region48: #{m_block_forward.7} parent=43 // pred_fallthru
        _
    $region44: #{m_block_forward.7} parent=5 // pred_fallthru
      _
    %p1053 = scmp.le.s32.totalorder 2, %s12
    // Predicated region
    $region49: #{m_block_forward.7} parent=5 // pred_check
      %p1054 = pneg %p1053
    $region50: #{m_block_forward.7} parent=5 // pred_check_branch
      %1056 = sbr.rel (%p1054) target = $region52
    $region51: #{m_block_forward.7} parent=5 // pred_region
      %s1057 = ssub.s32 %s12, 2
      // Predicated region
      $region53: #{m_block_forward.7} parent=51 // pred_check
        %p1058 = pneg %p182
      $region54: #{m_block_forward.7} parent=51 // pred_check_branch
        %1060 = sbr.rel (%p1058) target = $region56
      $region55: #{m_block_forward.7} parent=51 // pred_region
        %p1061 = scmp.lt.s32.totalorder %s18, 1
        %s1062 = scalar_select %p1061, %s18, 1
        %s1063 = smul.addr %s1062, 12
        %s1064 = smul.addr %s1063, 8
        %s1065 = scalar_lea.vmem %s6, %s1064
      $region56: #{m_block_forward.7} parent=51 // pred_fallthru
        _
    $region52: #{m_block_forward.7} parent=5 // pred_fallthru
      _
  $region6: #{m_block_forward.7} parent=0 // loop_footer
    %s16 = sadd.s32 1, %s12
  $region7: #{m_block_forward.7} parent=0 // loop_footer_branch
    %11 = sbr.rel target = $region3
  $region8: #{m_block_forward.7} parent=0 // loop_exit
    _

</llo_original>
